<compile_context>
chip_gen: v6e
topology: v6e:2x2x1
jax: 0.10.0
libtpu: 0.0.40
codegen_flags: <defaults>
</compile_context>

<pallas_src>
import jax
import jax.numpy as jnp
import numpy as np
from jax.experimental import pallas as pl
from jax.experimental.pallas import tpu as pltpu

# ----------------------------- small, module-consistent sizes ---------------------------
B = 2                 # batch
N_AGENTS = 5          # 4 aux agents + 1
IN_CH = 3             # per-agent RGB
H = W = 16            # spatial size of the (downscaled) inputs
C_V = 32              # stand-in for feature_map_channel=512
N_CLASSES = 21
PAD_LANE = 128        # lane-dense padded width for class logits and agent probabilities
KEY_SIZE = 128        # hardcoded in AdditiveAttentin
QUERY_SIZE = 128
QK_FEAT = 256         # n_feat of `linear`

CIN_ALL = N_AGENTS * IN_CH       # 15
CV_ALL = N_AGENTS * C_V          # 160
HW = H * W                       # 256
BHW = B * HW                     # 512 rows: batch folded into matmul M
BA = B * N_AGENTS                # 10 (batch, agent) rows


# ------------------------------------ fused Pallas kernel -------------------------------
def _fused_forward_kernel(x_ref, pooled_ref, enc_w_ref, qk_w_ref, w256_ref, w128_ref,
                          bias_ref, dec_w_ref, agent_diag_ref, batch_sel_ref,
                          expand_ref, rowsel_ref, blocksum_ref,
                          pred_ref, prob_ref):
    f32 = jnp.float32

    # --- 5 per-agent pointwise encoders as ONE block-diagonal bf16 matmul (B*HW rows) ----
    feats = jnp.maximum(
        jnp.dot(x_ref[...], enc_w_ref[...], preferred_element_type=f32)
        + bias_ref[0:1, 0:CV_ALL], 0.0)                                   # (BHW, 160) f32

    # --- query_key_net stand-in: shared (3 -> 256) linear on pooled per-(batch,agent) rows
    qk_w = qk_w_ref[...]
    qk_b = bias_ref[1:2, 0:QK_FEAT]
    qk_k = jnp.maximum(jnp.dot(pooled_ref[0:BA, :], qk_w,
                               preferred_element_type=f32) + qk_b, 0.0)   # (10, 256)
    qk_q = jnp.maximum(jnp.dot(pooled_ref[BA:BA + B, :], qk_w,
                               preferred_element_type=f32) + qk_b, 0.0)   # (B, 256) agent-0

    # --- shared 3-layer `linear` MLPs: keys for all (b,a), query for agent 0 per batch ----
    h = jnp.maximum(jnp.dot(qk_k, w256_ref[:, 0:256], preferred_element_type=f32)
                    + bias_ref[2:3, 0:256], 0.0)
    h = jnp.maximum(jnp.dot(h, w256_ref[:, 512:640], preferred_element_type=f32)
                    + bias_ref[3:4, 0:128], 0.0)
    keys = jnp.dot(h, w128_ref[:, 0:128], preferred_element_type=f32) + bias_ref[4:5, 0:128]

    g = jnp.maximum(jnp.dot(qk_q, w256_ref[:, 256:512], preferred_element_type=f32)
                    + bias_ref[5:6, 0:256], 0.0)
    g = jnp.maximum(jnp.dot(g, w256_ref[:, 640:768], preferred_element_type=f32)
                    + bias_ref[6:7, 0:128], 0.0)
    query = jnp.dot(g, w128_ref[:, 128:256], preferred_element_type=f32) + bias_ref[7:8, 0:128]

    # --- AdditiveAttentin score chain (f32), laid out batch-rows x agent-lanes -------------
    temp1 = jnp.dot(keys, w128_ref[:, 256:384], preferred_element_type=f32) \
        + bias_ref[8:9, 0:128]                                            # (10, 128)
    temp2 = jnp.dot(query, w128_ref[:, 384:512], preferred_element_type=f32) \
        + bias_ref[9:10, 0:128]                                           # (B, 128)
    # awo replicated over the 5 agent lanes inside the w128 slab -> per-row score at lanes 0..4
    sk = jnp.dot(temp1, w128_ref[:, 512:640], preferred_element_type=f32)  # (10, 128)
    sq = jnp.dot(temp2, w128_ref[:, 512:640], preferred_element_type=f32)  # (B, 128)
    # tiny constant selection matmuls: (b,a)-rows -> (batch rows, agent lanes); no XLU shuffles
    s_key = jnp.dot(batch_sel_ref[...], sk * agent_diag_ref[...],
                    preferred_element_type=f32)                            # (B, 128)
    # bias row 10: +abo on the 5 agent lanes, -1e30 on padded lanes (softmax mask)
    score = s_key + sq + bias_ref[10:11, 0:128]                            # (B, 128)

    # --- per-batch softmax over the agent axis (f32, exact division) -----------------------
    m = jnp.max(score, axis=-1, keepdims=True)
    e = jnp.exp(score - m)
    attn = e / jnp.sum(e, axis=-1, keepdims=True)                          # (B, 128), lanes>=5 == 0
    prob_ref[...] = attn                                                   # lane-dense store

    # --- value fusion on the MXU: feats * lane-tiled attention, then block-sum over agents -
    attn_tiled = jnp.dot(attn[:, 0:N_AGENTS], expand_ref[...],
                         preferred_element_type=f32)                       # (B, 160)
    attn_full = jnp.dot(rowsel_ref[...], attn_tiled,
                        preferred_element_type=f32)                        # (BHW, 160)
    fused = jnp.dot(feats * attn_full, blocksum_ref[...],
                    preferred_element_type=f32)                            # (BHW, 32)

    # --- decoder stand-in: bf16 matmul, class lanes padded to 128 (sliced in wrapper) ------
    pred_ref[...] = (jnp.dot(fused.astype(jnp.bfloat16), dec_w_ref[...],
                             preferred_element_type=f32)
                     + bias_ref[11:12, 0:128])                             # (BHW, 128)


# -------------------------------------- full forward -------------------------------------
def learn_when2com_forward(x, packed):
    # x: (B, 5*3, H, W) NCHW float32
    # single NCHW -> channels-last shuffle + bf16 cast at entry (halves the biggest input DMA)
    x_rows = (jnp.transpose(x, (0, 2, 3, 1))
              .reshape(BHW, CIN_ALL)
              .astype(jnp.bfloat16))                                       # (BHW, 15)

    # per-(batch, agent) global mean pooling hoisted to the wrapper (review-sanctioned):
    # rows 0..B*5-1 = (b, a) pooled features (agent-major), rows B*5..B*5+B-1 = agent-0 rows.
    pooled_ba = jnp.mean(x, axis=(2, 3))                                   # (B, 15)
    pooled_all = pooled_ba.reshape(BA, IN_CH)                              # (10, 3)
    pooled_q = pooled_ba.reshape(B, N_AGENTS, IN_CH)[:, 0, :]              # (B, 3)
    pooled_packed = jnp.concatenate([pooled_all, pooled_q], axis=0)        # (12, 3)

    pred_flat, prob_pad = pl.pallas_call(
        _fused_forward_kernel,
        out_shape=(jax.ShapeDtypeStruct((BHW, PAD_LANE), jnp.float32),
                   jax.ShapeDtypeStruct((B, PAD_LANE), jnp.float32)),
        compiler_params=pltpu.CompilerParams(vmem_limit_bytes=32 * 1024 * 1024),
    )(x_rows, pooled_packed, *packed)

    pred = (pred_flat[:, :N_CLASSES]
            .reshape(B, H, W, N_CLASSES)
            .transpose(0, 3, 1, 2))                                        # (B, n_classes, H, W)
    prob_action = prob_pad[:, :N_AGENTS].reshape(B, 1, N_AGENTS)           # (B, 1, 5)
    action = jnp.argmax(prob_action, axis=2)                               # (B, 1)
    return pred, prob_action, action


# ----------------------------------- deterministic params --------------------------------
def init_params(key):
    ks = jax.random.split(key, 24)
    w = lambda k, shape, s=0.05: (s * jax.random.normal(k, shape)).astype(jnp.float32)
    return {
        "enc_w": w(ks[0], (N_AGENTS, IN_CH, C_V)),        # 5 separate per-agent encoders
        "enc_b": w(ks[1], (N_AGENTS, 1, C_V)),
        "qk_w": w(ks[2], (IN_CH, QK_FEAT)),
        "qk_b": w(ks[3], (1, QK_FEAT)),
        "key_w1": w(ks[4], (QK_FEAT, 256)), "key_b1": w(ks[5], (1, 256)),
        "key_w2": w(ks[6], (256, 128)),     "key_b2": w(ks[7], (1, 128)),
        "key_w3": w(ks[8], (128, KEY_SIZE)), "key_b3": w(ks[9], (1, KEY_SIZE)),
        "qry_w1": w(ks[10], (QK_FEAT, 256)), "qry_b1": w(ks[11], (1, 256)),
        "qry_w2": w(ks[12], (256, 128)),     "qry_b2": w(ks[13], (1, 128)),
        "qry_w3": w(ks[14], (128, QUERY_SIZE)), "qry_b3": w(ks[15], (1, QUERY_SIZE)),
        "att_wf": w(ks[16], (KEY_SIZE, 128)), "att_bf": w(ks[17], (1, 128)),
        "att_wc": w(ks[18], (QUERY_SIZE, 128)), "att_bc": w(ks[19], (1, 128)),
        "att_wo": w(ks[20], (128, 1)),        "att_bo": w(ks[21], (1, 1)),
        "dec_w": w(ks[22], (C_V, N_CLASSES)), "dec_b": w(ks[23], (1, N_CLASSES)),
    }


def pack_params(p):
    """One-time (outside jit) packing into a few lane-aligned slabs + tiny MXU constants."""
    f = lambda a: np.asarray(a, dtype=np.float32)

    # 5 separate (3 -> C_V) encoders packed block-diagonally -> one (15, 160) bf16 matmul
    enc_w = np.zeros((CIN_ALL, CV_ALL), np.float32)
    for a in range(N_AGENTS):
        enc_w[a * IN_CH:(a + 1) * IN_CH, a * C_V:(a + 1) * C_V] = f(p["enc_w"][a])

    # W256 slab (256, 768): [key_w1 | qry_w1 | key_w2 | qry_w2], all slices 128-lane aligned
    w256 = np.zeros((QK_FEAT, 768), np.float32)
    w256[:, 0:256] = f(p["key_w1"]); w256[:, 256:512] = f(p["qry_w1"])
    w256[:, 512:640] = f(p["key_w2"]); w256[:, 640:768] = f(p["qry_w2"])

    # W128 slab (128, 640): [key_w3 | qry_w3 | att_wf | att_wc | awo replicated on 5 agent lanes]
    w128 = np.zeros((128, 640), np.float32)
    w128[:, 0:128] = f(p["key_w3"]); w128[:, 128:256] = f(p["qry_w3"])
    w128[:, 256:384] = f(p["att_wf"]); w128[:, 384:512] = f(p["att_wc"])
    w128[:, 512:512 + N_AGENTS] = np.tile(f(p["att_wo"]), (1, N_AGENTS))

    # bias slab (12, 256): one row per bias, lane 0 aligned
    bias = np.zeros((12, 256), np.float32)
    bias[0, :CV_ALL] = f(p["enc_b"]).reshape(-1)
    bias[1, :QK_FEAT] = f(p["qk_b"]).reshape(-1)
    bias[2, :256] = f(p["key_b1"]).reshape(-1); bias[3, :128] = f(p["key_b2"]).reshape(-1)
    bias[4, :128] = f(p["key_b3"]).reshape(-1)
    bias[5, :256] = f(p["qry_b1"]).reshape(-1); bias[6, :128] = f(p["qry_b2"]).reshape(-1)
    bias[7, :128] = f(p["qry_b3"]).reshape(-1)
    bias[8, :128] = f(p["att_bf"]).reshape(-1); bias[9, :128] = f(p["att_bc"]).reshape(-1)
    bias[10, :N_AGENTS] = f(p["att_bo"]).reshape(-1)[0]   # +abo on the 5 real agent lanes
    bias[10, N_AGENTS:128] = -1e30                        # softmax mask for padded agent lanes
    bias[11, :N_CLASSES] = f(p["dec_b"]).reshape(-1)

    # decoder padded to 128 output lanes (extra columns exactly zero), bf16
    dec_w = np.zeros((C_V, PAD_LANE), np.float32)
    dec_w[:, :N_CLASSES] = f(p["dec_w"])

    # constant selection / expansion matrices (ride the MXU; replace XLU reshapes & splats)
    agent_diag = np.zeros((BA, PAD_LANE), np.float32)          # delta(lane, row % 5)
    agent_diag[np.arange(BA), np.arange(BA) % N_AGENTS] = 1.0
    batch_sel = np.zeros((B, BA), np.float32)                  # delta(row // 5, batch)
    batch_sel[np.arange(BA) // N_AGENTS, np.arange(BA)] = 1.0
    expand = np.kron(np.eye(N_AGENTS, dtype=np.float32),
                     np.ones((1, C_V), np.float32))            # (5, 160)
    rowsel = np.zeros((BHW, B), np.float32)                    # delta(pixel_row // HW, batch)
    rowsel[np.arange(BHW), np.arange(BHW) // HW] = 1.0
    blocksum = np.kron(np.ones((N_AGENTS, 1), np.float32),
                       np.eye(C_V, dtype=np.float32))          # (160, 32)

    jf = lambda a: jnp.asarray(a, dtype=jnp.float32)
    jb = lambda a: jnp.asarray(a, dtype=jnp.bfloat16)
    return (jb(enc_w), jf(p["qk_w"]), jf(w256), jf(w128), jf(bias), jb(dec_w),
            jf(agent_diag), jf(batch_sel), jf(expand), jf(rowsel), jf(blocksum))


if __name__ == "__main__":
    key = jax.random.PRNGKey(0)
    pkey, xkey = jax.random.split(key)
    params = init_params(pkey)
    packed = pack_params(params)           # packed once, outside the jitted forward
    x = jax.random.normal(xkey, (B, N_AGENTS * IN_CH, H, W), dtype=jnp.float32)

    fwd = jax.jit(learn_when2com_forward)
    pred, prob_action, action = fwd(x, packed)
    jax.block_until_ready((pred, prob_action, action))

    assert pred.shape == (B, N_CLASSES, H, W)
    assert prob_action.shape == (B, 1, N_AGENTS)
    assert action.shape == (B, 1)
    # softmax over agents sums to 1 (exact division in-kernel; padded lanes are exactly 0)
    assert bool(jnp.allclose(jnp.sum(prob_action, axis=2), 1.0, atol=1e-5))
    print("KERNEL_OK")
</pallas_src>

<mosaic_0001>
module attributes {stable_mosaic.version = 11 : i64} {
  func.func @_fused_forward_kernel(%arg0: memref<512x15xbf16, #tpu.memory_space<vmem>>, %arg1: memref<12x3xf32, #tpu.memory_space<vmem>>, %arg2: memref<15x160xbf16, #tpu.memory_space<vmem>>, %arg3: memref<3x256xf32, #tpu.memory_space<vmem>>, %arg4: memref<256x768xf32, #tpu.memory_space<vmem>>, %arg5: memref<128x640xf32, #tpu.memory_space<vmem>>, %arg6: memref<12x256xf32, #tpu.memory_space<vmem>>, %arg7: memref<32x128xbf16, #tpu.memory_space<vmem>>, %arg8: memref<10x128xf32, #tpu.memory_space<vmem>>, %arg9: memref<2x10xf32, #tpu.memory_space<vmem>>, %arg10: memref<5x160xf32, #tpu.memory_space<vmem>>, %arg11: memref<512x2xf32, #tpu.memory_space<vmem>>, %arg12: memref<160x32xf32, #tpu.memory_space<vmem>>, %arg13: memref<512x128xf32, #tpu.memory_space<vmem>>, %arg14: memref<2x128xf32, #tpu.memory_space<vmem>>) attributes {dimension_semantics = [], scalar_prefetch = 0 : i64, scratch_operands = 0 : i64, tpu.core_type = #tpu.core_type<tc>} {
    %c0 = arith.constant 0 : index
    %c0_0 = arith.constant 0 : index
    %0 = vector.load %arg0[%c0, %c0_0] : memref<512x15xbf16, #tpu.memory_space<vmem>>, vector<512x15xbf16>
    %c0_1 = arith.constant 0 : index
    %c0_2 = arith.constant 0 : index
    %1 = vector.load %arg2[%c0_1, %c0_2] : memref<15x160xbf16, #tpu.memory_space<vmem>>, vector<15x160xbf16>
    %cst = arith.constant dense<0.000000e+00> : vector<512x160xf32>
    %2 = tpu.matmul %0, %1, %cst {dimension_numbers = #tpu.dot_dimension_numbers<[1], [0], [0], [1], [0, 0, 1, 1], [], []>} : vector<512x15xbf16>, vector<15x160xbf16>, vector<512x160xf32> -> vector<512x160xf32>
    %c0_3 = arith.constant 0 : index
    %c0_4 = arith.constant 0 : index
    %3 = vector.load %arg6[%c0_3, %c0_4] : memref<12x256xf32, #tpu.memory_space<vmem>>, vector<1x160xf32>
    %4 = vector.broadcast %3 : vector<1x160xf32> to vector<512x160xf32>
    %5 = arith.addf %2, %4 : vector<512x160xf32>
    %cst_5 = arith.constant 0.000000e+00 : f32
    %6 = vector.broadcast %cst_5 : f32 to vector<512x160xf32>
    %7 = arith.maximumf %5, %6 : vector<512x160xf32>
    %c0_6 = arith.constant 0 : index
    %c0_7 = arith.constant 0 : index
    %8 = vector.load %arg3[%c0_6, %c0_7] : memref<3x256xf32, #tpu.memory_space<vmem>>, vector<3x256xf32>
    %c1 = arith.constant 1 : index
    %c0_8 = arith.constant 0 : index
    %9 = vector.load %arg6[%c1, %c0_8] : memref<12x256xf32, #tpu.memory_space<vmem>>, vector<1x256xf32>
    %c0_9 = arith.constant 0 : index
    %c0_10 = arith.constant 0 : index
    %10 = vector.load %arg1[%c0_9, %c0_10] : memref<12x3xf32, #tpu.memory_space<vmem>>, vector<10x3xf32>
    %cst_11 = arith.constant dense<0.000000e+00> : vector<10x256xf32>
    %11 = tpu.matmul %10, %8, %cst_11 {dimension_numbers = #tpu.dot_dimension_numbers<[1], [0], [0], [1], [0, 0, 1, 1], [], []>} : vector<10x3xf32>, vector<3x256xf32>, vector<10x256xf32> -> vector<10x256xf32>
    %12 = vector.broadcast %9 : vector<1x256xf32> to vector<10x256xf32>
    %13 = arith.addf %11, %12 : vector<10x256xf32>
    %cst_12 = arith.constant 0.000000e+00 : f32
    %14 = vector.broadcast %cst_12 : f32 to vector<10x256xf32>
    %15 = arith.maximumf %13, %14 : vector<10x256xf32>
    %c10 = arith.constant 10 : index
    %c0_13 = arith.constant 0 : index
    %16 = vector.load %arg1[%c10, %c0_13] : memref<12x3xf32, #tpu.memory_space<vmem>>, vector<2x3xf32>
    %cst_14 = arith.constant dense<0.000000e+00> : vector<2x256xf32>
    %17 = tpu.matmul %16, %8, %cst_14 {dimension_numbers = #tpu.dot_dimension_numbers<[1], [0], [0], [1], [0, 0, 1, 1], [], []>} : vector<2x3xf32>, vector<3x256xf32>, vector<2x256xf32> -> vector<2x256xf32>
    %18 = vector.broadcast %9 : vector<1x256xf32> to vector<2x256xf32>
    %19 = arith.addf %17, %18 : vector<2x256xf32>
    %cst_15 = arith.constant 0.000000e+00 : f32
    %20 = vector.broadcast %cst_15 : f32 to vector<2x256xf32>
    %21 = arith.maximumf %19, %20 : vector<2x256xf32>
    %c0_16 = arith.constant 0 : index
    %c0_17 = arith.constant 0 : index
    %22 = vector.load %arg4[%c0_16, %c0_17] : memref<256x768xf32, #tpu.memory_space<vmem>>, vector<256x256xf32>
    %cst_18 = arith.constant dense<0.000000e+00> : vector<10x256xf32>
    %23 = tpu.matmul %15, %22, %cst_18 {dimension_numbers = #tpu.dot_dimension_numbers<[1], [0], [0], [1], [0, 0, 1, 1], [], []>} : vector<10x256xf32>, vector<256x256xf32>, vector<10x256xf32> -> vector<10x256xf32>
    %c2 = arith.constant 2 : index
    %c0_19 = arith.constant 0 : index
    %24 = vector.load %arg6[%c2, %c0_19] : memref<12x256xf32, #tpu.memory_space<vmem>>, vector<1x256xf32>
    %25 = vector.broadcast %24 : vector<1x256xf32> to vector<10x256xf32>
    %26 = arith.addf %23, %25 : vector<10x256xf32>
    %cst_20 = arith.constant 0.000000e+00 : f32
    %27 = vector.broadcast %cst_20 : f32 to vector<10x256xf32>
    %28 = arith.maximumf %26, %27 : vector<10x256xf32>
    %c0_21 = arith.constant 0 : index
    %c512 = arith.constant 512 : index
    %29 = vector.load %arg4[%c0_21, %c512] : memref<256x768xf32, #tpu.memory_space<vmem>>, vector<256x128xf32>
    %cst_22 = arith.constant dense<0.000000e+00> : vector<10x128xf32>
    %30 = tpu.matmul %28, %29, %cst_22 {dimension_numbers = #tpu.dot_dimension_numbers<[1], [0], [0], [1], [0, 0, 1, 1], [], []>} : vector<10x256xf32>, vector<256x128xf32>, vector<10x128xf32> -> vector<10x128xf32>
    %c3 = arith.constant 3 : index
    %c0_23 = arith.constant 0 : index
    %31 = vector.load %arg6[%c3, %c0_23] : memref<12x256xf32, #tpu.memory_space<vmem>>, vector<1x128xf32>
    %32 = vector.broadcast %31 : vector<1x128xf32> to vector<10x128xf32>
    %33 = arith.addf %30, %32 : vector<10x128xf32>
    %cst_24 = arith.constant 0.000000e+00 : f32
    %34 = vector.broadcast %cst_24 : f32 to vector<10x128xf32>
    %35 = arith.maximumf %33, %34 : vector<10x128xf32>
    %c0_25 = arith.constant 0 : index
    %c0_26 = arith.constant 0 : index
    %36 = vector.load %arg5[%c0_25, %c0_26] : memref<128x640xf32, #tpu.memory_space<vmem>>, vector<128x128xf32>
    %cst_27 = arith.constant dense<0.000000e+00> : vector<10x128xf32>
    %37 = tpu.matmul %35, %36, %cst_27 {dimension_numbers = #tpu.dot_dimension_numbers<[1], [0], [0], [1], [0, 0, 1, 1], [], []>} : vector<10x128xf32>, vector<128x128xf32>, vector<10x128xf32> -> vector<10x128xf32>
    %c4 = arith.constant 4 : index
    %c0_28 = arith.constant 0 : index
    %38 = vector.load %arg6[%c4, %c0_28] : memref<12x256xf32, #tpu.memory_space<vmem>>, vector<1x128xf32>
    %39 = vector.broadcast %38 : vector<1x128xf32> to vector<10x128xf32>
    %40 = arith.addf %37, %39 : vector<10x128xf32>
    %c0_29 = arith.constant 0 : index
    %c256 = arith.constant 256 : index
    %41 = vector.load %arg4[%c0_29, %c256] : memref<256x768xf32, #tpu.memory_space<vmem>>, vector<256x256xf32>
    %cst_30 = arith.constant dense<0.000000e+00> : vector<2x256xf32>
    %42 = tpu.matmul %21, %41, %cst_30 {dimension_numbers = #tpu.dot_dimension_numbers<[1], [0], [0], [1], [0, 0, 1, 1], [], []>} : vector<2x256xf32>, vector<256x256xf32>, vector<2x256xf32> -> vector<2x256xf32>
    %c5 = arith.constant 5 : index
    %c0_31 = arith.constant 0 : index
    %43 = vector.load %arg6[%c5, %c0_31] : memref<12x256xf32, #tpu.memory_space<vmem>>, vector<1x256xf32>
    %44 = vector.broadcast %43 : vector<1x256xf32> to vector<2x256xf32>
    %45 = arith.addf %42, %44 : vector<2x256xf32>
    %cst_32 = arith.constant 0.000000e+00 : f32
    %46 = vector.broadcast %cst_32 : f32 to vector<2x256xf32>
    %47 = arith.maximumf %45, %46 : vector<2x256xf32>
    %c0_33 = arith.constant 0 : index
    %c640 = arith.constant 640 : index
    %48 = vector.load %arg4[%c0_33, %c640] : memref<256x768xf32, #tpu.memory_space<vmem>>, vector<256x128xf32>
    %cst_34 = arith.constant dense<0.000000e+00> : vector<2x128xf32>
    %49 = tpu.matmul %47, %48, %cst_34 {dimension_numbers = #tpu.dot_dimension_numbers<[1], [0], [0], [1], [0, 0, 1, 1], [], []>} : vector<2x256xf32>, vector<256x128xf32>, vector<2x128xf32> -> vector<2x128xf32>
    %c6 = arith.constant 6 : index
    %c0_35 = arith.constant 0 : index
    %50 = vector.load %arg6[%c6, %c0_35] : memref<12x256xf32, #tpu.memory_space<vmem>>, vector<1x128xf32>
    %51 = vector.broadcast %50 : vector<1x128xf32> to vector<2x128xf32>
    %52 = arith.addf %49, %51 : vector<2x128xf32>
    %cst_36 = arith.constant 0.000000e+00 : f32
    %53 = vector.broadcast %cst_36 : f32 to vector<2x128xf32>
    %54 = arith.maximumf %52, %53 : vector<2x128xf32>
    %c0_37 = arith.constant 0 : index
    %c128 = arith.constant 128 : index
    %55 = vector.load %arg5[%c0_37, %c128] : memref<128x640xf32, #tpu.memory_space<vmem>>, vector<128x128xf32>
    %cst_38 = arith.constant dense<0.000000e+00> : vector<2x128xf32>
    %56 = tpu.matmul %54, %55, %cst_38 {dimension_numbers = #tpu.dot_dimension_numbers<[1], [0], [0], [1], [0, 0, 1, 1], [], []>} : vector<2x128xf32>, vector<128x128xf32>, vector<2x128xf32> -> vector<2x128xf32>
    %c7 = arith.constant 7 : index
    %c0_39 = arith.constant 0 : index
    %57 = vector.load %arg6[%c7, %c0_39] : memref<12x256xf32, #tpu.memory_space<vmem>>, vector<1x128xf32>
    %58 = vector.broadcast %57 : vector<1x128xf32> to vector<2x128xf32>
    %59 = arith.addf %56, %58 : vector<2x128xf32>
    %c0_40 = arith.constant 0 : index
    %c256_41 = arith.constant 256 : index
    %60 = vector.load %arg5[%c0_40, %c256_41] : memref<128x640xf32, #tpu.memory_space<vmem>>, vector<128x128xf32>
    %cst_42 = arith.constant dense<0.000000e+00> : vector<10x128xf32>
    %61 = tpu.matmul %40, %60, %cst_42 {dimension_numbers = #tpu.dot_dimension_numbers<[1], [0], [0], [1], [0, 0, 1, 1], [], []>} : vector<10x128xf32>, vector<128x128xf32>, vector<10x128xf32> -> vector<10x128xf32>
    %c8 = arith.constant 8 : index
    %c0_43 = arith.constant 0 : index
    %62 = vector.load %arg6[%c8, %c0_43] : memref<12x256xf32, #tpu.memory_space<vmem>>, vector<1x128xf32>
    %63 = vector.broadcast %62 : vector<1x128xf32> to vector<10x128xf32>
    %64 = arith.addf %61, %63 : vector<10x128xf32>
    %c0_44 = arith.constant 0 : index
    %c384 = arith.constant 384 : index
    %65 = vector.load %arg5[%c0_44, %c384] : memref<128x640xf32, #tpu.memory_space<vmem>>, vector<128x128xf32>
    %cst_45 = arith.constant dense<0.000000e+00> : vector<2x128xf32>
    %66 = tpu.matmul %59, %65, %cst_45 {dimension_numbers = #tpu.dot_dimension_numbers<[1], [0], [0], [1], [0, 0, 1, 1], [], []>} : vector<2x128xf32>, vector<128x128xf32>, vector<2x128xf32> -> vector<2x128xf32>
    %c9 = arith.constant 9 : index
    %c0_46 = arith.constant 0 : index
    %67 = vector.load %arg6[%c9, %c0_46] : memref<12x256xf32, #tpu.memory_space<vmem>>, vector<1x128xf32>
    %68 = vector.broadcast %67 : vector<1x128xf32> to vector<2x128xf32>
    %69 = arith.addf %66, %68 : vector<2x128xf32>
    %c0_47 = arith.constant 0 : index
    %c512_48 = arith.constant 512 : index
    %70 = vector.load %arg5[%c0_47, %c512_48] : memref<128x640xf32, #tpu.memory_space<vmem>>, vector<128x128xf32>
    %cst_49 = arith.constant dense<0.000000e+00> : vector<10x128xf32>
    %71 = tpu.matmul %64, %70, %cst_49 {dimension_numbers = #tpu.dot_dimension_numbers<[1], [0], [0], [1], [0, 0, 1, 1], [], []>} : vector<10x128xf32>, vector<128x128xf32>, vector<10x128xf32> -> vector<10x128xf32>
    %c0_50 = arith.constant 0 : index
    %c512_51 = arith.constant 512 : index
    %72 = vector.load %arg5[%c0_50, %c512_51] : memref<128x640xf32, #tpu.memory_space<vmem>>, vector<128x128xf32>
    %cst_52 = arith.constant dense<0.000000e+00> : vector<2x128xf32>
    %73 = tpu.matmul %69, %72, %cst_52 {dimension_numbers = #tpu.dot_dimension_numbers<[1], [0], [0], [1], [0, 0, 1, 1], [], []>} : vector<2x128xf32>, vector<128x128xf32>, vector<2x128xf32> -> vector<2x128xf32>
    %c0_53 = arith.constant 0 : index
    %c0_54 = arith.constant 0 : index
    %74 = vector.load %arg9[%c0_53, %c0_54] : memref<2x10xf32, #tpu.memory_space<vmem>>, vector<2x10xf32>
    %c0_55 = arith.constant 0 : index
    %c0_56 = arith.constant 0 : index
    %75 = vector.load %arg8[%c0_55, %c0_56] : memref<10x128xf32, #tpu.memory_space<vmem>>, vector<10x128xf32>
    %76 = arith.mulf %71, %75 : vector<10x128xf32>
    %cst_57 = arith.constant dense<0.000000e+00> : vector<2x128xf32>
    %77 = tpu.matmul %74, %76, %cst_57 {dimension_numbers = #tpu.dot_dimension_numbers<[1], [0], [0], [1], [0, 0, 1, 1], [], []>} : vector<2x10xf32>, vector<10x128xf32>, vector<2x128xf32> -> vector<2x128xf32>
    %78 = arith.addf %77, %73 : vector<2x128xf32>
    %c10_58 = arith.constant 10 : index
    %c0_59 = arith.constant 0 : index
    %79 = vector.load %arg6[%c10_58, %c0_59] : memref<12x256xf32, #tpu.memory_space<vmem>>, vector<1x128xf32>
    %80 = vector.broadcast %79 : vector<1x128xf32> to vector<2x128xf32>
    %81 = arith.addf %78, %80 : vector<2x128xf32>
    %cst_60 = arith.constant dense<0xFF800000> : vector<2xf32>
    %82 = vector.multi_reduction <maximumf>, %81, %cst_60 [1] : vector<2x128xf32> to vector<2xf32>
    %83 = vector.shape_cast %82 : vector<2xf32> to vector<2x1xf32>
    %84 = vector.broadcast %83 : vector<2x1xf32> to vector<2x128xf32>
    %85 = arith.subf %81, %84 : vector<2x128xf32>
    %86 = math.exp %85 : vector<2x128xf32>
    %cst_61 = arith.constant dense<0.000000e+00> : vector<2xf32>
    %87 = vector.multi_reduction <add>, %86, %cst_61 [1] : vector<2x128xf32> to vector<2xf32>
    %88 = vector.shape_cast %87 : vector<2xf32> to vector<2x1xf32>
    %89 = vector.broadcast %88 : vector<2x1xf32> to vector<2x128xf32>
    %90 = arith.divf %86, %89 : vector<2x128xf32>
    %c0_62 = arith.constant 0 : index
    %c0_63 = arith.constant 0 : index
    %91 = vector.load %arg14[%c0_62, %c0_63] : memref<2x128xf32, #tpu.memory_space<vmem>>, vector<2x128xf32>
    tpu.vector_store %arg14[%c0_62, %c0_63], %90 {strides = array<i32>} : memref<2x128xf32, #tpu.memory_space<vmem>>, vector<2x128xf32>,
    %92 = vector.extract_strided_slice %90 {offsets = [0, 0], sizes = [2, 5], strides = [1, 1]} : vector<2x128xf32> to vector<2x5xf32>
    %c0_64 = arith.constant 0 : index
    %c0_65 = arith.constant 0 : index
    %93 = vector.load %arg10[%c0_64, %c0_65] : memref<5x160xf32, #tpu.memory_space<vmem>>, vector<5x160xf32>
    %cst_66 = arith.constant dense<0.000000e+00> : vector<2x160xf32>
    %94 = tpu.matmul %92, %93, %cst_66 {dimension_numbers = #tpu.dot_dimension_numbers<[1], [0], [0], [1], [0, 0, 1, 1], [], []>} : vector<2x5xf32>, vector<5x160xf32>, vector<2x160xf32> -> vector<2x160xf32>
    %c0_67 = arith.constant 0 : index
    %c0_68 = arith.constant 0 : index
    %95 = vector.load %arg11[%c0_67, %c0_68] : memref<512x2xf32, #tpu.memory_space<vmem>>, vector<512x2xf32>
    %cst_69 = arith.constant dense<0.000000e+00> : vector<512x160xf32>
    %96 = tpu.matmul %95, %94, %cst_69 {dimension_numbers = #tpu.dot_dimension_numbers<[1], [0], [0], [1], [0, 0, 1, 1], [], []>} : vector<512x2xf32>, vector<2x160xf32>, vector<512x160xf32> -> vector<512x160xf32>
    %97 = arith.mulf %7, %96 : vector<512x160xf32>
    %c0_70 = arith.constant 0 : index
    %c0_71 = arith.constant 0 : index
    %98 = vector.load %arg12[%c0_70, %c0_71] : memref<160x32xf32, #tpu.memory_space<vmem>>, vector<160x32xf32>
    %cst_72 = arith.constant dense<0.000000e+00> : vector<512x32xf32>
    %99 = tpu.matmul %97, %98, %cst_72 {dimension_numbers = #tpu.dot_dimension_numbers<[1], [0], [0], [1], [0, 0, 1, 1], [], []>} : vector<512x160xf32>, vector<160x32xf32>, vector<512x32xf32> -> vector<512x32xf32>
    %100 = arith.truncf %99 : vector<512x32xf32> to vector<512x32xbf16>
    %c0_73 = arith.constant 0 : index
    %c0_74 = arith.constant 0 : index
    %101 = vector.load %arg7[%c0_73, %c0_74] : memref<32x128xbf16, #tpu.memory_space<vmem>>, vector<32x128xbf16>
    %cst_75 = arith.constant dense<0.000000e+00> : vector<512x128xf32>
    %102 = tpu.matmul %100, %101, %cst_75 {dimension_numbers = #tpu.dot_dimension_numbers<[1], [0], [0], [1], [0, 0, 1, 1], [], []>} : vector<512x32xbf16>, vector<32x128xbf16>, vector<512x128xf32> -> vector<512x128xf32>
    %c11 = arith.constant 11 : index
    %c0_76 = arith.constant 0 : index
    %103 = vector.load %arg6[%c11, %c0_76] : memref<12x256xf32, #tpu.memory_space<vmem>>, vector<1x128xf32>
    %104 = vector.broadcast %103 : vector<1x128xf32> to vector<512x128xf32>
    %105 = arith.addf %102, %104 : vector<512x128xf32>
    %c0_77 = arith.constant 0 : index
    %c0_78 = arith.constant 0 : index
    %106 = vector.load %arg13[%c0_77, %c0_78] : memref<512x128xf32, #tpu.memory_space<vmem>>, vector<512x128xf32>
    tpu.vector_store %arg13[%c0_77, %c0_78], %105 {strides = array<i32>} : memref<512x128xf32, #tpu.memory_space<vmem>>, vector<512x128xf32>,
    return
  }
}

</mosaic_0001>

<llo_original>
// kernel: learn_when2com_forward.1
$region0: #{learn_when2com_forward.1}
  #allocation0 [shape = 'u32[]', space=smem, size = 0x4, offset = 0x4, fixed_abs, tag = 'smem constant byte address 0x4 - core index']
  #allocation1 [shape = 'u32[144,128]{1,0:T(1,128)}', space=vmem, size = 0x12000, scoped, tag = 'internal scratch']
  %s0 = inlined_call_operand.vmem [shape: bf16[512,15], index: 0, kind: input, shape index: {}]
  %s1 = inlined_call_operand.vmem [shape: f32[12,3], index: 1, kind: input, shape index: {}]
  %s2 = inlined_call_operand.vmem [shape: bf16[15,160], index: 2, kind: input, shape index: {}]
  %s3 = inlined_call_operand.vmem [shape: f32[3,256], index: 3, kind: input, shape index: {}]
  %s4 = inlined_call_operand.vmem [shape: f32[256,768], index: 4, kind: input, shape index: {}]
  %s5 = inlined_call_operand.hbm [shape: f32[128,640], index: 5, kind: input, shape index: {}]
  %s6 = inlined_call_operand.vmem [shape: f32[12,256], index: 6, kind: input, shape index: {}]
  %s7 = inlined_call_operand.vmem [shape: bf16[32,128], index: 7, kind: input, shape index: {}]
  %s8 = inlined_call_operand.vmem [shape: f32[10,128], index: 8, kind: input, shape index: {}]
  %s9 = inlined_call_operand.vmem [shape: f32[2,10], index: 9, kind: input, shape index: {}]
  %s10 = inlined_call_operand.vmem [shape: f32[5,160], index: 10, kind: input, shape index: {}]
  %s11 = inlined_call_operand.vmem [shape: f32[512,2], index: 11, kind: input, shape index: {}]
  %s12 = inlined_call_operand.vmem [shape: f32[160,32], index: 12, kind: input, shape index: {}]
  %s13 = inlined_call_operand.hbm [shape: f32[512,128], index: 13, kind: output, shape index: {0}]
  %s14 = inlined_call_operand.vmem [shape: f32[2,128], index: 14, kind: output, shape index: {1}]
  %15 = xla_tuple %s13, %s14
  %s16 = sld [smem:[#allocation0]]
  $region74: #{learn_when2com_forward.1} parent=0
    _
  %s18 = ssub.s32 1, %s16
  %s19 = scalar_select 0, %s18, %s16
  $region1: #{learn_when2com_forward.1} parent=0
    #allocation2 [shape = 'u8[327680]{0}', space=vmem, size = 0x50000, scoped, tag = 'input window, operand 5, single buffered']
    #allocation3 [shape = 's32[1]{0}', space=sflag, size = 0x4, scoped, tag = 'scoped memory for learn_when2com_forward.1']
    #allocation4 [shape = 's32[1]{0}', space=sflag, size = 0x4, scoped, tag = 'scoped memory for learn_when2com_forward.1']
    #allocation5 [shape = 'u8[262144]{0}', space=vmem, size = 0x40000, scoped, tag = 'output window, operand 0, single buffered']
    %20 = vsyncpa [#allocation3], 0
    %21 = vsyncpa [#allocation4], 0
    // Predicated region
    $region2: #{learn_when2com_forward.1} parent=1 // pred_check
      _
    $region3: #{learn_when2com_forward.1} parent=1 // pred_check_branch
      %23 = sbr.rel (0) target = $region5
    $region4: #{learn_when2com_forward.1} parent=1 // pred_region
      _
    $region5: #{learn_when2com_forward.1} parent=1 // pred_fallthru
      _
    // Predicated region
    $region6: #{learn_when2com_forward.1} parent=1 // pred_check
      _
    $region7: #{learn_when2com_forward.1} parent=1 // pred_check_branch
      %25 = sbr.rel (0) target = $region9
    $region8: #{learn_when2com_forward.1} parent=1 // pred_region
      _
    $region9: #{learn_when2com_forward.1} parent=1 // pred_fallthru
      _
    // Predicated region
    $region10: #{learn_when2com_forward.1} parent=1 // pred_check
      _
    $region11: #{learn_when2com_forward.1} parent=1 // pred_check_branch
      %27 = sbr.rel (0) target = $region13
    $region12: #{learn_when2com_forward.1} parent=1 // pred_region
      _
    $region13: #{learn_when2com_forward.1} parent=1 // pred_fallthru
      _
    // Predicated region
    $region14: #{learn_when2com_forward.1} parent=1 // pred_check
      _
    $region15: #{learn_when2com_forward.1} parent=1 // pred_check_branch
      %29 = sbr.rel (0) target = $region17
    $region16: #{learn_when2com_forward.1} parent=1 // pred_region
      _
    $region17: #{learn_when2com_forward.1} parent=1 // pred_fallthru
      _
    // Predicated region
    $region18: #{learn_when2com_forward.1} parent=1 // pred_check
      _
    $region19: #{learn_when2com_forward.1} parent=1 // pred_check_branch
      %31 = sbr.rel (0) target = $region21
    $region20: #{learn_when2com_forward.1} parent=1 // pred_region
      _
    $region21: #{learn_when2com_forward.1} parent=1 // pred_fallthru
      _
    // Predicated region
    $region22: #{learn_when2com_forward.1} parent=1 // pred_check
      _
    $region23: #{learn_when2com_forward.1} parent=1 // pred_check_branch
      %33 = sbr.rel (0) target = $region25
    $region24: #{learn_when2com_forward.1} parent=1 // pred_region
      %s35 = ssub.s32 10240, 10240
      %36 = vsyncadd [#allocation3], %s35
      %s37 = sshll.u32 [#allocation2], 4
      %s38 = int_to_ptr.vmem [resolvable:$true] %s37
      %43 = dma.hbm_to_vmem [thread:$0]  %s5, 10240, %s38, [#allocation3], 640, 640, 40
    $region25: #{learn_when2com_forward.1} parent=1 // pred_fallthru
      _
    // Predicated region
    $region26: #{learn_when2com_forward.1} parent=1 // pred_check
      _
    $region27: #{learn_when2com_forward.1} parent=1 // pred_check_branch
      %45 = sbr.rel (0) target = $region29
    $region28: #{learn_when2com_forward.1} parent=1 // pred_region
      _
    $region29: #{learn_when2com_forward.1} parent=1 // pred_fallthru
      _
    // Predicated region
    $region30: #{learn_when2com_forward.1} parent=1 // pred_check
      _
    $region31: #{learn_when2com_forward.1} parent=1 // pred_check_branch
      %47 = sbr.rel (0) target = $region33
    $region32: #{learn_when2com_forward.1} parent=1 // pred_region
      _
    $region33: #{learn_when2com_forward.1} parent=1 // pred_fallthru
      _
    // Predicated region
    $region34: #{learn_when2com_forward.1} parent=1 // pred_check
      _
    $region35: #{learn_when2com_forward.1} parent=1 // pred_check_branch
      %49 = sbr.rel (0) target = $region37
    $region36: #{learn_when2com_forward.1} parent=1 // pred_region
      _
    $region37: #{learn_when2com_forward.1} parent=1 // pred_fallthru
      _
    // Predicated region
    $region38: #{learn_when2com_forward.1} parent=1 // pred_check
      _
    $region39: #{learn_when2com_forward.1} parent=1 // pred_check_branch
      %51 = sbr.rel (0) target = $region41
    $region40: #{learn_when2com_forward.1} parent=1 // pred_region
      _
    $region41: #{learn_when2com_forward.1} parent=1 // pred_fallthru
      _
    // Predicated region
    $region42: #{learn_when2com_forward.1} parent=1 // pred_check
      _
    $region43: #{learn_when2com_forward.1} parent=1 // pred_check_branch
      %53 = sbr.rel (0) target = $region45
    $region44: #{learn_when2com_forward.1} parent=1 // pred_region
      _
    $region45: #{learn_when2com_forward.1} parent=1 // pred_fallthru
      _
    // Predicated region
    $region46: #{learn_when2com_forward.1} parent=1 // pred_check
      _
    $region47: #{learn_when2com_forward.1} parent=1 // pred_check_branch
      %55 = sbr.rel (0) target = $region49
    $region48: #{learn_when2com_forward.1} parent=1 // pred_region
      _
    $region49: #{learn_when2com_forward.1} parent=1 // pred_fallthru
      _
    // Predicated region
    $region50: #{learn_when2com_forward.1} parent=1 // pred_check
      _
    $region51: #{learn_when2com_forward.1} parent=1 // pred_check_branch
      %57 = sbr.rel (0) target = $region53
    $region52: #{learn_when2com_forward.1} parent=1 // pred_region
      _
    $region53: #{learn_when2com_forward.1} parent=1 // pred_fallthru
      _
    // Predicated region
    $region54: #{learn_when2com_forward.1} parent=1 // pred_check
      _
    $region55: #{learn_when2com_forward.1} parent=1 // pred_check_branch
      %59 = sbr.rel (0) target = $region57
    $region56: #{learn_when2com_forward.1} parent=1 // pred_region
      %60 = dma.done [#allocation3], 10240
    $region57: #{learn_when2com_forward.1} parent=1 // pred_fallthru
      _
    %v62 = vld [vmem:[%s0] sm:$0xf]
    %v63 = vld [vmem:[%s0 + $0x4] sm:$0xf]
    %v64 = vld [vmem:[%s0 + $0x8] sm:$0xf]
    %v65 = vld [vmem:[%s0 + $0xc] sm:$0xf]
    %v66 = vld [vmem:[%s0 + $0x10] sm:$0xf]
    %v67 = vld [vmem:[%s0 + $0x14] sm:$0xf]
    %v68 = vld [vmem:[%s0 + $0x18] sm:$0xf]
    %v69 = vld [vmem:[%s0 + $0x1c] sm:$0xf]
    %v70 = vld [vmem:[%s0 + $0x20] sm:$0xf]
    %v71 = vld [vmem:[%s0 + $0x24] sm:$0xf]
    %v72 = vld [vmem:[%s0 + $0x28] sm:$0xf]
    %v73 = vld [vmem:[%s0 + $0x2c] sm:$0xf]
    %v74 = vld [vmem:[%s0 + $0x30] sm:$0xf]
    %v75 = vld [vmem:[%s0 + $0x34] sm:$0xf]
    %v76 = vld [vmem:[%s0 + $0x38] sm:$0xf]
    %v77 = vld [vmem:[%s0 + $0x3c] sm:$0xf]
    %v78 = vld [vmem:[%s0 + $0x40] sm:$0xf]
    %v79 = vld [vmem:[%s0 + $0x44] sm:$0xf]
    %v80 = vld [vmem:[%s0 + $0x48] sm:$0xf]
    %v81 = vld [vmem:[%s0 + $0x4c] sm:$0xf]
    %v82 = vld [vmem:[%s0 + $0x50] sm:$0xf]
    %v83 = vld [vmem:[%s0 + $0x54] sm:$0xf]
    %v84 = vld [vmem:[%s0 + $0x58] sm:$0xf]
    %v85 = vld [vmem:[%s0 + $0x5c] sm:$0xf]
    %v86 = vld [vmem:[%s0 + $0x60] sm:$0xf]
    %v87 = vld [vmem:[%s0 + $0x64] sm:$0xf]
    %v88 = vld [vmem:[%s0 + $0x68] sm:$0xf]
    %v89 = vld [vmem:[%s0 + $0x6c] sm:$0xf]
    %v90 = vld [vmem:[%s0 + $0x70] sm:$0xf]
    %v91 = vld [vmem:[%s0 + $0x74] sm:$0xf]
    %v92 = vld [vmem:[%s0 + $0x78] sm:$0xf]
    %v93 = vld [vmem:[%s0 + $0x7c] sm:$0xf]
    %v94 = vld [vmem:[%s0 + $0x80] sm:$0xf]
    %v95 = vld [vmem:[%s0 + $0x84] sm:$0xf]
    %v96 = vld [vmem:[%s0 + $0x88] sm:$0xf]
    %v97 = vld [vmem:[%s0 + $0x8c] sm:$0xf]
    %v98 = vld [vmem:[%s0 + $0x90] sm:$0xf]
    %v99 = vld [vmem:[%s0 + $0x94] sm:$0xf]
    %v100 = vld [vmem:[%s0 + $0x98] sm:$0xf]
    %v101 = vld [vmem:[%s0 + $0x9c] sm:$0xf]
    %v102 = vld [vmem:[%s0 + $0xa0] sm:$0xf]
    %v103 = vld [vmem:[%s0 + $0xa4] sm:$0xf]
    %v104 = vld [vmem:[%s0 + $0xa8] sm:$0xf]
    %v105 = vld [vmem:[%s0 + $0xac] sm:$0xf]
    %v106 = vld [vmem:[%s0 + $0xb0] sm:$0xf]
    %v107 = vld [vmem:[%s0 + $0xb4] sm:$0xf]
    %v108 = vld [vmem:[%s0 + $0xb8] sm:$0xf]
    %v109 = vld [vmem:[%s0 + $0xbc] sm:$0xf]
    %v110 = vld [vmem:[%s0 + $0xc0] sm:$0xf]
    %v111 = vld [vmem:[%s0 + $0xc4] sm:$0xf]
    %v112 = vld [vmem:[%s0 + $0xc8] sm:$0xf]
    %v113 = vld [vmem:[%s0 + $0xcc] sm:$0xf]
    %v114 = vld [vmem:[%s0 + $0xd0] sm:$0xf]
    %v115 = vld [vmem:[%s0 + $0xd4] sm:$0xf]
    %v116 = vld [vmem:[%s0 + $0xd8] sm:$0xf]
    %v117 = vld [vmem:[%s0 + $0xdc] sm:$0xf]
    %v118 = vld [vmem:[%s0 + $0xe0] sm:$0xf]
    %v119 = vld [vmem:[%s0 + $0xe4] sm:$0xf]
    %v120 = vld [vmem:[%s0 + $0xe8] sm:$0xf]
    %v121 = vld [vmem:[%s0 + $0xec] sm:$0xf]
    %v122 = vld [vmem:[%s0 + $0xf0] sm:$0xf]
    %v123 = vld [vmem:[%s0 + $0xf4] sm:$0xf]
    %v124 = vld [vmem:[%s0 + $0xf8] sm:$0xf]
    %v125 = vld [vmem:[%s0 + $0xfc] sm:$0xf]
    %v126 = vld [vmem:[%s2] sm:$0xff]
    %v127 = vld [vmem:[%s2 + $0x8] sm:$0xff]
    %v128 = vld [vmem:[%s6] ss:$8 sm:$0x3]
    %v130 = vlaneseq
    %v131 = vshrl.u32 %v130, 7
    %v132 = vsub.s32 0, %v131
    %v133 = vrot.slane %v128, %v132
    %v134 = vlaneseq
    %v135 = vshrl.u32 %v134, 7
    %v136 = vsub.s32 1, %v135
    %v137 = vrot.slane %v128, %v136
    %v204 = vunpack.c.l.b16 %v62
    %v205 = vunpack.c.l.b16 %v63
    %v206 = vunpack.c.l.b16 %v64
    %v207 = vunpack.c.l.b16 %v65
    %v208 = vunpack.c.l.b16 %v66
    %v209 = vunpack.c.l.b16 %v67
    %v210 = vunpack.c.l.b16 %v68
    %v211 = vunpack.c.l.b16 %v69
    %v212 = vunpack.c.l.b16 %v70
    %v213 = vunpack.c.l.b16 %v71
    %v214 = vunpack.c.l.b16 %v72
    %v215 = vunpack.c.l.b16 %v73
    %v216 = vunpack.c.l.b16 %v74
    %v217 = vunpack.c.l.b16 %v75
    %v218 = vunpack.c.l.b16 %v76
    %v219 = vunpack.c.l.b16 %v77
    %v220 = vunpack.c.l.b16 %v78
    %v221 = vunpack.c.l.b16 %v79
    %v222 = vunpack.c.l.b16 %v80
    %v223 = vunpack.c.l.b16 %v81
    %v224 = vunpack.c.l.b16 %v82
    %v225 = vunpack.c.l.b16 %v83
    %v226 = vunpack.c.l.b16 %v84
    %v227 = vunpack.c.l.b16 %v85
    %v228 = vunpack.c.l.b16 %v86
    %v229 = vunpack.c.l.b16 %v87
    %v230 = vunpack.c.l.b16 %v88
    %v231 = vunpack.c.l.b16 %v89
    %v232 = vunpack.c.l.b16 %v90
    %v233 = vunpack.c.l.b16 %v91
    %v234 = vunpack.c.l.b16 %v92
    %v235 = vunpack.c.l.b16 %v93
    %v236 = vunpack.c.l.b16 %v94
    %v237 = vunpack.c.l.b16 %v95
    %v238 = vunpack.c.l.b16 %v96
    %v239 = vunpack.c.l.b16 %v97
    %v240 = vunpack.c.l.b16 %v98
    %v241 = vunpack.c.l.b16 %v99
    %v242 = vunpack.c.l.b16 %v100
    %v243 = vunpack.c.l.b16 %v101
    %v244 = vunpack.c.l.b16 %v102
    %v245 = vunpack.c.l.b16 %v103
    %v246 = vunpack.c.l.b16 %v104
    %v247 = vunpack.c.l.b16 %v105
    %v248 = vunpack.c.l.b16 %v106
    %v249 = vunpack.c.l.b16 %v107
    %v250 = vunpack.c.l.b16 %v108
    %v251 = vunpack.c.l.b16 %v109
    %v252 = vunpack.c.l.b16 %v110
    %v253 = vunpack.c.l.b16 %v111
    %v254 = vunpack.c.l.b16 %v112
    %v255 = vunpack.c.l.b16 %v113
    %v256 = vunpack.c.l.b16 %v114
    %v257 = vunpack.c.l.b16 %v115
    %v258 = vunpack.c.l.b16 %v116
    %v259 = vunpack.c.l.b16 %v117
    %v260 = vunpack.c.l.b16 %v118
    %v261 = vunpack.c.l.b16 %v119
    %v262 = vunpack.c.l.b16 %v120
    %v263 = vunpack.c.l.b16 %v121
    %v264 = vunpack.c.l.b16 %v122
    %v265 = vunpack.c.l.b16 %v123
    %v266 = vunpack.c.l.b16 %v124
    %v267 = vunpack.c.l.b16 %v125
    %v268 = vpack.c.b16 %v205, %v204
    %v269 = vpack.c.b16 %v207, %v206
    %v270 = vpack.c.b16 %v209, %v208
    %v271 = vpack.c.b16 %v211, %v210
    %v272 = vpack.c.b16 %v213, %v212
    %v273 = vpack.c.b16 %v215, %v214
    %v274 = vpack.c.b16 %v217, %v216
    %v275 = vpack.c.b16 %v219, %v218
    %v276 = vpack.c.b16 %v221, %v220
    %v277 = vpack.c.b16 %v223, %v222
    %v278 = vpack.c.b16 %v225, %v224
    %v279 = vpack.c.b16 %v227, %v226
    %v280 = vpack.c.b16 %v229, %v228
    %v281 = vpack.c.b16 %v231, %v230
    %v282 = vpack.c.b16 %v233, %v232
    %v283 = vpack.c.b16 %v235, %v234
    %v284 = vpack.c.b16 %v237, %v236
    %v285 = vpack.c.b16 %v239, %v238
    %v286 = vpack.c.b16 %v241, %v240
    %v287 = vpack.c.b16 %v243, %v242
    %v288 = vpack.c.b16 %v245, %v244
    %v289 = vpack.c.b16 %v247, %v246
    %v290 = vpack.c.b16 %v249, %v248
    %v291 = vpack.c.b16 %v251, %v250
    %v292 = vpack.c.b16 %v253, %v252
    %v293 = vpack.c.b16 %v255, %v254
    %v294 = vpack.c.b16 %v257, %v256
    %v295 = vpack.c.b16 %v259, %v258
    %v296 = vpack.c.b16 %v261, %v260
    %v297 = vpack.c.b16 %v263, %v262
    %v298 = vpack.c.b16 %v265, %v264
    %v299 = vpack.c.b16 %v267, %v266
    %v302 = vunpack.c.l.b16 %v126
    %v303 = vunpack.c.h.b16 %v126
    %v304 = vunpack.c.l.b16 %v127
    %v305 = vunpack.c.h.b16 %v127
    %v306 = vpack.c.b16 %v304, %v302
    %v307 = vpack.c.b16 %v305, %v303
    %vm308 = vcmask 121856
    %v310 = vsel %vm308, %v268, 0
    %v313 = vsel %vm308, %v269, 0
    %v316 = vsel %vm308, %v270, 0
    %v319 = vsel %vm308, %v271, 0
    %v322 = vsel %vm308, %v272, 0
    %v325 = vsel %vm308, %v273, 0
    %v328 = vsel %vm308, %v274, 0
    %v331 = vsel %vm308, %v275, 0
    %v334 = vsel %vm308, %v276, 0
    %v337 = vsel %vm308, %v277, 0
    %v340 = vsel %vm308, %v278, 0
    %v343 = vsel %vm308, %v279, 0
    %v346 = vsel %vm308, %v280, 0
    %v349 = vsel %vm308, %v281, 0
    %v352 = vsel %vm308, %v282, 0
    %v355 = vsel %vm308, %v283, 0
    %v358 = vsel %vm308, %v284, 0
    %v361 = vsel %vm308, %v285, 0
    %v364 = vsel %vm308, %v286, 0
    %v367 = vsel %vm308, %v287, 0
    %v370 = vsel %vm308, %v288, 0
    %v373 = vsel %vm308, %v289, 0
    %v376 = vsel %vm308, %v290, 0
    %v379 = vsel %vm308, %v291, 0
    %v382 = vsel %vm308, %v292, 0
    %v385 = vsel %vm308, %v293, 0
    %v388 = vsel %vm308, %v294, 0
    %v391 = vsel %vm308, %v295, 0
    %v394 = vsel %vm308, %v296, 0
    %v397 = vsel %vm308, %v297, 0
    %v400 = vsel %vm308, %v298, 0
    %v403 = vsel %vm308, %v299, 0
    %vm405 = vcmask 1046528
    %vm406 = vcmask 1047552
    %v407 = vsel %vm405, 4294967295, 65535
    %v408 = vsel %vm406, %v407, 0
    %v410 = vand.u32 %v306, %v408
    %v413 = vand.u32 %v307, %v408
    %415 = vmatprep.subr.bf16.mxu0 0
    %416 = vmatpush1.bf16.msra.mxu0 0
    %417 = vmatprep.subr.bf16.mxu0 0
    %418 = vmatpush1.bf16.msra.mxu0 0
    %419 = vmatprep.subr.bf16.mxu0 0
    %420 = vmatpush1.bf16.msra.mxu0 0
    %421 = vmatprep.subr.bf16.mxu0 0
    %422 = vmatpush1.bf16.msra.mxu0 0
    %423 = vmatprep.subr.bf16.mxu0 0
    %424 = vmatpush1.bf16.msra.mxu0 0
    %425 = vmatprep.subr.bf16.mxu0 0
    %426 = vmatpush1.bf16.msra.mxu0 0
    %427 = vmatprep.subr.bf16.mxu0 0
    %428 = vmatpush1.bf16.msra.mxu0 0
    %429 = vmatprep.subr.bf16.mxu0 %v413
    %430 = vmatpush1.bf16.msra.mxu0 %v410
    %431 = vmatprep.subr.bf16.mxu0 0
    %432 = vmatpush2.bf16.msra.mxu0 0
    %433 = vmatprep.subr.bf16.mxu0 0
    %434 = vmatpush2.bf16.msra.mxu0 0
    %435 = vmatprep.subr.bf16.mxu0 0
    %436 = vmatpush2.bf16.msra.mxu0 0
    %437 = vmatprep.subr.bf16.mxu0 0
    %438 = vmatpush2.bf16.msra.mxu0 0
    %439 = vmatprep.subr.bf16.mxu0 0
    %440 = vmatpush2.bf16.msra.mxu0 0
    %441 = vmatprep.subr.bf16.mxu0 0
    %442 = vmatpush2.bf16.msra.mxu0 0
    %443 = vmatprep.subr.bf16.mxu0 0
    %444 = vmatpush2.bf16.msra.mxu0 0
    %445 = vmatprep.subr.bf16.mxu0 0
    %446 = vmatpush2.bf16.msra.mxu0 0
    %447 = vmatprep.mubr.bf16.mxu0 0
    %448 = vmatmul.mubr.bf16.gmra.mxu0 %v310
    %v449 = vpop.f32.mrf.mxu0
    %v450 = vadd.f32 %v133, %v449
    %v451 = vpop.f32.mrf.mxu0
    %v452 = vadd.f32 %v137, %v451
    %v453 = vpop.f32.mrf.mxu0
    %v454 = vadd.f32 %v133, %v453
    %v455 = vpop.f32.mrf.mxu0
    %v456 = vadd.f32 %v137, %v455
    %457 = vmatprep.mubr.bf16.mxu0 0
    %458 = vmatmul.mubr.bf16.gmra.mxu0 %v313
    %v459 = vpop.f32.mrf.mxu0
    %v460 = vadd.f32 %v133, %v459
    %v461 = vpop.f32.mrf.mxu0
    %v462 = vadd.f32 %v137, %v461
    %v463 = vpop.f32.mrf.mxu0
    %v464 = vadd.f32 %v133, %v463
    %v465 = vpop.f32.mrf.mxu0
    %v466 = vadd.f32 %v137, %v465
    %467 = vmatprep.mubr.bf16.mxu0 0
    %468 = vmatmul.mubr.bf16.gmra.mxu0 %v316
    %v469 = vpop.f32.mrf.mxu0
    %v470 = vadd.f32 %v133, %v469
    %v471 = vpop.f32.mrf.mxu0
    %v472 = vadd.f32 %v137, %v471
    %v473 = vpop.f32.mrf.mxu0
    %v474 = vadd.f32 %v133, %v473
    %v475 = vpop.f32.mrf.mxu0
    %v476 = vadd.f32 %v137, %v475
    %477 = vmatprep.mubr.bf16.mxu0 0
    %478 = vmatmul.mubr.bf16.gmra.mxu0 %v319
    %v479 = vpop.f32.mrf.mxu0
    %v480 = vadd.f32 %v133, %v479
    %v481 = vpop.f32.mrf.mxu0
    %v482 = vadd.f32 %v137, %v481
    %v483 = vpop.f32.mrf.mxu0
    %v484 = vadd.f32 %v133, %v483
    %v485 = vpop.f32.mrf.mxu0
    %v486 = vadd.f32 %v137, %v485
    %487 = vmatprep.mubr.bf16.mxu0 0
    %488 = vmatmul.mubr.bf16.gmra.mxu0 %v322
    %v489 = vpop.f32.mrf.mxu0
    %v490 = vadd.f32 %v133, %v489
    %v491 = vpop.f32.mrf.mxu0
    %v492 = vadd.f32 %v137, %v491
    %v493 = vpop.f32.mrf.mxu0
    %v494 = vadd.f32 %v133, %v493
    %v495 = vpop.f32.mrf.mxu0
    %v496 = vadd.f32 %v137, %v495
    %497 = vmatprep.mubr.bf16.mxu0 0
    %498 = vmatmul.mubr.bf16.gmra.mxu0 %v325
    %v499 = vpop.f32.mrf.mxu0
    %v500 = vadd.f32 %v133, %v499
    %v501 = vpop.f32.mrf.mxu0
    %v502 = vadd.f32 %v137, %v501
    %v503 = vpop.f32.mrf.mxu0
    %v504 = vadd.f32 %v133, %v503
    %v505 = vpop.f32.mrf.mxu0
    %v506 = vadd.f32 %v137, %v505
    %507 = vmatprep.mubr.bf16.mxu0 0
    %508 = vmatmul.mubr.bf16.gmra.mxu0 %v328
    %v509 = vpop.f32.mrf.mxu0
    %v510 = vadd.f32 %v133, %v509
    %v511 = vpop.f32.mrf.mxu0
    %v512 = vadd.f32 %v137, %v511
    %v513 = vpop.f32.mrf.mxu0
    %v514 = vadd.f32 %v133, %v513
    %v515 = vpop.f32.mrf.mxu0
    %v516 = vadd.f32 %v137, %v515
    %517 = vmatprep.mubr.bf16.mxu0 0
    %518 = vmatmul.mubr.bf16.gmra.mxu0 %v331
    %v519 = vpop.f32.mrf.mxu0
    %v520 = vadd.f32 %v133, %v519
    %v521 = vpop.f32.mrf.mxu0
    %v522 = vadd.f32 %v137, %v521
    %v523 = vpop.f32.mrf.mxu0
    %v524 = vadd.f32 %v133, %v523
    %v525 = vpop.f32.mrf.mxu0
    %v526 = vadd.f32 %v137, %v525
    %527 = vmatprep.mubr.bf16.mxu0 0
    %528 = vmatmul.mubr.bf16.gmra.mxu0 %v334
    %v529 = vpop.f32.mrf.mxu0
    %v530 = vadd.f32 %v133, %v529
    %v531 = vpop.f32.mrf.mxu0
    %v532 = vadd.f32 %v137, %v531
    %v533 = vpop.f32.mrf.mxu0
    %v534 = vadd.f32 %v133, %v533
    %v535 = vpop.f32.mrf.mxu0
    %v536 = vadd.f32 %v137, %v535
    %537 = vmatprep.mubr.bf16.mxu0 0
    %538 = vmatmul.mubr.bf16.gmra.mxu0 %v337
    %v539 = vpop.f32.mrf.mxu0
    %v540 = vadd.f32 %v133, %v539
    %v541 = vpop.f32.mrf.mxu0
    %v542 = vadd.f32 %v137, %v541
    %v543 = vpop.f32.mrf.mxu0
    %v544 = vadd.f32 %v133, %v543
    %v545 = vpop.f32.mrf.mxu0
    %v546 = vadd.f32 %v137, %v545
    %547 = vmatprep.mubr.bf16.mxu0 0
    %548 = vmatmul.mubr.bf16.gmra.mxu0 %v340
    %v549 = vpop.f32.mrf.mxu0
    %v550 = vadd.f32 %v133, %v549
    %v551 = vpop.f32.mrf.mxu0
    %v552 = vadd.f32 %v137, %v551
    %v553 = vpop.f32.mrf.mxu0
    %v554 = vadd.f32 %v133, %v553
    %v555 = vpop.f32.mrf.mxu0
    %v556 = vadd.f32 %v137, %v555
    %557 = vmatprep.mubr.bf16.mxu0 0
    %558 = vmatmul.mubr.bf16.gmra.mxu0 %v343
    %v559 = vpop.f32.mrf.mxu0
    %v560 = vadd.f32 %v133, %v559
    %v561 = vpop.f32.mrf.mxu0
    %v562 = vadd.f32 %v137, %v561
    %v563 = vpop.f32.mrf.mxu0
    %v564 = vadd.f32 %v133, %v563
    %v565 = vpop.f32.mrf.mxu0
    %v566 = vadd.f32 %v137, %v565
    %567 = vmatprep.mubr.bf16.mxu0 0
    %568 = vmatmul.mubr.bf16.gmra.mxu0 %v346
    %v569 = vpop.f32.mrf.mxu0
    %v570 = vadd.f32 %v133, %v569
    %v571 = vpop.f32.mrf.mxu0
    %v572 = vadd.f32 %v137, %v571
    %v573 = vpop.f32.mrf.mxu0
    %v574 = vadd.f32 %v133, %v573
    %v575 = vpop.f32.mrf.mxu0
    %v576 = vadd.f32 %v137, %v575
    %577 = vmatprep.mubr.bf16.mxu0 0
    %578 = vmatmul.mubr.bf16.gmra.mxu0 %v349
    %v579 = vpop.f32.mrf.mxu0
    %v580 = vadd.f32 %v133, %v579
    %v581 = vpop.f32.mrf.mxu0
    %v582 = vadd.f32 %v137, %v581
    %v583 = vpop.f32.mrf.mxu0
    %v584 = vadd.f32 %v133, %v583
    %v585 = vpop.f32.mrf.mxu0
    %v586 = vadd.f32 %v137, %v585
    %587 = vmatprep.mubr.bf16.mxu0 0
    %588 = vmatmul.mubr.bf16.gmra.mxu0 %v352
    %v589 = vpop.f32.mrf.mxu0
    %v590 = vadd.f32 %v133, %v589
    %v591 = vpop.f32.mrf.mxu0
    %v592 = vadd.f32 %v137, %v591
    %v593 = vpop.f32.mrf.mxu0
    %v594 = vadd.f32 %v133, %v593
    %v595 = vpop.f32.mrf.mxu0
    %v596 = vadd.f32 %v137, %v595
    %597 = vmatprep.mubr.bf16.mxu0 0
    %598 = vmatmul.mubr.bf16.gmra.mxu0 %v355
    %v599 = vpop.f32.mrf.mxu0
    %v600 = vadd.f32 %v133, %v599
    %v601 = vpop.f32.mrf.mxu0
    %v602 = vadd.f32 %v137, %v601
    %v603 = vpop.f32.mrf.mxu0
    %v604 = vadd.f32 %v133, %v603
    %v605 = vpop.f32.mrf.mxu0
    %v606 = vadd.f32 %v137, %v605
    %607 = vmatprep.mubr.bf16.mxu0 0
    %608 = vmatmul.mubr.bf16.gmra.mxu0 %v358
    %v609 = vpop.f32.mrf.mxu0
    %v610 = vadd.f32 %v133, %v609
    %v611 = vpop.f32.mrf.mxu0
    %v612 = vadd.f32 %v137, %v611
    %v613 = vpop.f32.mrf.mxu0
    %v614 = vadd.f32 %v133, %v613
    %v615 = vpop.f32.mrf.mxu0
    %v616 = vadd.f32 %v137, %v615
    %617 = vmatprep.mubr.bf16.mxu0 0
    %618 = vmatmul.mubr.bf16.gmra.mxu0 %v361
    %v619 = vpop.f32.mrf.mxu0
    %v620 = vadd.f32 %v133, %v619
    %v621 = vpop.f32.mrf.mxu0
    %v622 = vadd.f32 %v137, %v621
    %v623 = vpop.f32.mrf.mxu0
    %v624 = vadd.f32 %v133, %v623
    %v625 = vpop.f32.mrf.mxu0
    %v626 = vadd.f32 %v137, %v625
    %627 = vmatprep.mubr.bf16.mxu0 0
    %628 = vmatmul.mubr.bf16.gmra.mxu0 %v364
    %v629 = vpop.f32.mrf.mxu0
    %v630 = vadd.f32 %v133, %v629
    %v631 = vpop.f32.mrf.mxu0
    %v632 = vadd.f32 %v137, %v631
    %v633 = vpop.f32.mrf.mxu0
    %v634 = vadd.f32 %v133, %v633
    %v635 = vpop.f32.mrf.mxu0
    %v636 = vadd.f32 %v137, %v635
    %637 = vmatprep.mubr.bf16.mxu0 0
    %638 = vmatmul.mubr.bf16.gmra.mxu0 %v367
    %v639 = vpop.f32.mrf.mxu0
    %v640 = vadd.f32 %v133, %v639
    %v641 = vpop.f32.mrf.mxu0
    %v642 = vadd.f32 %v137, %v641
    %v643 = vpop.f32.mrf.mxu0
    %v644 = vadd.f32 %v133, %v643
    %v645 = vpop.f32.mrf.mxu0
    %v646 = vadd.f32 %v137, %v645
    %647 = vmatprep.mubr.bf16.mxu0 0
    %648 = vmatmul.mubr.bf16.gmra.mxu0 %v370
    %v649 = vpop.f32.mrf.mxu0
    %v650 = vadd.f32 %v133, %v649
    %v651 = vpop.f32.mrf.mxu0
    %v652 = vadd.f32 %v137, %v651
    %v653 = vpop.f32.mrf.mxu0
    %v654 = vadd.f32 %v133, %v653
    %v655 = vpop.f32.mrf.mxu0
    %v656 = vadd.f32 %v137, %v655
    %657 = vmatprep.mubr.bf16.mxu0 0
    %658 = vmatmul.mubr.bf16.gmra.mxu0 %v373
    %v659 = vpop.f32.mrf.mxu0
    %v660 = vadd.f32 %v133, %v659
    %v661 = vpop.f32.mrf.mxu0
    %v662 = vadd.f32 %v137, %v661
    %v663 = vpop.f32.mrf.mxu0
    %v664 = vadd.f32 %v133, %v663
    %v665 = vpop.f32.mrf.mxu0
    %v666 = vadd.f32 %v137, %v665
    %667 = vmatprep.mubr.bf16.mxu0 0
    %668 = vmatmul.mubr.bf16.gmra.mxu0 %v376
    %v669 = vpop.f32.mrf.mxu0
    %v670 = vadd.f32 %v133, %v669
    %v671 = vpop.f32.mrf.mxu0
    %v672 = vadd.f32 %v137, %v671
    %v673 = vpop.f32.mrf.mxu0
    %v674 = vadd.f32 %v133, %v673
    %v675 = vpop.f32.mrf.mxu0
    %v676 = vadd.f32 %v137, %v675
    %677 = vmatprep.mubr.bf16.mxu0 0
    %678 = vmatmul.mubr.bf16.gmra.mxu0 %v379
    %v679 = vpop.f32.mrf.mxu0
    %v680 = vadd.f32 %v133, %v679
    %v681 = vpop.f32.mrf.mxu0
    %v682 = vadd.f32 %v137, %v681
    %v683 = vpop.f32.mrf.mxu0
    %v684 = vadd.f32 %v133, %v683
    %v685 = vpop.f32.mrf.mxu0
    %v686 = vadd.f32 %v137, %v685
    %687 = vmatprep.mubr.bf16.mxu0 0
    %688 = vmatmul.mubr.bf16.gmra.mxu0 %v382
    %v689 = vpop.f32.mrf.mxu0
    %v690 = vadd.f32 %v133, %v689
    %v691 = vpop.f32.mrf.mxu0
    %v692 = vadd.f32 %v137, %v691
    %v693 = vpop.f32.mrf.mxu0
    %v694 = vadd.f32 %v133, %v693
    %v695 = vpop.f32.mrf.mxu0
    %v696 = vadd.f32 %v137, %v695
    %697 = vmatprep.mubr.bf16.mxu0 0
    %698 = vmatmul.mubr.bf16.gmra.mxu0 %v385
    %v699 = vpop.f32.mrf.mxu0
    %v700 = vadd.f32 %v133, %v699
    %v701 = vpop.f32.mrf.mxu0
    %v702 = vadd.f32 %v137, %v701
    %v703 = vpop.f32.mrf.mxu0
    %v704 = vadd.f32 %v133, %v703
    %v705 = vpop.f32.mrf.mxu0
    %v706 = vadd.f32 %v137, %v705
    %707 = vmatprep.mubr.bf16.mxu0 0
    %708 = vmatmul.mubr.bf16.gmra.mxu0 %v388
    %v709 = vpop.f32.mrf.mxu0
    %v710 = vadd.f32 %v133, %v709
    %v711 = vpop.f32.mrf.mxu0
    %v712 = vadd.f32 %v137, %v711
    %v713 = vpop.f32.mrf.mxu0
    %v714 = vadd.f32 %v133, %v713
    %v715 = vpop.f32.mrf.mxu0
    %v716 = vadd.f32 %v137, %v715
    %717 = vmatprep.mubr.bf16.mxu0 0
    %718 = vmatmul.mubr.bf16.gmra.mxu0 %v391
    %v719 = vpop.f32.mrf.mxu0
    %v720 = vadd.f32 %v133, %v719
    %v721 = vpop.f32.mrf.mxu0
    %v722 = vadd.f32 %v137, %v721
    %v723 = vpop.f32.mrf.mxu0
    %v724 = vadd.f32 %v133, %v723
    %v725 = vpop.f32.mrf.mxu0
    %v726 = vadd.f32 %v137, %v725
    %727 = vmatprep.mubr.bf16.mxu0 0
    %728 = vmatmul.mubr.bf16.gmra.mxu0 %v394
    %v729 = vpop.f32.mrf.mxu0
    %v730 = vadd.f32 %v133, %v729
    %v731 = vpop.f32.mrf.mxu0
    %v732 = vadd.f32 %v137, %v731
    %v733 = vpop.f32.mrf.mxu0
    %v734 = vadd.f32 %v133, %v733
    %v735 = vpop.f32.mrf.mxu0
    %v736 = vadd.f32 %v137, %v735
    %737 = vmatprep.mubr.bf16.mxu0 0
    %738 = vmatmul.mubr.bf16.gmra.mxu0 %v397
    %v739 = vpop.f32.mrf.mxu0
    %v740 = vadd.f32 %v133, %v739
    %v741 = vpop.f32.mrf.mxu0
    %v742 = vadd.f32 %v137, %v741
    %v743 = vpop.f32.mrf.mxu0
    %v744 = vadd.f32 %v133, %v743
    %v745 = vpop.f32.mrf.mxu0
    %v746 = vadd.f32 %v137, %v745
    %747 = vmatprep.mubr.bf16.mxu0 0
    %748 = vmatmul.mubr.bf16.gmra.mxu0 %v400
    %v749 = vpop.f32.mrf.mxu0
    %v750 = vadd.f32 %v133, %v749
    %v751 = vpop.f32.mrf.mxu0
    %v752 = vadd.f32 %v137, %v751
    %v753 = vpop.f32.mrf.mxu0
    %v754 = vadd.f32 %v133, %v753
    %v755 = vpop.f32.mrf.mxu0
    %v756 = vadd.f32 %v137, %v755
    %757 = vmatprep.mubr.bf16.mxu0 0
    %758 = vmatmul.mubr.bf16.gmra.mxu0 %v403
    %v759 = vpop.f32.mrf.mxu0
    %v760 = vadd.f32 %v133, %v759
    %v761 = vpop.f32.mrf.mxu0
    %v762 = vadd.f32 %v137, %v761
    %v763 = vpop.f32.mrf.mxu0
    %v764 = vadd.f32 %v133, %v763
    %v765 = vpop.f32.mrf.mxu0
    %v766 = vadd.f32 %v137, %v765
    %767 = vdwg.mxu0
    %v768 = vmax.f32 %v450, 0.0
    %v769 = vmax.f32 %v452, 0.0
    %v770 = vmax.f32 %v454, 0.0
    %v771 = vmax.f32 %v456, 0.0
    %v772 = vmax.f32 %v460, 0.0
    %v773 = vmax.f32 %v462, 0.0
    %v774 = vmax.f32 %v464, 0.0
    %v775 = vmax.f32 %v466, 0.0
    %v776 = vmax.f32 %v470, 0.0
    %v777 = vmax.f32 %v472, 0.0
    %v778 = vmax.f32 %v474, 0.0
    %v779 = vmax.f32 %v476, 0.0
    %v780 = vmax.f32 %v480, 0.0
    %v781 = vmax.f32 %v482, 0.0
    %v782 = vmax.f32 %v484, 0.0
    %v783 = vmax.f32 %v486, 0.0
    %v784 = vmax.f32 %v490, 0.0
    %v785 = vmax.f32 %v492, 0.0
    %v786 = vmax.f32 %v494, 0.0
    %v787 = vmax.f32 %v496, 0.0
    %v788 = vmax.f32 %v500, 0.0
    %v789 = vmax.f32 %v502, 0.0
    %v790 = vmax.f32 %v504, 0.0
    %v791 = vmax.f32 %v506, 0.0
    %v792 = vmax.f32 %v510, 0.0
    %v793 = vmax.f32 %v512, 0.0
    %v794 = vmax.f32 %v514, 0.0
    %v795 = vmax.f32 %v516, 0.0
    %v796 = vmax.f32 %v520, 0.0
    %v797 = vmax.f32 %v522, 0.0
    %v798 = vmax.f32 %v524, 0.0
    %v799 = vmax.f32 %v526, 0.0
    %v800 = vmax.f32 %v530, 0.0
    %v801 = vmax.f32 %v532, 0.0
    %v802 = vmax.f32 %v534, 0.0
    %v803 = vmax.f32 %v536, 0.0
    %v804 = vmax.f32 %v540, 0.0
    %v805 = vmax.f32 %v542, 0.0
    %v806 = vmax.f32 %v544, 0.0
    %v807 = vmax.f32 %v546, 0.0
    %v808 = vmax.f32 %v550, 0.0
    %v809 = vmax.f32 %v552, 0.0
    %v810 = vmax.f32 %v554, 0.0
    %v811 = vmax.f32 %v556, 0.0
    %v812 = vmax.f32 %v560, 0.0
    %v813 = vmax.f32 %v562, 0.0
    %v814 = vmax.f32 %v564, 0.0
    %v815 = vmax.f32 %v566, 0.0
    %v816 = vmax.f32 %v570, 0.0
    %v817 = vmax.f32 %v572, 0.0
    %v818 = vmax.f32 %v574, 0.0
    %v819 = vmax.f32 %v576, 0.0
    %v820 = vmax.f32 %v580, 0.0
    %v821 = vmax.f32 %v582, 0.0
    %v822 = vmax.f32 %v584, 0.0
    %v823 = vmax.f32 %v586, 0.0
    %v824 = vmax.f32 %v590, 0.0
    %v825 = vmax.f32 %v592, 0.0
    %v826 = vmax.f32 %v594, 0.0
    %v827 = vmax.f32 %v596, 0.0
    %v828 = vmax.f32 %v600, 0.0
    %v829 = vmax.f32 %v602, 0.0
    %v830 = vmax.f32 %v604, 0.0
    %v831 = vmax.f32 %v606, 0.0
    %v832 = vmax.f32 %v610, 0.0
    %v833 = vmax.f32 %v612, 0.0
    %v834 = vmax.f32 %v614, 0.0
    %v835 = vmax.f32 %v616, 0.0
    %v836 = vmax.f32 %v620, 0.0
    %v837 = vmax.f32 %v622, 0.0
    %v838 = vmax.f32 %v624, 0.0
    %v839 = vmax.f32 %v626, 0.0
    %v840 = vmax.f32 %v630, 0.0
    %v841 = vmax.f32 %v632, 0.0
    %v842 = vmax.f32 %v634, 0.0
    %v843 = vmax.f32 %v636, 0.0
    %v844 = vmax.f32 %v640, 0.0
    %v845 = vmax.f32 %v642, 0.0
    %v846 = vmax.f32 %v644, 0.0
    %v847 = vmax.f32 %v646, 0.0
    %v848 = vmax.f32 %v650, 0.0
    %v849 = vmax.f32 %v652, 0.0
    %v850 = vmax.f32 %v654, 0.0
    %v851 = vmax.f32 %v656, 0.0
    %v852 = vmax.f32 %v660, 0.0
    %v853 = vmax.f32 %v662, 0.0
    %v854 = vmax.f32 %v664, 0.0
    %v855 = vmax.f32 %v666, 0.0
    %v856 = vmax.f32 %v670, 0.0
    %v857 = vmax.f32 %v672, 0.0
    %v858 = vmax.f32 %v674, 0.0
    %v859 = vmax.f32 %v676, 0.0
    %v860 = vmax.f32 %v680, 0.0
    %v861 = vmax.f32 %v682, 0.0
    %v862 = vmax.f32 %v684, 0.0
    %v863 = vmax.f32 %v686, 0.0
    %v864 = vmax.f32 %v690, 0.0
    %v865 = vmax.f32 %v692, 0.0
    %v866 = vmax.f32 %v694, 0.0
    %v867 = vmax.f32 %v696, 0.0
    %v868 = vmax.f32 %v700, 0.0
    %v869 = vmax.f32 %v702, 0.0
    %v870 = vmax.f32 %v704, 0.0
    %v871 = vmax.f32 %v706, 0.0
    %v872 = vmax.f32 %v710, 0.0
    %v873 = vmax.f32 %v712, 0.0
    %v874 = vmax.f32 %v714, 0.0
    %v875 = vmax.f32 %v716, 0.0
    %v876 = vmax.f32 %v720, 0.0
    %v877 = vmax.f32 %v722, 0.0
    %v878 = vmax.f32 %v724, 0.0
    %v879 = vmax.f32 %v726, 0.0
    %v880 = vmax.f32 %v730, 0.0
    %v881 = vmax.f32 %v732, 0.0
    %v882 = vmax.f32 %v734, 0.0
    %v883 = vmax.f32 %v736, 0.0
    %v884 = vmax.f32 %v740, 0.0
    %v885 = vmax.f32 %v742, 0.0
    %v886 = vmax.f32 %v744, 0.0
    %v887 = vmax.f32 %v746, 0.0
    %v888 = vmax.f32 %v750, 0.0
    %v889 = vmax.f32 %v752, 0.0
    %v890 = vmax.f32 %v754, 0.0
    %v891 = vmax.f32 %v756, 0.0
    %v892 = vmax.f32 %v760, 0.0
    %v893 = vmax.f32 %v762, 0.0
    %v894 = vmax.f32 %v764, 0.0
    %v895 = vmax.f32 %v766, 0.0
    %v896 = vld [vmem:[%s3] sm:$0x77]
    %s897 = scalar_lea.vmem %s6, 1
    %v898 = vld [vmem:[%s897] ss:$8 sm:$0x3]
    %v899 = vld [vmem:[%s1] sm:$0xff]
    %v900 = vld [vmem:[%s1 + $0x8] sm:$0x3]
    %v902 = vlaneseq
    %v903 = vshrl.u32 %v902, 7
    %v904 = vsub.s32 0, %v903
    %v905 = vrot.slane %v898, %v904
    %v906 = vlaneseq
    %v907 = vshrl.u32 %v906, 7
    %v908 = vsub.s32 1, %v907
    %v909 = vrot.slane %v898, %v908
    %v913 = vcombine.high %v896, %v896
    %vm914 = vcmask 23552
    %v916 = vsel %vm914, %v899, 0
    %v919 = vsel %vm914, %v900, 0
    %vm921 = vcmask 1042432
    %v922 = vsel %vm921, %v896, 0
    %v924 = vsel %vm921, %v913, 0
    %926 = vmatprep.subr.mxu0 0.0
    %927 = vmatpush1.msra.mxu0 0.0
    %928 = vmatprep.subr.mxu0 0.0
    %929 = vmatpush1.msra.mxu0 0.0
    %930 = vmatprep.subr.mxu0 0.0
    %931 = vmatpush1.msra.mxu0 0.0
    %932 = vmatprep.subr.mxu0 0.0
    %933 = vmatpush1.msra.mxu0 0.0
    %934 = vmatprep.subr.mxu0 0.0
    %935 = vmatpush1.msra.mxu0 0.0
    %936 = vmatprep.subr.mxu0 0.0
    %937 = vmatpush1.msra.mxu0 0.0
    %938 = vmatprep.subr.mxu0 0.0
    %939 = vmatpush1.msra.mxu0 0.0
    %940 = vmatprep.subr.mxu0 0.0
    %941 = vmatpush1.msra.mxu0 0.0
    %942 = vmatprep.subr.mxu0 0.0
    %943 = vmatpush1.msra.mxu0 0.0
    %944 = vmatprep.subr.mxu0 0.0
    %945 = vmatpush1.msra.mxu0 0.0
    %946 = vmatprep.subr.mxu0 0.0
    %947 = vmatpush1.msra.mxu0 0.0
    %948 = vmatprep.subr.mxu0 0.0
    %949 = vmatpush1.msra.mxu0 0.0
    %950 = vmatprep.subr.mxu0 0.0
    %951 = vmatpush1.msra.mxu0 0.0
    %952 = vmatprep.subr.mxu0 0.0
    %953 = vmatpush1.msra.mxu0 0.0
    %954 = vmatprep.subr.mxu0 0.0
    %955 = vmatpush1.msra.mxu0 0.0
    %956 = vmatprep.subr.mxu0 %v924
    %957 = vmatpush1.msra.mxu0 %v922
    %958 = vmatprep.subr.mxu0 0.0
    %959 = vmatpush2.msra.mxu0 0.0
    %960 = vmatprep.subr.mxu0 0.0
    %961 = vmatpush2.msra.mxu0 0.0
    %962 = vmatprep.subr.mxu0 0.0
    %963 = vmatpush2.msra.mxu0 0.0
    %964 = vmatprep.subr.mxu0 0.0
    %965 = vmatpush2.msra.mxu0 0.0
    %966 = vmatprep.subr.mxu0 0.0
    %967 = vmatpush2.msra.mxu0 0.0
    %968 = vmatprep.subr.mxu0 0.0
    %969 = vmatpush2.msra.mxu0 0.0
    %970 = vmatprep.subr.mxu0 0.0
    %971 = vmatpush2.msra.mxu0 0.0
    %972 = vmatprep.subr.mxu0 0.0
    %973 = vmatpush2.msra.mxu0 0.0
    %974 = vmatprep.subr.mxu0 0.0
    %975 = vmatpush2.msra.mxu0 0.0
    %976 = vmatprep.subr.mxu0 0.0
    %977 = vmatpush2.msra.mxu0 0.0
    %978 = vmatprep.subr.mxu0 0.0
    %979 = vmatpush2.msra.mxu0 0.0
    %980 = vmatprep.subr.mxu0 0.0
    %981 = vmatpush2.msra.mxu0 0.0
    %982 = vmatprep.subr.mxu0 0.0
    %983 = vmatpush2.msra.mxu0 0.0
    %984 = vmatprep.subr.mxu0 0.0
    %985 = vmatpush2.msra.mxu0 0.0
    %986 = vmatprep.subr.mxu0 0.0
    %987 = vmatpush2.msra.mxu0 0.0
    %988 = vmatprep.subr.mxu0 0.0
    %989 = vmatpush2.msra.mxu0 0.0
    %990 = vmatprep.mubr.f32.mxu0 0.0
    %991 = vmatmul.mubr.f32.gmra.mxu0 %v916
    %v992 = vpop.f32.mrf.mxu0
    %v993 = vadd.f32 %v905, %v992
    %v994 = vpop.f32.mrf.mxu0
    %v995 = vadd.f32 %v909, %v994
    %996 = vmatprep.mubr.f32.mxu0 0.0
    %997 = vmatmul.mubr.f32.gmra.mxu0 %v919
    %v998 = vpop.f32.mrf.mxu0
    %v999 = vadd.f32 %v905, %v998
    %v1000 = vpop.f32.mrf.mxu0
    %v1001 = vadd.f32 %v909, %v1000
    %1002 = vdwg.mxu0
    %v1003 = vmax.f32 %v993, 0.0
    %v1004 = vmax.f32 %v995, 0.0
    %v1005 = vmax.f32 %v999, 0.0
    %v1006 = vmax.f32 %v1001, 0.0
    %v1007 = vld [vmem:[%s1 + $0xa] sm:$0x3]
    %v1009 = vsel %vm914, %v1007, 0
    %1011 = vmatprep.subr.mxu0 0.0
    %1012 = vmatpush1.msra.mxu0 0.0
    %1013 = vmatprep.subr.mxu0 0.0
    %1014 = vmatpush1.msra.mxu0 0.0
    %1015 = vmatprep.subr.mxu0 0.0
    %1016 = vmatpush1.msra.mxu0 0.0
    %1017 = vmatprep.subr.mxu0 0.0
    %1018 = vmatpush1.msra.mxu0 0.0
    %1019 = vmatprep.subr.mxu0 0.0
    %1020 = vmatpush1.msra.mxu0 0.0
    %1021 = vmatprep.subr.mxu0 0.0
    %1022 = vmatpush1.msra.mxu0 0.0
    %1023 = vmatprep.subr.mxu0 0.0
    %1024 = vmatpush1.msra.mxu0 0.0
    %1025 = vmatprep.subr.mxu0 0.0
    %1026 = vmatpush1.msra.mxu0 0.0
    %1027 = vmatprep.subr.mxu0 0.0
    %1028 = vmatpush1.msra.mxu0 0.0
    %1029 = vmatprep.subr.mxu0 0.0
    %1030 = vmatpush1.msra.mxu0 0.0
    %1031 = vmatprep.subr.mxu0 0.0
    %1032 = vmatpush1.msra.mxu0 0.0
    %1033 = vmatprep.subr.mxu0 0.0
    %1034 = vmatpush1.msra.mxu0 0.0
    %1035 = vmatprep.subr.mxu0 0.0
    %1036 = vmatpush1.msra.mxu0 0.0
    %1037 = vmatprep.subr.mxu0 0.0
    %1038 = vmatpush1.msra.mxu0 0.0
    %1039 = vmatprep.subr.mxu0 0.0
    %1040 = vmatpush1.msra.mxu0 0.0
    %1041 = vmatprep.subr.mxu0 %v924
    %1042 = vmatpush1.msra.mxu0 %v922
    %1043 = vmatprep.subr.mxu0 0.0
    %1044 = vmatpush2.msra.mxu0 0.0
    %1045 = vmatprep.subr.mxu0 0.0
    %1046 = vmatpush2.msra.mxu0 0.0
    %1047 = vmatprep.subr.mxu0 0.0
    %1048 = vmatpush2.msra.mxu0 0.0
    %1049 = vmatprep.subr.mxu0 0.0
    %1050 = vmatpush2.msra.mxu0 0.0
    %1051 = vmatprep.subr.mxu0 0.0
    %1052 = vmatpush2.msra.mxu0 0.0
    %1053 = vmatprep.subr.mxu0 0.0
    %1054 = vmatpush2.msra.mxu0 0.0
    %1055 = vmatprep.subr.mxu0 0.0
    %1056 = vmatpush2.msra.mxu0 0.0
    %1057 = vmatprep.subr.mxu0 0.0
    %1058 = vmatpush2.msra.mxu0 0.0
    %1059 = vmatprep.subr.mxu0 0.0
    %1060 = vmatpush2.msra.mxu0 0.0
    %1061 = vmatprep.subr.mxu0 0.0
    %1062 = vmatpush2.msra.mxu0 0.0
    %1063 = vmatprep.subr.mxu0 0.0
    %1064 = vmatpush2.msra.mxu0 0.0
    %1065 = vmatprep.subr.mxu0 0.0
    %1066 = vmatpush2.msra.mxu0 0.0
    %1067 = vmatprep.subr.mxu0 0.0
    %1068 = vmatpush2.msra.mxu0 0.0
    %1069 = vmatprep.subr.mxu0 0.0
    %1070 = vmatpush2.msra.mxu0 0.0
    %1071 = vmatprep.subr.mxu0 0.0
    %1072 = vmatpush2.msra.mxu0 0.0
    %1073 = vmatprep.subr.mxu0 0.0
    %1074 = vmatpush2.msra.mxu0 0.0
    %1075 = vmatprep.mubr.f32.mxu0 0.0
    %1076 = vmatmul.mubr.f32.gmra.mxu0 %v1009
    %v1077 = vpop.f32.mrf.mxu0
    %v1078 = vadd.f32 %v905, %v1077
    %v1079 = vpop.f32.mrf.mxu0
    %v1080 = vadd.f32 %v909, %v1079
    %1081 = vdwg.mxu0
    %v1082 = vmax.f32 %v1078, 0.0
    %v1083 = vmax.f32 %v1080, 0.0
    %v1084 = vld [vmem:[%s4] sm:$0xff]
    %v1085 = vld [vmem:[%s4 + $0x8] sm:$0xff]
    %v1086 = vld [vmem:[%s4 + $0x30] sm:$0xff]
    %v1087 = vld [vmem:[%s4 + $0x38] sm:$0xff]
    %v1088 = vld [vmem:[%s4 + $0x60] sm:$0xff]
    %v1089 = vld [vmem:[%s4 + $0x68] sm:$0xff]
    %v1090 = vld [vmem:[%s4 + $0x90] sm:$0xff]
    %v1091 = vld [vmem:[%s4 + $0x98] sm:$0xff]
    %v1092 = vld [vmem:[%s4 + $0xc0] sm:$0xff]
    %v1093 = vld [vmem:[%s4 + $0xc8] sm:$0xff]
    %v1094 = vld [vmem:[%s4 + $0xf0] sm:$0xff]
    %v1095 = vld [vmem:[%s4 + $0xf8] sm:$0xff]
    %v1096 = vld [vmem:[%s4 + $0x120] sm:$0xff]
    %v1097 = vld [vmem:[%s4 + $0x128] sm:$0xff]
    %v1098 = vld [vmem:[%s4 + $0x150] sm:$0xff]
    %v1099 = vld [vmem:[%s4 + $0x158] sm:$0xff]
    %v1100 = vld [vmem:[%s4 + $0x180] sm:$0xff]
    %v1101 = vld [vmem:[%s4 + $0x188] sm:$0xff]
    %v1102 = vld [vmem:[%s4 + $0x1b0] sm:$0xff]
    %v1103 = vld [vmem:[%s4 + $0x1b8] sm:$0xff]
    %v1104 = vld [vmem:[%s4 + $0x1e0] sm:$0xff]
    %v1105 = vld [vmem:[%s4 + $0x1e8] sm:$0xff]
    %v1106 = vld [vmem:[%s4 + $0x210] sm:$0xff]
    %v1107 = vld [vmem:[%s4 + $0x218] sm:$0xff]
    %v1108 = vld [vmem:[%s4 + $0x240] sm:$0xff]
    %v1109 = vld [vmem:[%s4 + $0x248] sm:$0xff]
    %v1110 = vld [vmem:[%s4 + $0x270] sm:$0xff]
    %v1111 = vld [vmem:[%s4 + $0x278] sm:$0xff]
    %v1112 = vld [vmem:[%s4 + $0x2a0] sm:$0xff]
    %v1113 = vld [vmem:[%s4 + $0x2a8] sm:$0xff]
    %v1114 = vld [vmem:[%s4 + $0x2d0] sm:$0xff]
    %v1115 = vld [vmem:[%s4 + $0x2d8] sm:$0xff]
    %v1116 = vld [vmem:[%s4 + $0x300] sm:$0xff]
    %v1117 = vld [vmem:[%s4 + $0x308] sm:$0xff]
    %v1118 = vld [vmem:[%s4 + $0x330] sm:$0xff]
    %v1119 = vld [vmem:[%s4 + $0x338] sm:$0xff]
    %v1120 = vld [vmem:[%s4 + $0x360] sm:$0xff]
    %v1121 = vld [vmem:[%s4 + $0x368] sm:$0xff]
    %v1122 = vld [vmem:[%s4 + $0x390] sm:$0xff]
    %v1123 = vld [vmem:[%s4 + $0x398] sm:$0xff]
    %v1124 = vld [vmem:[%s4 + $0x3c0] sm:$0xff]
    %v1125 = vld [vmem:[%s4 + $0x3c8] sm:$0xff]
    %v1126 = vld [vmem:[%s4 + $0x3f0] sm:$0xff]
    %v1127 = vld [vmem:[%s4 + $0x3f8] sm:$0xff]
    %v1128 = vld [vmem:[%s4 + $0x420] sm:$0xff]
    %v1129 = vld [vmem:[%s4 + $0x428] sm:$0xff]
    %v1130 = vld [vmem:[%s4 + $0x450] sm:$0xff]
    %v1131 = vld [vmem:[%s4 + $0x458] sm:$0xff]
    %v1132 = vld [vmem:[%s4 + $0x480] sm:$0xff]
    %v1133 = vld [vmem:[%s4 + $0x488] sm:$0xff]
    %v1134 = vld [vmem:[%s4 + $0x4b0] sm:$0xff]
    %v1135 = vld [vmem:[%s4 + $0x4b8] sm:$0xff]
    %v1136 = vld [vmem:[%s4 + $0x4e0] sm:$0xff]
    %v1137 = vld [vmem:[%s4 + $0x4e8] sm:$0xff]
    %v1138 = vld [vmem:[%s4 + $0x510] sm:$0xff]
    %v1139 = vld [vmem:[%s4 + $0x518] sm:$0xff]
    %v1140 = vld [vmem:[%s4 + $0x540] sm:$0xff]
    %v1141 = vld [vmem:[%s4 + $0x548] sm:$0xff]
    %v1142 = vld [vmem:[%s4 + $0x570] sm:$0xff]
    %v1143 = vld [vmem:[%s4 + $0x578] sm:$0xff]
    %v1144 = vld [vmem:[%s4 + $0x5a0] sm:$0xff]
    %v1145 = vld [vmem:[%s4 + $0x5a8] sm:$0xff]
    %v1146 = vld [vmem:[%s4 + $0x5d0] sm:$0xff]
    %v1147 = vld [vmem:[%s4 + $0x5d8] sm:$0xff]
    %s1148 = scalar_lea.vmem %s6, 2
    %v1149 = vld [vmem:[%s1148] ss:$8 sm:$0x3]
    %v1151 = vlaneseq
    %v1152 = vshrl.u32 %v1151, 7
    %v1153 = vsub.s32 0, %v1152
    %v1154 = vrot.slane %v1149, %v1153
    %v1155 = vlaneseq
    %v1156 = vshrl.u32 %v1155, 7
    %v1157 = vsub.s32 1, %v1156
    %v1158 = vrot.slane %v1149, %v1157
    %1161 = vmatprep.subr.mxu0 %v1115
    %1162 = vmatpush1.msra.mxu0 %v1114
    %1163 = vmatprep.subr.mxu0 %v1113
    %1164 = vmatpush1.msra.mxu0 %v1112
    %1165 = vmatprep.subr.mxu0 %v1111
    %1166 = vmatpush1.msra.mxu0 %v1110
    %1167 = vmatprep.subr.mxu0 %v1109
    %1168 = vmatpush1.msra.mxu0 %v1108
    %1169 = vmatprep.subr.mxu0 %v1107
    %1170 = vmatpush1.msra.mxu0 %v1106
    %1171 = vmatprep.subr.mxu0 %v1105
    %1172 = vmatpush1.msra.mxu0 %v1104
    %1173 = vmatprep.subr.mxu0 %v1103
    %1174 = vmatpush1.msra.mxu0 %v1102
    %1175 = vmatprep.subr.mxu0 %v1101
    %1176 = vmatpush1.msra.mxu0 %v1100
    %1177 = vmatprep.subr.mxu0 %v1099
    %1178 = vmatpush1.msra.mxu0 %v1098
    %1179 = vmatprep.subr.mxu0 %v1097
    %1180 = vmatpush1.msra.mxu0 %v1096
    %1181 = vmatprep.subr.mxu0 %v1095
    %1182 = vmatpush1.msra.mxu0 %v1094
    %1183 = vmatprep.subr.mxu0 %v1093
    %1184 = vmatpush1.msra.mxu0 %v1092
    %1185 = vmatprep.subr.mxu0 %v1091
    %1186 = vmatpush1.msra.mxu0 %v1090
    %1187 = vmatprep.subr.mxu0 %v1089
    %1188 = vmatpush1.msra.mxu0 %v1088
    %1189 = vmatprep.subr.mxu0 %v1087
    %1190 = vmatpush1.msra.mxu0 %v1086
    %1191 = vmatprep.subr.mxu0 %v1085
    %1192 = vmatpush1.msra.mxu0 %v1084
    %1193 = vmatprep.subr.mxu0 %v1147
    %1194 = vmatpush2.msra.mxu0 %v1146
    %1195 = vmatprep.subr.mxu0 %v1145
    %1196 = vmatpush2.msra.mxu0 %v1144
    %1197 = vmatprep.subr.mxu0 %v1143
    %1198 = vmatpush2.msra.mxu0 %v1142
    %1199 = vmatprep.subr.mxu0 %v1141
    %1200 = vmatpush2.msra.mxu0 %v1140
    %1201 = vmatprep.subr.mxu0 %v1139
    %1202 = vmatpush2.msra.mxu0 %v1138
    %1203 = vmatprep.subr.mxu0 %v1137
    %1204 = vmatpush2.msra.mxu0 %v1136
    %1205 = vmatprep.subr.mxu0 %v1135
    %1206 = vmatpush2.msra.mxu0 %v1134
    %1207 = vmatprep.subr.mxu0 %v1133
    %1208 = vmatpush2.msra.mxu0 %v1132
    %1209 = vmatprep.subr.mxu0 %v1131
    %1210 = vmatpush2.msra.mxu0 %v1130
    %1211 = vmatprep.subr.mxu0 %v1129
    %1212 = vmatpush2.msra.mxu0 %v1128
    %1213 = vmatprep.subr.mxu0 %v1127
    %1214 = vmatpush2.msra.mxu0 %v1126
    %1215 = vmatprep.subr.mxu0 %v1125
    %1216 = vmatpush2.msra.mxu0 %v1124
    %1217 = vmatprep.subr.mxu0 %v1123
    %1218 = vmatpush2.msra.mxu0 %v1122
    %1219 = vmatprep.subr.mxu0 %v1121
    %1220 = vmatpush2.msra.mxu0 %v1120
    %1221 = vmatprep.subr.mxu0 %v1119
    %1222 = vmatpush2.msra.mxu0 %v1118
    %1223 = vmatprep.subr.mxu0 %v1117
    %1224 = vmatpush2.msra.mxu0 %v1116
    %1225 = vmatprep.mubr.f32.mxu0 %v1004
    %1226 = vmatmul.mubr.f32.gmra.mxu0 %v1003
    %v1227 = vpop.f32.mrf.mxu0
    %v1228 = vadd.f32 %v1154, %v1227
    %v1229 = vpop.f32.mrf.mxu0
    %v1230 = vadd.f32 %v1158, %v1229
    %1231 = vmatprep.mubr.f32.mxu0 %v1006
    %1232 = vmatmul.mubr.f32.gmra.mxu0 %v1005
    %v1233 = vpop.f32.mrf.mxu0
    %v1234 = vadd.f32 %v1154, %v1233
    %v1235 = vpop.f32.mrf.mxu0
    %v1236 = vadd.f32 %v1158, %v1235
    %1237 = vdwg.mxu0
    %v1238 = vmax.f32 %v1228, 0.0
    %v1239 = vmax.f32 %v1230, 0.0
    %v1240 = vmax.f32 %v1234, 0.0
    %v1241 = vmax.f32 %v1236, 0.0
    %v1242 = vld [vmem:[%s4 + $0x20] sm:$0xff]
    %v1243 = vld [vmem:[%s4 + $0x50] sm:$0xff]
    %v1244 = vld [vmem:[%s4 + $0x80] sm:$0xff]
    %v1245 = vld [vmem:[%s4 + $0xb0] sm:$0xff]
    %v1246 = vld [vmem:[%s4 + $0xe0] sm:$0xff]
    %v1247 = vld [vmem:[%s4 + $0x110] sm:$0xff]
    %v1248 = vld [vmem:[%s4 + $0x140] sm:$0xff]
    %v1249 = vld [vmem:[%s4 + $0x170] sm:$0xff]
    %v1250 = vld [vmem:[%s4 + $0x1a0] sm:$0xff]
    %v1251 = vld [vmem:[%s4 + $0x1d0] sm:$0xff]
    %v1252 = vld [vmem:[%s4 + $0x200] sm:$0xff]
    %v1253 = vld [vmem:[%s4 + $0x230] sm:$0xff]
    %v1254 = vld [vmem:[%s4 + $0x260] sm:$0xff]
    %v1255 = vld [vmem:[%s4 + $0x290] sm:$0xff]
    %v1256 = vld [vmem:[%s4 + $0x2c0] sm:$0xff]
    %v1257 = vld [vmem:[%s4 + $0x2f0] sm:$0xff]
    %v1258 = vld [vmem:[%s4 + $0x320] sm:$0xff]
    %v1259 = vld [vmem:[%s4 + $0x350] sm:$0xff]
    %v1260 = vld [vmem:[%s4 + $0x380] sm:$0xff]
    %v1261 = vld [vmem:[%s4 + $0x3b0] sm:$0xff]
    %v1262 = vld [vmem:[%s4 + $0x3e0] sm:$0xff]
    %v1263 = vld [vmem:[%s4 + $0x410] sm:$0xff]
    %v1264 = vld [vmem:[%s4 + $0x440] sm:$0xff]
    %v1265 = vld [vmem:[%s4 + $0x470] sm:$0xff]
    %v1266 = vld [vmem:[%s4 + $0x4a0] sm:$0xff]
    %v1267 = vld [vmem:[%s4 + $0x4d0] sm:$0xff]
    %v1268 = vld [vmem:[%s4 + $0x500] sm:$0xff]
    %v1269 = vld [vmem:[%s4 + $0x530] sm:$0xff]
    %v1270 = vld [vmem:[%s4 + $0x560] sm:$0xff]
    %v1271 = vld [vmem:[%s4 + $0x590] sm:$0xff]
    %v1272 = vld [vmem:[%s4 + $0x5c0] sm:$0xff]
    %v1273 = vld [vmem:[%s4 + $0x5f0] sm:$0xff]
    %v1274 = vld [vmem:[%s6 + $0x3] ss:$0 sm:$0xff]
    %1275 = vmatprep.subr.mxu0 0.0
    %1276 = vmatpush1.msra.mxu0 %v1257
    %1277 = vmatprep.subr.mxu0 0.0
    %1278 = vmatpush1.msra.mxu0 %v1256
    %1279 = vmatprep.subr.mxu0 0.0
    %1280 = vmatpush1.msra.mxu0 %v1255
    %1281 = vmatprep.subr.mxu0 0.0
    %1282 = vmatpush1.msra.mxu0 %v1254
    %1283 = vmatprep.subr.mxu0 0.0
    %1284 = vmatpush1.msra.mxu0 %v1253
    %1285 = vmatprep.subr.mxu0 0.0
    %1286 = vmatpush1.msra.mxu0 %v1252
    %1287 = vmatprep.subr.mxu0 0.0
    %1288 = vmatpush1.msra.mxu0 %v1251
    %1289 = vmatprep.subr.mxu0 0.0
    %1290 = vmatpush1.msra.mxu0 %v1250
    %1291 = vmatprep.subr.mxu0 0.0
    %1292 = vmatpush1.msra.mxu0 %v1249
    %1293 = vmatprep.subr.mxu0 0.0
    %1294 = vmatpush1.msra.mxu0 %v1248
    %1295 = vmatprep.subr.mxu0 0.0
    %1296 = vmatpush1.msra.mxu0 %v1247
    %1297 = vmatprep.subr.mxu0 0.0
    %1298 = vmatpush1.msra.mxu0 %v1246
    %1299 = vmatprep.subr.mxu0 0.0
    %1300 = vmatpush1.msra.mxu0 %v1245
    %1301 = vmatprep.subr.mxu0 0.0
    %1302 = vmatpush1.msra.mxu0 %v1244
    %1303 = vmatprep.subr.mxu0 0.0
    %1304 = vmatpush1.msra.mxu0 %v1243
    %1305 = vmatprep.subr.mxu0 0.0
    %1306 = vmatpush1.msra.mxu0 %v1242
    %1307 = vmatprep.subr.mxu0 0.0
    %1308 = vmatpush2.msra.mxu0 %v1273
    %1309 = vmatprep.subr.mxu0 0.0
    %1310 = vmatpush2.msra.mxu0 %v1272
    %1311 = vmatprep.subr.mxu0 0.0
    %1312 = vmatpush2.msra.mxu0 %v1271
    %1313 = vmatprep.subr.mxu0 0.0
    %1314 = vmatpush2.msra.mxu0 %v1270
    %1315 = vmatprep.subr.mxu0 0.0
    %1316 = vmatpush2.msra.mxu0 %v1269
    %1317 = vmatprep.subr.mxu0 0.0
    %1318 = vmatpush2.msra.mxu0 %v1268
    %1319 = vmatprep.subr.mxu0 0.0
    %1320 = vmatpush2.msra.mxu0 %v1267
    %1321 = vmatprep.subr.mxu0 0.0
    %1322 = vmatpush2.msra.mxu0 %v1266
    %1323 = vmatprep.subr.mxu0 0.0
    %1324 = vmatpush2.msra.mxu0 %v1265
    %1325 = vmatprep.subr.mxu0 0.0
    %1326 = vmatpush2.msra.mxu0 %v1264
    %1327 = vmatprep.subr.mxu0 0.0
    %1328 = vmatpush2.msra.mxu0 %v1263
    %1329 = vmatprep.subr.mxu0 0.0
    %1330 = vmatpush2.msra.mxu0 %v1262
    %1331 = vmatprep.subr.mxu0 0.0
    %1332 = vmatpush2.msra.mxu0 %v1261
    %1333 = vmatprep.subr.mxu0 0.0
    %1334 = vmatpush2.msra.mxu0 %v1260
    %1335 = vmatprep.subr.mxu0 0.0
    %1336 = vmatpush2.msra.mxu0 %v1259
    %1337 = vmatprep.subr.mxu0 0.0
    %1338 = vmatpush2.msra.mxu0 %v1258
    %1339 = vmatprep.mubr.f32.mxu0 %v1239
    %1340 = vmatmul.mubr.f32.gmra.mxu0 %v1238
    %v1341 = vpop.f32.mrf.mxu0
    %v1342 = vadd.f32 %v1274, %v1341
    %v1343 = vpop.f32.mrf.mxu0
    %1344 = vmatprep.mubr.f32.mxu0 %v1241
    %1345 = vmatmul.mubr.f32.gmra.mxu0 %v1240
    %v1346 = vpop.f32.mrf.mxu0
    %v1347 = vadd.f32 %v1274, %v1346
    %v1348 = vpop.f32.mrf.mxu0
    %1349 = vdwg.mxu0
    %v1350 = vmax.f32 %v1342, 0.0
    %v1351 = vmax.f32 %v1347, 0.0
    %v1352 = vld [vmem:[#allocation2] sm:$0xff]
    %v1353 = vld [vmem:[#allocation2 + $0x28] sm:$0xff]
    %v1354 = vld [vmem:[#allocation2 + $0x50] sm:$0xff]
    %v1355 = vld [vmem:[#allocation2 + $0x78] sm:$0xff]
    %v1356 = vld [vmem:[#allocation2 + $0xa0] sm:$0xff]
    %v1357 = vld [vmem:[#allocation2 + $0xc8] sm:$0xff]
    %v1358 = vld [vmem:[#allocation2 + $0xf0] sm:$0xff]
    %v1359 = vld [vmem:[#allocation2 + $0x118] sm:$0xff]
    %v1360 = vld [vmem:[#allocation2 + $0x140] sm:$0xff]
    %v1361 = vld [vmem:[#allocation2 + $0x168] sm:$0xff]
    %v1362 = vld [vmem:[#allocation2 + $0x190] sm:$0xff]
    %v1363 = vld [vmem:[#allocation2 + $0x1b8] sm:$0xff]
    %v1364 = vld [vmem:[#allocation2 + $0x1e0] sm:$0xff]
    %v1365 = vld [vmem:[#allocation2 + $0x208] sm:$0xff]
    %v1366 = vld [vmem:[#allocation2 + $0x230] sm:$0xff]
    %v1367 = vld [vmem:[#allocation2 + $0x258] sm:$0xff]
    %v1368 = vld [vmem:[%s6 + $0x4] ss:$0 sm:$0xff]
    %1369 = vmatprep.subr.mxu0 0.0
    %1370 = vmatpush1.msra.mxu0 %v1367
    %1371 = vmatprep.subr.mxu0 0.0
    %1372 = vmatpush1.msra.mxu0 %v1366
    %1373 = vmatprep.subr.mxu0 0.0
    %1374 = vmatpush1.msra.mxu0 %v1365
    %1375 = vmatprep.subr.mxu0 0.0
    %1376 = vmatpush1.msra.mxu0 %v1364
    %1377 = vmatprep.subr.mxu0 0.0
    %1378 = vmatpush1.msra.mxu0 %v1363
    %1379 = vmatprep.subr.mxu0 0.0
    %1380 = vmatpush1.msra.mxu0 %v1362
    %1381 = vmatprep.subr.mxu0 0.0
    %1382 = vmatpush1.msra.mxu0 %v1361
    %1383 = vmatprep.subr.mxu0 0.0
    %1384 = vmatpush1.msra.mxu0 %v1360
    %1385 = vmatprep.subr.mxu0 0.0
    %1386 = vmatpush1.msra.mxu0 %v1359
    %1387 = vmatprep.subr.mxu0 0.0
    %1388 = vmatpush1.msra.mxu0 %v1358
    %1389 = vmatprep.subr.mxu0 0.0
    %1390 = vmatpush1.msra.mxu0 %v1357
    %1391 = vmatprep.subr.mxu0 0.0
    %1392 = vmatpush1.msra.mxu0 %v1356
    %1393 = vmatprep.subr.mxu0 0.0
    %1394 = vmatpush1.msra.mxu0 %v1355
    %1395 = vmatprep.subr.mxu0 0.0
    %1396 = vmatpush1.msra.mxu0 %v1354
    %1397 = vmatprep.subr.mxu0 0.0
    %1398 = vmatpush1.msra.mxu0 %v1353
    %1399 = vmatprep.subr.mxu0 0.0
    %1400 = vmatpush1.msra.mxu0 %v1352
    %1401 = vmatprep.subr.mxu0 0.0
    %1402 = vmatpush2.msra.mxu0 0.0
    %1403 = vmatprep.subr.mxu0 0.0
    %1404 = vmatpush2.msra.mxu0 0.0
    %1405 = vmatprep.subr.mxu0 0.0
    %1406 = vmatpush2.msra.mxu0 0.0
    %1407 = vmatprep.subr.mxu0 0.0
    %1408 = vmatpush2.msra.mxu0 0.0
    %1409 = vmatprep.subr.mxu0 0.0
    %1410 = vmatpush2.msra.mxu0 0.0
    %1411 = vmatprep.subr.mxu0 0.0
    %1412 = vmatpush2.msra.mxu0 0.0
    %1413 = vmatprep.subr.mxu0 0.0
    %1414 = vmatpush2.msra.mxu0 0.0
    %1415 = vmatprep.subr.mxu0 0.0
    %1416 = vmatpush2.msra.mxu0 0.0
    %1417 = vmatprep.subr.mxu0 0.0
    %1418 = vmatpush2.msra.mxu0 0.0
    %1419 = vmatprep.subr.mxu0 0.0
    %1420 = vmatpush2.msra.mxu0 0.0
    %1421 = vmatprep.subr.mxu0 0.0
    %1422 = vmatpush2.msra.mxu0 0.0
    %1423 = vmatprep.subr.mxu0 0.0
    %1424 = vmatpush2.msra.mxu0 0.0
    %1425 = vmatprep.subr.mxu0 0.0
    %1426 = vmatpush2.msra.mxu0 0.0
    %1427 = vmatprep.subr.mxu0 0.0
    %1428 = vmatpush2.msra.mxu0 0.0
    %1429 = vmatprep.subr.mxu0 0.0
    %1430 = vmatpush2.msra.mxu0 0.0
    %1431 = vmatprep.subr.mxu0 0.0
    %1432 = vmatpush2.msra.mxu0 0.0
    %1433 = vmatprep.mubr.f32.mxu0 0.0
    %1434 = vmatmul.mubr.f32.gmra.mxu0 %v1350
    %v1435 = vpop.f32.mrf.mxu0
    %v1436 = vadd.f32 %v1368, %v1435
    %v1437 = vpop.f32.mrf.mxu0
    %1438 = vmatprep.mubr.f32.mxu0 0.0
    %1439 = vmatmul.mubr.f32.gmra.mxu0 %v1351
    %v1440 = vpop.f32.mrf.mxu0
    %v1441 = vadd.f32 %v1368, %v1440
    %v1442 = vpop.f32.mrf.mxu0
    %1443 = vdwg.mxu0
    %v1444 = vld [vmem:[%s4 + $0x10] sm:$0xff]
    %v1445 = vld [vmem:[%s4 + $0x18] sm:$0xff]
    %v1446 = vld [vmem:[%s4 + $0x40] sm:$0xff]
    %v1447 = vld [vmem:[%s4 + $0x48] sm:$0xff]
    %v1448 = vld [vmem:[%s4 + $0x70] sm:$0xff]
    %v1449 = vld [vmem:[%s4 + $0x78] sm:$0xff]
    %v1450 = vld [vmem:[%s4 + $0xa0] sm:$0xff]
    %v1451 = vld [vmem:[%s4 + $0xa8] sm:$0xff]
    %v1452 = vld [vmem:[%s4 + $0xd0] sm:$0xff]
    %v1453 = vld [vmem:[%s4 + $0xd8] sm:$0xff]
    %v1454 = vld [vmem:[%s4 + $0x100] sm:$0xff]
    %v1455 = vld [vmem:[%s4 + $0x108] sm:$0xff]
    %v1456 = vld [vmem:[%s4 + $0x130] sm:$0xff]
    %v1457 = vld [vmem:[%s4 + $0x138] sm:$0xff]
    %v1458 = vld [vmem:[%s4 + $0x160] sm:$0xff]
    %v1459 = vld [vmem:[%s4 + $0x168] sm:$0xff]
    %v1460 = vld [vmem:[%s4 + $0x190] sm:$0xff]
    %v1461 = vld [vmem:[%s4 + $0x198] sm:$0xff]
    %v1462 = vld [vmem:[%s4 + $0x1c0] sm:$0xff]
    %v1463 = vld [vmem:[%s4 + $0x1c8] sm:$0xff]
    %v1464 = vld [vmem:[%s4 + $0x1f0] sm:$0xff]
    %v1465 = vld [vmem:[%s4 + $0x1f8] sm:$0xff]
    %v1466 = vld [vmem:[%s4 + $0x220] sm:$0xff]
    %v1467 = vld [vmem:[%s4 + $0x228] sm:$0xff]
    %v1468 = vld [vmem:[%s4 + $0x250] sm:$0xff]
    %v1469 = vld [vmem:[%s4 + $0x258] sm:$0xff]
    %v1470 = vld [vmem:[%s4 + $0x280] sm:$0xff]
    %v1471 = vld [vmem:[%s4 + $0x288] sm:$0xff]
    %v1472 = vld [vmem:[%s4 + $0x2b0] sm:$0xff]
    %v1473 = vld [vmem:[%s4 + $0x2b8] sm:$0xff]
    %v1474 = vld [vmem:[%s4 + $0x2e0] sm:$0xff]
    %v1475 = vld [vmem:[%s4 + $0x2e8] sm:$0xff]
    %v1476 = vld [vmem:[%s4 + $0x310] sm:$0xff]
    %v1477 = vld [vmem:[%s4 + $0x318] sm:$0xff]
    %v1478 = vld [vmem:[%s4 + $0x340] sm:$0xff]
    %v1479 = vld [vmem:[%s4 + $0x348] sm:$0xff]
    %v1480 = vld [vmem:[%s4 + $0x370] sm:$0xff]
    %v1481 = vld [vmem:[%s4 + $0x378] sm:$0xff]
    %v1482 = vld [vmem:[%s4 + $0x3a0] sm:$0xff]
    %v1483 = vld [vmem:[%s4 + $0x3a8] sm:$0xff]
    %v1484 = vld [vmem:[%s4 + $0x3d0] sm:$0xff]
    %v1485 = vld [vmem:[%s4 + $0x3d8] sm:$0xff]
    %v1486 = vld [vmem:[%s4 + $0x400] sm:$0xff]
    %v1487 = vld [vmem:[%s4 + $0x408] sm:$0xff]
    %v1488 = vld [vmem:[%s4 + $0x430] sm:$0xff]
    %v1489 = vld [vmem:[%s4 + $0x438] sm:$0xff]
    %v1490 = vld [vmem:[%s4 + $0x460] sm:$0xff]
    %v1491 = vld [vmem:[%s4 + $0x468] sm:$0xff]
    %v1492 = vld [vmem:[%s4 + $0x490] sm:$0xff]
    %v1493 = vld [vmem:[%s4 + $0x498] sm:$0xff]
    %v1494 = vld [vmem:[%s4 + $0x4c0] sm:$0xff]
    %v1495 = vld [vmem:[%s4 + $0x4c8] sm:$0xff]
    %v1496 = vld [vmem:[%s4 + $0x4f0] sm:$0xff]
    %v1497 = vld [vmem:[%s4 + $0x4f8] sm:$0xff]
    %v1498 = vld [vmem:[%s4 + $0x520] sm:$0xff]
    %v1499 = vld [vmem:[%s4 + $0x528] sm:$0xff]
    %v1500 = vld [vmem:[%s4 + $0x550] sm:$0xff]
    %v1501 = vld [vmem:[%s4 + $0x558] sm:$0xff]
    %v1502 = vld [vmem:[%s4 + $0x580] sm:$0xff]
    %v1503 = vld [vmem:[%s4 + $0x588] sm:$0xff]
    %v1504 = vld [vmem:[%s4 + $0x5b0] sm:$0xff]
    %v1505 = vld [vmem:[%s4 + $0x5b8] sm:$0xff]
    %v1506 = vld [vmem:[%s4 + $0x5e0] sm:$0xff]
    %v1507 = vld [vmem:[%s4 + $0x5e8] sm:$0xff]
    %s1508 = scalar_lea.vmem %s6, 5
    %v1509 = vld [vmem:[%s1508] ss:$8 sm:$0x3]
    %v1511 = vlaneseq
    %v1512 = vshrl.u32 %v1511, 7
    %v1513 = vsub.s32 0, %v1512
    %v1514 = vrot.slane %v1509, %v1513
    %v1515 = vlaneseq
    %v1516 = vshrl.u32 %v1515, 7
    %v1517 = vsub.s32 1, %v1516
    %v1518 = vrot.slane %v1509, %v1517
    %1521 = vmatprep.subr.mxu0 %v1475
    %1522 = vmatpush1.msra.mxu0 %v1474
    %1523 = vmatprep.subr.mxu0 %v1473
    %1524 = vmatpush1.msra.mxu0 %v1472
    %1525 = vmatprep.subr.mxu0 %v1471
    %1526 = vmatpush1.msra.mxu0 %v1470
    %1527 = vmatprep.subr.mxu0 %v1469
    %1528 = vmatpush1.msra.mxu0 %v1468
    %1529 = vmatprep.subr.mxu0 %v1467
    %1530 = vmatpush1.msra.mxu0 %v1466
    %1531 = vmatprep.subr.mxu0 %v1465
    %1532 = vmatpush1.msra.mxu0 %v1464
    %1533 = vmatprep.subr.mxu0 %v1463
    %1534 = vmatpush1.msra.mxu0 %v1462
    %1535 = vmatprep.subr.mxu0 %v1461
    %1536 = vmatpush1.msra.mxu0 %v1460
    %1537 = vmatprep.subr.mxu0 %v1459
    %1538 = vmatpush1.msra.mxu0 %v1458
    %1539 = vmatprep.subr.mxu0 %v1457
    %1540 = vmatpush1.msra.mxu0 %v1456
    %1541 = vmatprep.subr.mxu0 %v1455
    %1542 = vmatpush1.msra.mxu0 %v1454
    %1543 = vmatprep.subr.mxu0 %v1453
    %1544 = vmatpush1.msra.mxu0 %v1452
    %1545 = vmatprep.subr.mxu0 %v1451
    %1546 = vmatpush1.msra.mxu0 %v1450
    %1547 = vmatprep.subr.mxu0 %v1449
    %1548 = vmatpush1.msra.mxu0 %v1448
    %1549 = vmatprep.subr.mxu0 %v1447
    %1550 = vmatpush1.msra.mxu0 %v1446
    %1551 = vmatprep.subr.mxu0 %v1445
    %1552 = vmatpush1.msra.mxu0 %v1444
    %1553 = vmatprep.subr.mxu0 %v1507
    %1554 = vmatpush2.msra.mxu0 %v1506
    %1555 = vmatprep.subr.mxu0 %v1505
    %1556 = vmatpush2.msra.mxu0 %v1504
    %1557 = vmatprep.subr.mxu0 %v1503
    %1558 = vmatpush2.msra.mxu0 %v1502
    %1559 = vmatprep.subr.mxu0 %v1501
    %1560 = vmatpush2.msra.mxu0 %v1500
    %1561 = vmatprep.subr.mxu0 %v1499
    %1562 = vmatpush2.msra.mxu0 %v1498
    %1563 = vmatprep.subr.mxu0 %v1497
    %1564 = vmatpush2.msra.mxu0 %v1496
    %1565 = vmatprep.subr.mxu0 %v1495
    %1566 = vmatpush2.msra.mxu0 %v1494
    %1567 = vmatprep.subr.mxu0 %v1493
    %1568 = vmatpush2.msra.mxu0 %v1492
    %1569 = vmatprep.subr.mxu0 %v1491
    %1570 = vmatpush2.msra.mxu0 %v1490
    %1571 = vmatprep.subr.mxu0 %v1489
    %1572 = vmatpush2.msra.mxu0 %v1488
    %1573 = vmatprep.subr.mxu0 %v1487
    %1574 = vmatpush2.msra.mxu0 %v1486
    %1575 = vmatprep.subr.mxu0 %v1485
    %1576 = vmatpush2.msra.mxu0 %v1484
    %1577 = vmatprep.subr.mxu0 %v1483
    %1578 = vmatpush2.msra.mxu0 %v1482
    %1579 = vmatprep.subr.mxu0 %v1481
    %1580 = vmatpush2.msra.mxu0 %v1480
    %1581 = vmatprep.subr.mxu0 %v1479
    %1582 = vmatpush2.msra.mxu0 %v1478
    %1583 = vmatprep.subr.mxu0 %v1477
    %1584 = vmatpush2.msra.mxu0 %v1476
    %1585 = vmatprep.mubr.f32.mxu0 %v1083
    %1586 = vmatmul.mubr.f32.gmra.mxu0 %v1082
    %v1587 = vpop.f32.mrf.mxu0
    %v1588 = vadd.f32 %v1514, %v1587
    %v1589 = vpop.f32.mrf.mxu0
    %v1590 = vadd.f32 %v1518, %v1589
    %1591 = vdwg.mxu0
    %v1592 = vmax.f32 %v1588, 0.0
    %v1593 = vmax.f32 %v1590, 0.0
    %v1594 = vld [vmem:[%s4 + $0x28] sm:$0xff]
    %v1595 = vld [vmem:[%s4 + $0x58] sm:$0xff]
    %v1596 = vld [vmem:[%s4 + $0x88] sm:$0xff]
    %v1597 = vld [vmem:[%s4 + $0xb8] sm:$0xff]
    %v1598 = vld [vmem:[%s4 + $0xe8] sm:$0xff]
    %v1599 = vld [vmem:[%s4 + $0x118] sm:$0xff]
    %v1600 = vld [vmem:[%s4 + $0x148] sm:$0xff]
    %v1601 = vld [vmem:[%s4 + $0x178] sm:$0xff]
    %v1602 = vld [vmem:[%s4 + $0x1a8] sm:$0xff]
    %v1603 = vld [vmem:[%s4 + $0x1d8] sm:$0xff]
    %v1604 = vld [vmem:[%s4 + $0x208] sm:$0xff]
    %v1605 = vld [vmem:[%s4 + $0x238] sm:$0xff]
    %v1606 = vld [vmem:[%s4 + $0x268] sm:$0xff]
    %v1607 = vld [vmem:[%s4 + $0x298] sm:$0xff]
    %v1608 = vld [vmem:[%s4 + $0x2c8] sm:$0xff]
    %v1609 = vld [vmem:[%s4 + $0x2f8] sm:$0xff]
    %v1610 = vld [vmem:[%s4 + $0x328] sm:$0xff]
    %v1611 = vld [vmem:[%s4 + $0x358] sm:$0xff]
    %v1612 = vld [vmem:[%s4 + $0x388] sm:$0xff]
    %v1613 = vld [vmem:[%s4 + $0x3b8] sm:$0xff]
    %v1614 = vld [vmem:[%s4 + $0x3e8] sm:$0xff]
    %v1615 = vld [vmem:[%s4 + $0x418] sm:$0xff]
    %v1616 = vld [vmem:[%s4 + $0x448] sm:$0xff]
    %v1617 = vld [vmem:[%s4 + $0x478] sm:$0xff]
    %v1618 = vld [vmem:[%s4 + $0x4a8] sm:$0xff]
    %v1619 = vld [vmem:[%s4 + $0x4d8] sm:$0xff]
    %v1620 = vld [vmem:[%s4 + $0x508] sm:$0xff]
    %v1621 = vld [vmem:[%s4 + $0x538] sm:$0xff]
    %v1622 = vld [vmem:[%s4 + $0x568] sm:$0xff]
    %v1623 = vld [vmem:[%s4 + $0x598] sm:$0xff]
    %v1624 = vld [vmem:[%s4 + $0x5c8] sm:$0xff]
    %v1625 = vld [vmem:[%s4 + $0x5f8] sm:$0xff]
    %v1626 = vld [vmem:[%s6 + $0x6] ss:$0 sm:$0xff]
    %1627 = vmatprep.subr.mxu0 0.0
    %1628 = vmatpush1.msra.mxu0 %v1609
    %1629 = vmatprep.subr.mxu0 0.0
    %1630 = vmatpush1.msra.mxu0 %v1608
    %1631 = vmatprep.subr.mxu0 0.0
    %1632 = vmatpush1.msra.mxu0 %v1607
    %1633 = vmatprep.subr.mxu0 0.0
    %1634 = vmatpush1.msra.mxu0 %v1606
    %1635 = vmatprep.subr.mxu0 0.0
    %1636 = vmatpush1.msra.mxu0 %v1605
    %1637 = vmatprep.subr.mxu0 0.0
    %1638 = vmatpush1.msra.mxu0 %v1604
    %1639 = vmatprep.subr.mxu0 0.0
    %1640 = vmatpush1.msra.mxu0 %v1603
    %1641 = vmatprep.subr.mxu0 0.0
    %1642 = vmatpush1.msra.mxu0 %v1602
    %1643 = vmatprep.subr.mxu0 0.0
    %1644 = vmatpush1.msra.mxu0 %v1601
    %1645 = vmatprep.subr.mxu0 0.0
    %1646 = vmatpush1.msra.mxu0 %v1600
    %1647 = vmatprep.subr.mxu0 0.0
    %1648 = vmatpush1.msra.mxu0 %v1599
    %1649 = vmatprep.subr.mxu0 0.0
    %1650 = vmatpush1.msra.mxu0 %v1598
    %1651 = vmatprep.subr.mxu0 0.0
    %1652 = vmatpush1.msra.mxu0 %v1597
    %1653 = vmatprep.subr.mxu0 0.0
    %1654 = vmatpush1.msra.mxu0 %v1596
    %1655 = vmatprep.subr.mxu0 0.0
    %1656 = vmatpush1.msra.mxu0 %v1595
    %1657 = vmatprep.subr.mxu0 0.0
    %1658 = vmatpush1.msra.mxu0 %v1594
    %1659 = vmatprep.subr.mxu0 0.0
    %1660 = vmatpush2.msra.mxu0 %v1625
    %1661 = vmatprep.subr.mxu0 0.0
    %1662 = vmatpush2.msra.mxu0 %v1624
    %1663 = vmatprep.subr.mxu0 0.0
    %1664 = vmatpush2.msra.mxu0 %v1623
    %1665 = vmatprep.subr.mxu0 0.0
    %1666 = vmatpush2.msra.mxu0 %v1622
    %1667 = vmatprep.subr.mxu0 0.0
    %1668 = vmatpush2.msra.mxu0 %v1621
    %1669 = vmatprep.subr.mxu0 0.0
    %1670 = vmatpush2.msra.mxu0 %v1620
    %1671 = vmatprep.subr.mxu0 0.0
    %1672 = vmatpush2.msra.mxu0 %v1619
    %1673 = vmatprep.subr.mxu0 0.0
    %1674 = vmatpush2.msra.mxu0 %v1618
    %1675 = vmatprep.subr.mxu0 0.0
    %1676 = vmatpush2.msra.mxu0 %v1617
    %1677 = vmatprep.subr.mxu0 0.0
    %1678 = vmatpush2.msra.mxu0 %v1616
    %1679 = vmatprep.subr.mxu0 0.0
    %1680 = vmatpush2.msra.mxu0 %v1615
    %1681 = vmatprep.subr.mxu0 0.0
    %1682 = vmatpush2.msra.mxu0 %v1614
    %1683 = vmatprep.subr.mxu0 0.0
    %1684 = vmatpush2.msra.mxu0 %v1613
    %1685 = vmatprep.subr.mxu0 0.0
    %1686 = vmatpush2.msra.mxu0 %v1612
    %1687 = vmatprep.subr.mxu0 0.0
    %1688 = vmatpush2.msra.mxu0 %v1611
    %1689 = vmatprep.subr.mxu0 0.0
    %1690 = vmatpush2.msra.mxu0 %v1610
    %1691 = vmatprep.mubr.f32.mxu0 %v1593
    %1692 = vmatmul.mubr.f32.gmra.mxu0 %v1592
    %v1693 = vpop.f32.mrf.mxu0
    %v1694 = vadd.f32 %v1626, %v1693
    %v1695 = vpop.f32.mrf.mxu0
    %1696 = vdwg.mxu0
    %v1697 = vmax.f32 %v1694, 0.0
    %v1698 = vld [vmem:[#allocation2 + $0x8] sm:$0xff]
    %v1699 = vld [vmem:[#allocation2 + $0x30] sm:$0xff]
    %v1700 = vld [vmem:[#allocation2 + $0x58] sm:$0xff]
    %v1701 = vld [vmem:[#allocation2 + $0x80] sm:$0xff]
    %v1702 = vld [vmem:[#allocation2 + $0xa8] sm:$0xff]
    %v1703 = vld [vmem:[#allocation2 + $0xd0] sm:$0xff]
    %v1704 = vld [vmem:[#allocation2 + $0xf8] sm:$0xff]
    %v1705 = vld [vmem:[#allocation2 + $0x120] sm:$0xff]
    %v1706 = vld [vmem:[#allocation2 + $0x148] sm:$0xff]
    %v1707 = vld [vmem:[#allocation2 + $0x170] sm:$0xff]
    %v1708 = vld [vmem:[#allocation2 + $0x198] sm:$0xff]
    %v1709 = vld [vmem:[#allocation2 + $0x1c0] sm:$0xff]
    %v1710 = vld [vmem:[#allocation2 + $0x1e8] sm:$0xff]
    %v1711 = vld [vmem:[#allocation2 + $0x210] sm:$0xff]
    %v1712 = vld [vmem:[#allocation2 + $0x238] sm:$0xff]
    %v1713 = vld [vmem:[#allocation2 + $0x260] sm:$0xff]
    %v1714 = vld [vmem:[%s6 + $0x7] ss:$0 sm:$0xff]
    %1715 = vmatprep.subr.mxu0 0.0
    %1716 = vmatpush1.msra.mxu0 %v1713
    %1717 = vmatprep.subr.mxu0 0.0
    %1718 = vmatpush1.msra.mxu0 %v1712
    %1719 = vmatprep.subr.mxu0 0.0
    %1720 = vmatpush1.msra.mxu0 %v1711
    %1721 = vmatprep.subr.mxu0 0.0
    %1722 = vmatpush1.msra.mxu0 %v1710
    %1723 = vmatprep.subr.mxu0 0.0
    %1724 = vmatpush1.msra.mxu0 %v1709
    %1725 = vmatprep.subr.mxu0 0.0
    %1726 = vmatpush1.msra.mxu0 %v1708
    %1727 = vmatprep.subr.mxu0 0.0
    %1728 = vmatpush1.msra.mxu0 %v1707
    %1729 = vmatprep.subr.mxu0 0.0
    %1730 = vmatpush1.msra.mxu0 %v1706
    %1731 = vmatprep.subr.mxu0 0.0
    %1732 = vmatpush1.msra.mxu0 %v1705
    %1733 = vmatprep.subr.mxu0 0.0
    %1734 = vmatpush1.msra.mxu0 %v1704
    %1735 = vmatprep.subr.mxu0 0.0
    %1736 = vmatpush1.msra.mxu0 %v1703
    %1737 = vmatprep.subr.mxu0 0.0
    %1738 = vmatpush1.msra.mxu0 %v1702
    %1739 = vmatprep.subr.mxu0 0.0
    %1740 = vmatpush1.msra.mxu0 %v1701
    %1741 = vmatprep.subr.mxu0 0.0
    %1742 = vmatpush1.msra.mxu0 %v1700
    %1743 = vmatprep.subr.mxu0 0.0
    %1744 = vmatpush1.msra.mxu0 %v1699
    %1745 = vmatprep.subr.mxu0 0.0
    %1746 = vmatpush1.msra.mxu0 %v1698
    %1747 = vmatprep.subr.mxu0 0.0
    %1748 = vmatpush2.msra.mxu0 0.0
    %1749 = vmatprep.subr.mxu0 0.0
    %1750 = vmatpush2.msra.mxu0 0.0
    %1751 = vmatprep.subr.mxu0 0.0
    %1752 = vmatpush2.msra.mxu0 0.0
    %1753 = vmatprep.subr.mxu0 0.0
    %1754 = vmatpush2.msra.mxu0 0.0
    %1755 = vmatprep.subr.mxu0 0.0
    %1756 = vmatpush2.msra.mxu0 0.0
    %1757 = vmatprep.subr.mxu0 0.0
    %1758 = vmatpush2.msra.mxu0 0.0
    %1759 = vmatprep.subr.mxu0 0.0
    %1760 = vmatpush2.msra.mxu0 0.0
    %1761 = vmatprep.subr.mxu0 0.0
    %1762 = vmatpush2.msra.mxu0 0.0
    %1763 = vmatprep.subr.mxu0 0.0
    %1764 = vmatpush2.msra.mxu0 0.0
    %1765 = vmatprep.subr.mxu0 0.0
    %1766 = vmatpush2.msra.mxu0 0.0
    %1767 = vmatprep.subr.mxu0 0.0
    %1768 = vmatpush2.msra.mxu0 0.0
    %1769 = vmatprep.subr.mxu0 0.0
    %1770 = vmatpush2.msra.mxu0 0.0
    %1771 = vmatprep.subr.mxu0 0.0
    %1772 = vmatpush2.msra.mxu0 0.0
    %1773 = vmatprep.subr.mxu0 0.0
    %1774 = vmatpush2.msra.mxu0 0.0
    %1775 = vmatprep.subr.mxu0 0.0
    %1776 = vmatpush2.msra.mxu0 0.0
    %1777 = vmatprep.subr.mxu0 0.0
    %1778 = vmatpush2.msra.mxu0 0.0
    %1779 = vmatprep.mubr.f32.mxu0 0.0
    %1780 = vmatmul.mubr.f32.gmra.mxu0 %v1697
    %v1781 = vpop.f32.mrf.mxu0
    %v1782 = vadd.f32 %v1714, %v1781
    %v1783 = vpop.f32.mrf.mxu0
    %1784 = vdwg.mxu0
    %v1785 = vld [vmem:[#allocation2 + $0x10] sm:$0xff]
    %v1786 = vld [vmem:[#allocation2 + $0x38] sm:$0xff]
    %v1787 = vld [vmem:[#allocation2 + $0x60] sm:$0xff]
    %v1788 = vld [vmem:[#allocation2 + $0x88] sm:$0xff]
    %v1789 = vld [vmem:[#allocation2 + $0xb0] sm:$0xff]
    %v1790 = vld [vmem:[#allocation2 + $0xd8] sm:$0xff]
    %v1791 = vld [vmem:[#allocation2 + $0x100] sm:$0xff]
    %v1792 = vld [vmem:[#allocation2 + $0x128] sm:$0xff]
    %v1793 = vld [vmem:[#allocation2 + $0x150] sm:$0xff]
    %v1794 = vld [vmem:[#allocation2 + $0x178] sm:$0xff]
    %v1795 = vld [vmem:[#allocation2 + $0x1a0] sm:$0xff]
    %v1796 = vld [vmem:[#allocation2 + $0x1c8] sm:$0xff]
    %v1797 = vld [vmem:[#allocation2 + $0x1f0] sm:$0xff]
    %v1798 = vld [vmem:[#allocation2 + $0x218] sm:$0xff]
    %v1799 = vld [vmem:[#allocation2 + $0x240] sm:$0xff]
    %v1800 = vld [vmem:[#allocation2 + $0x268] sm:$0xff]
    %v1801 = vld [vmem:[%s6 + $0x10] ss:$0 sm:$0xff]
    %1802 = vmatprep.subr.mxu0 0.0
    %1803 = vmatpush1.msra.mxu0 %v1800
    %1804 = vmatprep.subr.mxu0 0.0
    %1805 = vmatpush1.msra.mxu0 %v1799
    %1806 = vmatprep.subr.mxu0 0.0
    %1807 = vmatpush1.msra.mxu0 %v1798
    %1808 = vmatprep.subr.mxu0 0.0
    %1809 = vmatpush1.msra.mxu0 %v1797
    %1810 = vmatprep.subr.mxu0 0.0
    %1811 = vmatpush1.msra.mxu0 %v1796
    %1812 = vmatprep.subr.mxu0 0.0
    %1813 = vmatpush1.msra.mxu0 %v1795
    %1814 = vmatprep.subr.mxu0 0.0
    %1815 = vmatpush1.msra.mxu0 %v1794
    %1816 = vmatprep.subr.mxu0 0.0
    %1817 = vmatpush1.msra.mxu0 %v1793
    %1818 = vmatprep.subr.mxu0 0.0
    %1819 = vmatpush1.msra.mxu0 %v1792
    %1820 = vmatprep.subr.mxu0 0.0
    %1821 = vmatpush1.msra.mxu0 %v1791
    %1822 = vmatprep.subr.mxu0 0.0
    %1823 = vmatpush1.msra.mxu0 %v1790
    %1824 = vmatprep.subr.mxu0 0.0
    %1825 = vmatpush1.msra.mxu0 %v1789
    %1826 = vmatprep.subr.mxu0 0.0
    %1827 = vmatpush1.msra.mxu0 %v1788
    %1828 = vmatprep.subr.mxu0 0.0
    %1829 = vmatpush1.msra.mxu0 %v1787
    %1830 = vmatprep.subr.mxu0 0.0
    %1831 = vmatpush1.msra.mxu0 %v1786
    %1832 = vmatprep.subr.mxu0 0.0
    %1833 = vmatpush1.msra.mxu0 %v1785
    %1834 = vmatprep.subr.mxu0 0.0
    %1835 = vmatpush2.msra.mxu0 0.0
    %1836 = vmatprep.subr.mxu0 0.0
    %1837 = vmatpush2.msra.mxu0 0.0
    %1838 = vmatprep.subr.mxu0 0.0
    %1839 = vmatpush2.msra.mxu0 0.0
    %1840 = vmatprep.subr.mxu0 0.0
    %1841 = vmatpush2.msra.mxu0 0.0
    %1842 = vmatprep.subr.mxu0 0.0
    %1843 = vmatpush2.msra.mxu0 0.0
    %1844 = vmatprep.subr.mxu0 0.0
    %1845 = vmatpush2.msra.mxu0 0.0
    %1846 = vmatprep.subr.mxu0 0.0
    %1847 = vmatpush2.msra.mxu0 0.0
    %1848 = vmatprep.subr.mxu0 0.0
    %1849 = vmatpush2.msra.mxu0 0.0
    %1850 = vmatprep.subr.mxu0 0.0
    %1851 = vmatpush2.msra.mxu0 0.0
    %1852 = vmatprep.subr.mxu0 0.0
    %1853 = vmatpush2.msra.mxu0 0.0
    %1854 = vmatprep.subr.mxu0 0.0
    %1855 = vmatpush2.msra.mxu0 0.0
    %1856 = vmatprep.subr.mxu0 0.0
    %1857 = vmatpush2.msra.mxu0 0.0
    %1858 = vmatprep.subr.mxu0 0.0
    %1859 = vmatpush2.msra.mxu0 0.0
    %1860 = vmatprep.subr.mxu0 0.0
    %1861 = vmatpush2.msra.mxu0 0.0
    %1862 = vmatprep.subr.mxu0 0.0
    %1863 = vmatpush2.msra.mxu0 0.0
    %1864 = vmatprep.subr.mxu0 0.0
    %1865 = vmatpush2.msra.mxu0 0.0
    %1866 = vmatprep.mubr.f32.mxu0 0.0
    %1867 = vmatmul.mubr.f32.gmra.mxu0 %v1436
    %v1868 = vpop.f32.mrf.mxu0
    %v1869 = vadd.f32 %v1801, %v1868
    %v1870 = vpop.f32.mrf.mxu0
    %1871 = vmatprep.mubr.f32.mxu0 0.0
    %1872 = vmatmul.mubr.f32.gmra.mxu0 %v1441
    %v1873 = vpop.f32.mrf.mxu0
    %v1874 = vadd.f32 %v1801, %v1873
    %v1875 = vpop.f32.mrf.mxu0
    %1876 = vdwg.mxu0
    %v1877 = vld [vmem:[#allocation2 + $0x18] sm:$0xff]
    %v1878 = vld [vmem:[#allocation2 + $0x40] sm:$0xff]
    %v1879 = vld [vmem:[#allocation2 + $0x68] sm:$0xff]
    %v1880 = vld [vmem:[#allocation2 + $0x90] sm:$0xff]
    %v1881 = vld [vmem:[#allocation2 + $0xb8] sm:$0xff]
    %v1882 = vld [vmem:[#allocation2 + $0xe0] sm:$0xff]
    %v1883 = vld [vmem:[#allocation2 + $0x108] sm:$0xff]
    %v1884 = vld [vmem:[#allocation2 + $0x130] sm:$0xff]
    %v1885 = vld [vmem:[#allocation2 + $0x158] sm:$0xff]
    %v1886 = vld [vmem:[#allocation2 + $0x180] sm:$0xff]
    %v1887 = vld [vmem:[#allocation2 + $0x1a8] sm:$0xff]
    %v1888 = vld [vmem:[#allocation2 + $0x1d0] sm:$0xff]
    %v1889 = vld [vmem:[#allocation2 + $0x1f8] sm:$0xff]
    %v1890 = vld [vmem:[#allocation2 + $0x220] sm:$0xff]
    %v1891 = vld [vmem:[#allocation2 + $0x248] sm:$0xff]
    %v1892 = vld [vmem:[#allocation2 + $0x270] sm:$0xff]
    %v1893 = vld [vmem:[%s6 + $0x11] ss:$0 sm:$0xff]
    %1894 = vmatprep.subr.mxu0 0.0
    %1895 = vmatpush1.msra.mxu0 %v1892
    %1896 = vmatprep.subr.mxu0 0.0
    %1897 = vmatpush1.msra.mxu0 %v1891
    %1898 = vmatprep.subr.mxu0 0.0
    %1899 = vmatpush1.msra.mxu0 %v1890
    %1900 = vmatprep.subr.mxu0 0.0
    %1901 = vmatpush1.msra.mxu0 %v1889
    %1902 = vmatprep.subr.mxu0 0.0
    %1903 = vmatpush1.msra.mxu0 %v1888
    %1904 = vmatprep.subr.mxu0 0.0
    %1905 = vmatpush1.msra.mxu0 %v1887
    %1906 = vmatprep.subr.mxu0 0.0
    %1907 = vmatpush1.msra.mxu0 %v1886
    %1908 = vmatprep.subr.mxu0 0.0
    %1909 = vmatpush1.msra.mxu0 %v1885
    %1910 = vmatprep.subr.mxu0 0.0
    %1911 = vmatpush1.msra.mxu0 %v1884
    %1912 = vmatprep.subr.mxu0 0.0
    %1913 = vmatpush1.msra.mxu0 %v1883
    %1914 = vmatprep.subr.mxu0 0.0
    %1915 = vmatpush1.msra.mxu0 %v1882
    %1916 = vmatprep.subr.mxu0 0.0
    %1917 = vmatpush1.msra.mxu0 %v1881
    %1918 = vmatprep.subr.mxu0 0.0
    %1919 = vmatpush1.msra.mxu0 %v1880
    %1920 = vmatprep.subr.mxu0 0.0
    %1921 = vmatpush1.msra.mxu0 %v1879
    %1922 = vmatprep.subr.mxu0 0.0
    %1923 = vmatpush1.msra.mxu0 %v1878
    %1924 = vmatprep.subr.mxu0 0.0
    %1925 = vmatpush1.msra.mxu0 %v1877
    %1926 = vmatprep.subr.mxu0 0.0
    %1927 = vmatpush2.msra.mxu0 0.0
    %1928 = vmatprep.subr.mxu0 0.0
    %1929 = vmatpush2.msra.mxu0 0.0
    %1930 = vmatprep.subr.mxu0 0.0
    %1931 = vmatpush2.msra.mxu0 0.0
    %1932 = vmatprep.subr.mxu0 0.0
    %1933 = vmatpush2.msra.mxu0 0.0
    %1934 = vmatprep.subr.mxu0 0.0
    %1935 = vmatpush2.msra.mxu0 0.0
    %1936 = vmatprep.subr.mxu0 0.0
    %1937 = vmatpush2.msra.mxu0 0.0
    %1938 = vmatprep.subr.mxu0 0.0
    %1939 = vmatpush2.msra.mxu0 0.0
    %1940 = vmatprep.subr.mxu0 0.0
    %1941 = vmatpush2.msra.mxu0 0.0
    %1942 = vmatprep.subr.mxu0 0.0
    %1943 = vmatpush2.msra.mxu0 0.0
    %1944 = vmatprep.subr.mxu0 0.0
    %1945 = vmatpush2.msra.mxu0 0.0
    %1946 = vmatprep.subr.mxu0 0.0
    %1947 = vmatpush2.msra.mxu0 0.0
    %1948 = vmatprep.subr.mxu0 0.0
    %1949 = vmatpush2.msra.mxu0 0.0
    %1950 = vmatprep.subr.mxu0 0.0
    %1951 = vmatpush2.msra.mxu0 0.0
    %1952 = vmatprep.subr.mxu0 0.0
    %1953 = vmatpush2.msra.mxu0 0.0
    %1954 = vmatprep.subr.mxu0 0.0
    %1955 = vmatpush2.msra.mxu0 0.0
    %1956 = vmatprep.subr.mxu0 0.0
    %1957 = vmatpush2.msra.mxu0 0.0
    %1958 = vmatprep.mubr.f32.mxu0 0.0
    %1959 = vmatmul.mubr.f32.gmra.mxu0 %v1782
    %v1960 = vpop.f32.mrf.mxu0
    %v1961 = vadd.f32 %v1893, %v1960
    %v1962 = vpop.f32.mrf.mxu0
    %1963 = vdwg.mxu0
    %v1964 = vld [vmem:[#allocation2 + $0x20] sm:$0xff]
    %v1965 = vld [vmem:[#allocation2 + $0x48] sm:$0xff]
    %v1966 = vld [vmem:[#allocation2 + $0x70] sm:$0xff]
    %v1967 = vld [vmem:[#allocation2 + $0x98] sm:$0xff]
    %v1968 = vld [vmem:[#allocation2 + $0xc0] sm:$0xff]
    %v1969 = vld [vmem:[#allocation2 + $0xe8] sm:$0xff]
    %v1970 = vld [vmem:[#allocation2 + $0x110] sm:$0xff]
    %v1971 = vld [vmem:[#allocation2 + $0x138] sm:$0xff]
    %v1972 = vld [vmem:[#allocation2 + $0x160] sm:$0xff]
    %v1973 = vld [vmem:[#allocation2 + $0x188] sm:$0xff]
    %v1974 = vld [vmem:[#allocation2 + $0x1b0] sm:$0xff]
    %v1975 = vld [vmem:[#allocation2 + $0x1d8] sm:$0xff]
    %v1976 = vld [vmem:[#allocation2 + $0x200] sm:$0xff]
    %v1977 = vld [vmem:[#allocation2 + $0x228] sm:$0xff]
    %v1978 = vld [vmem:[#allocation2 + $0x250] sm:$0xff]
    %v1979 = vld [vmem:[#allocation2 + $0x278] sm:$0xff]
    %1980 = vmatprep.subr.mxu0 0.0
    %1981 = vmatpush1.msra.mxu0 %v1979
    %1982 = vmatprep.subr.mxu0 0.0
    %1983 = vmatpush1.msra.mxu0 %v1978
    %1984 = vmatprep.subr.mxu0 0.0
    %1985 = vmatpush1.msra.mxu0 %v1977
    %1986 = vmatprep.subr.mxu0 0.0
    %1987 = vmatpush1.msra.mxu0 %v1976
    %1988 = vmatprep.subr.mxu0 0.0
    %1989 = vmatpush1.msra.mxu0 %v1975
    %1990 = vmatprep.subr.mxu0 0.0
    %1991 = vmatpush1.msra.mxu0 %v1974
    %1992 = vmatprep.subr.mxu0 0.0
    %1993 = vmatpush1.msra.mxu0 %v1973
    %1994 = vmatprep.subr.mxu0 0.0
    %1995 = vmatpush1.msra.mxu0 %v1972
    %1996 = vmatprep.subr.mxu0 0.0
    %1997 = vmatpush1.msra.mxu0 %v1971
    %1998 = vmatprep.subr.mxu0 0.0
    %1999 = vmatpush1.msra.mxu0 %v1970
    %2000 = vmatprep.subr.mxu0 0.0
    %2001 = vmatpush1.msra.mxu0 %v1969
    %2002 = vmatprep.subr.mxu0 0.0
    %2003 = vmatpush1.msra.mxu0 %v1968
    %2004 = vmatprep.subr.mxu0 0.0
    %2005 = vmatpush1.msra.mxu0 %v1967
    %2006 = vmatprep.subr.mxu0 0.0
    %2007 = vmatpush1.msra.mxu0 %v1966
    %2008 = vmatprep.subr.mxu0 0.0
    %2009 = vmatpush1.msra.mxu0 %v1965
    %2010 = vmatprep.subr.mxu0 0.0
    %2011 = vmatpush1.msra.mxu0 %v1964
    %2012 = vmatprep.subr.mxu0 0.0
    %2013 = vmatpush2.msra.mxu0 0.0
    %2014 = vmatprep.subr.mxu0 0.0
    %2015 = vmatpush2.msra.mxu0 0.0
    %2016 = vmatprep.subr.mxu0 0.0
    %2017 = vmatpush2.msra.mxu0 0.0
    %2018 = vmatprep.subr.mxu0 0.0
    %2019 = vmatpush2.msra.mxu0 0.0
    %2020 = vmatprep.subr.mxu0 0.0
    %2021 = vmatpush2.msra.mxu0 0.0
    %2022 = vmatprep.subr.mxu0 0.0
    %2023 = vmatpush2.msra.mxu0 0.0
    %2024 = vmatprep.subr.mxu0 0.0
    %2025 = vmatpush2.msra.mxu0 0.0
    %2026 = vmatprep.subr.mxu0 0.0
    %2027 = vmatpush2.msra.mxu0 0.0
    %2028 = vmatprep.subr.mxu0 0.0
    %2029 = vmatpush2.msra.mxu0 0.0
    %2030 = vmatprep.subr.mxu0 0.0
    %2031 = vmatpush2.msra.mxu0 0.0
    %2032 = vmatprep.subr.mxu0 0.0
    %2033 = vmatpush2.msra.mxu0 0.0
    %2034 = vmatprep.subr.mxu0 0.0
    %2035 = vmatpush2.msra.mxu0 0.0
    %2036 = vmatprep.subr.mxu0 0.0
    %2037 = vmatpush2.msra.mxu0 0.0
    %2038 = vmatprep.subr.mxu0 0.0
    %2039 = vmatpush2.msra.mxu0 0.0
    %2040 = vmatprep.subr.mxu0 0.0
    %2041 = vmatpush2.msra.mxu0 0.0
    %2042 = vmatprep.subr.mxu0 0.0
    %2043 = vmatpush2.msra.mxu0 0.0
    %2044 = vmatprep.mubr.f32.mxu0 0.0
    %2045 = vmatmul.mubr.f32.gmra.mxu0 %v1869
    %v2046 = vpop.f32.mrf.mxu0
    %v2047 = vadd.f32 0.0, %v2046
    %v2048 = vpop.f32.mrf.mxu0
    %2049 = vmatprep.mubr.f32.mxu0 0.0
    %2050 = vmatmul.mubr.f32.gmra.mxu0 %v1874
    %v2051 = vpop.f32.mrf.mxu0
    %v2052 = vadd.f32 0.0, %v2051
    %v2053 = vpop.f32.mrf.mxu0
    %2054 = vdwg.mxu0
    %2055 = vmatprep.subr.mxu0 0.0
    %2056 = vmatpush1.msra.mxu0 %v1979
    %2057 = vmatprep.subr.mxu0 0.0
    %2058 = vmatpush1.msra.mxu0 %v1978
    %2059 = vmatprep.subr.mxu0 0.0
    %2060 = vmatpush1.msra.mxu0 %v1977
    %2061 = vmatprep.subr.mxu0 0.0
    %2062 = vmatpush1.msra.mxu0 %v1976
    %2063 = vmatprep.subr.mxu0 0.0
    %2064 = vmatpush1.msra.mxu0 %v1975
    %2065 = vmatprep.subr.mxu0 0.0
    %2066 = vmatpush1.msra.mxu0 %v1974
    %2067 = vmatprep.subr.mxu0 0.0
    %2068 = vmatpush1.msra.mxu0 %v1973
    %2069 = vmatprep.subr.mxu0 0.0
    %2070 = vmatpush1.msra.mxu0 %v1972
    %2071 = vmatprep.subr.mxu0 0.0
    %2072 = vmatpush1.msra.mxu0 %v1971
    %2073 = vmatprep.subr.mxu0 0.0
    %2074 = vmatpush1.msra.mxu0 %v1970
    %2075 = vmatprep.subr.mxu0 0.0
    %2076 = vmatpush1.msra.mxu0 %v1969
    %2077 = vmatprep.subr.mxu0 0.0
    %2078 = vmatpush1.msra.mxu0 %v1968
    %2079 = vmatprep.subr.mxu0 0.0
    %2080 = vmatpush1.msra.mxu0 %v1967
    %2081 = vmatprep.subr.mxu0 0.0
    %2082 = vmatpush1.msra.mxu0 %v1966
    %2083 = vmatprep.subr.mxu0 0.0
    %2084 = vmatpush1.msra.mxu0 %v1965
    %2085 = vmatprep.subr.mxu0 0.0
    %2086 = vmatpush1.msra.mxu0 %v1964
    %2087 = vmatprep.subr.mxu0 0.0
    %2088 = vmatpush2.msra.mxu0 0.0
    %2089 = vmatprep.subr.mxu0 0.0
    %2090 = vmatpush2.msra.mxu0 0.0
    %2091 = vmatprep.subr.mxu0 0.0
    %2092 = vmatpush2.msra.mxu0 0.0
    %2093 = vmatprep.subr.mxu0 0.0
    %2094 = vmatpush2.msra.mxu0 0.0
    %2095 = vmatprep.subr.mxu0 0.0
    %2096 = vmatpush2.msra.mxu0 0.0
    %2097 = vmatprep.subr.mxu0 0.0
    %2098 = vmatpush2.msra.mxu0 0.0
    %2099 = vmatprep.subr.mxu0 0.0
    %2100 = vmatpush2.msra.mxu0 0.0
    %2101 = vmatprep.subr.mxu0 0.0
    %2102 = vmatpush2.msra.mxu0 0.0
    %2103 = vmatprep.subr.mxu0 0.0
    %2104 = vmatpush2.msra.mxu0 0.0
    %2105 = vmatprep.subr.mxu0 0.0
    %2106 = vmatpush2.msra.mxu0 0.0
    %2107 = vmatprep.subr.mxu0 0.0
    %2108 = vmatpush2.msra.mxu0 0.0
    %2109 = vmatprep.subr.mxu0 0.0
    %2110 = vmatpush2.msra.mxu0 0.0
    %2111 = vmatprep.subr.mxu0 0.0
    %2112 = vmatpush2.msra.mxu0 0.0
    %2113 = vmatprep.subr.mxu0 0.0
    %2114 = vmatpush2.msra.mxu0 0.0
    %2115 = vmatprep.subr.mxu0 0.0
    %2116 = vmatpush2.msra.mxu0 0.0
    %2117 = vmatprep.subr.mxu0 0.0
    %2118 = vmatpush2.msra.mxu0 0.0
    %2119 = vmatprep.mubr.f32.mxu0 0.0
    %2120 = vmatmul.mubr.f32.gmra.mxu0 %v1961
    %v2121 = vpop.f32.mrf.mxu0
    %v2122 = vadd.f32 0.0, %v2121
    %v2123 = vpop.f32.mrf.mxu0
    %2124 = vdwg.mxu0
    %v2125 = vld [vmem:[%s9] sm:$0x3]
    %v2126 = vld [vmem:[%s8] sm:$0xff]
    %v2127 = vld [vmem:[%s8 + $0x8] sm:$0x3]
    %v2128 = vmul.f32 %v2047, %v2126
    %v2129 = vmul.f32 %v2052, %v2127
    %vm2130 = vcmask 80896
    %v2132 = vsel %vm2130, %v2125, 0
    %vm2134 = vcmask 1041408
    %v2136 = vsel %vm2134, %v2129, 0
    %2138 = vmatprep.subr.mxu0 0.0
    %2139 = vmatpush1.msra.mxu0 0.0
    %2140 = vmatprep.subr.mxu0 0.0
    %2141 = vmatpush1.msra.mxu0 0.0
    %2142 = vmatprep.subr.mxu0 0.0
    %2143 = vmatpush1.msra.mxu0 0.0
    %2144 = vmatprep.subr.mxu0 0.0
    %2145 = vmatpush1.msra.mxu0 0.0
    %2146 = vmatprep.subr.mxu0 0.0
    %2147 = vmatpush1.msra.mxu0 0.0
    %2148 = vmatprep.subr.mxu0 0.0
    %2149 = vmatpush1.msra.mxu0 0.0
    %2150 = vmatprep.subr.mxu0 0.0
    %2151 = vmatpush1.msra.mxu0 0.0
    %2152 = vmatprep.subr.mxu0 0.0
    %2153 = vmatpush1.msra.mxu0 0.0
    %2154 = vmatprep.subr.mxu0 0.0
    %2155 = vmatpush1.msra.mxu0 0.0
    %2156 = vmatprep.subr.mxu0 0.0
    %2157 = vmatpush1.msra.mxu0 0.0
    %2158 = vmatprep.subr.mxu0 0.0
    %2159 = vmatpush1.msra.mxu0 0.0
    %2160 = vmatprep.subr.mxu0 0.0
    %2161 = vmatpush1.msra.mxu0 0.0
    %2162 = vmatprep.subr.mxu0 0.0
    %2163 = vmatpush1.msra.mxu0 0.0
    %2164 = vmatprep.subr.mxu0 0.0
    %2165 = vmatpush1.msra.mxu0 0.0
    %2166 = vmatprep.subr.mxu0 0.0
    %2167 = vmatpush1.msra.mxu0 %v2136
    %2168 = vmatprep.subr.mxu0 0.0
    %2169 = vmatpush1.msra.mxu0 %v2128
    %2170 = vmatprep.subr.mxu0 0.0
    %2171 = vmatpush2.msra.mxu0 0.0
    %2172 = vmatprep.subr.mxu0 0.0
    %2173 = vmatpush2.msra.mxu0 0.0
    %2174 = vmatprep.subr.mxu0 0.0
    %2175 = vmatpush2.msra.mxu0 0.0
    %2176 = vmatprep.subr.mxu0 0.0
    %2177 = vmatpush2.msra.mxu0 0.0
    %2178 = vmatprep.subr.mxu0 0.0
    %2179 = vmatpush2.msra.mxu0 0.0
    %2180 = vmatprep.subr.mxu0 0.0
    %2181 = vmatpush2.msra.mxu0 0.0
    %2182 = vmatprep.subr.mxu0 0.0
    %2183 = vmatpush2.msra.mxu0 0.0
    %2184 = vmatprep.subr.mxu0 0.0
    %2185 = vmatpush2.msra.mxu0 0.0
    %2186 = vmatprep.subr.mxu0 0.0
    %2187 = vmatpush2.msra.mxu0 0.0
    %2188 = vmatprep.subr.mxu0 0.0
    %2189 = vmatpush2.msra.mxu0 0.0
    %2190 = vmatprep.subr.mxu0 0.0
    %2191 = vmatpush2.msra.mxu0 0.0
    %2192 = vmatprep.subr.mxu0 0.0
    %2193 = vmatpush2.msra.mxu0 0.0
    %2194 = vmatprep.subr.mxu0 0.0
    %2195 = vmatpush2.msra.mxu0 0.0
    %2196 = vmatprep.subr.mxu0 0.0
    %2197 = vmatpush2.msra.mxu0 0.0
    %2198 = vmatprep.subr.mxu0 0.0
    %2199 = vmatpush2.msra.mxu0 0.0
    %2200 = vmatprep.subr.mxu0 0.0
    %2201 = vmatpush2.msra.mxu0 0.0
    %2202 = vmatprep.mubr.f32.mxu0 0.0
    %2203 = vmatmul.mubr.f32.gmra.mxu0 %v2132
    %v2204 = vpop.f32.mrf.mxu0
    %v2205 = vadd.f32 %v2122, %v2204
    %v2206 = vpop.f32.mrf.mxu0
    %2207 = vdwg.mxu0
    %v2208 = vld [vmem:[%s6 + $0x12] ss:$0 sm:$0xff]
    %v2209 = vadd.f32 %v2205, %v2208
    %v2210 = vsel %vm2134, %v2209, -inf
    %2211 = vmax.xlane.f32.xlu0 %v2210
    %v2212 = vpop.xlane.xlu0 %2211
    %v2213 = vsub.f32 %v2209, %v2212
    %v2214 = vmul.f32 %v2213, 1.442695
    %v2215 = vpow.pop %v2214
    %v2216 = vsel %vm2134, %v2215, 0.0
    %2217 = vadd.xlane.f32.xlu0 %v2216
    %v2218 = vpop.xlane.xlu0 %2217
    %v2219 = vrcp.pop %v2218
    %v2220 = vmul.f32 %v2215, %v2219
    %2221 = vst [vmem:[%s14] sm:$0x3] %v2220
    %v2222 = vld [vmem:[%s10] sm:$0x1f]
    %v2223 = vld [vmem:[%s10 + $0x8] sm:$0x1f]
    %vm2224 = vcmask 39936
    %v2226 = vsel %vm2224, %v2220, 0
    %vm2228 = vcmask 1044480
    %v2230 = vsel %vm2228, %v2222, 0
    %v2233 = vsel %vm2228, %v2223, 0
    %2235 = vmatprep.subr.mxu0 0.0
    %2236 = vmatpush1.msra.mxu0 0.0
    %2237 = vmatprep.subr.mxu0 0.0
    %2238 = vmatpush1.msra.mxu0 0.0
    %2239 = vmatprep.subr.mxu0 0.0
    %2240 = vmatpush1.msra.mxu0 0.0
    %2241 = vmatprep.subr.mxu0 0.0
    %2242 = vmatpush1.msra.mxu0 0.0
    %2243 = vmatprep.subr.mxu0 0.0
    %2244 = vmatpush1.msra.mxu0 0.0
    %2245 = vmatprep.subr.mxu0 0.0
    %2246 = vmatpush1.msra.mxu0 0.0
    %2247 = vmatprep.subr.mxu0 0.0
    %2248 = vmatpush1.msra.mxu0 0.0
    %2249 = vmatprep.subr.mxu0 0.0
    %2250 = vmatpush1.msra.mxu0 0.0
    %2251 = vmatprep.subr.mxu0 0.0
    %2252 = vmatpush1.msra.mxu0 0.0
    %2253 = vmatprep.subr.mxu0 0.0
    %2254 = vmatpush1.msra.mxu0 0.0
    %2255 = vmatprep.subr.mxu0 0.0
    %2256 = vmatpush1.msra.mxu0 0.0
    %2257 = vmatprep.subr.mxu0 0.0
    %2258 = vmatpush1.msra.mxu0 0.0
    %2259 = vmatprep.subr.mxu0 0.0
    %2260 = vmatpush1.msra.mxu0 0.0
    %2261 = vmatprep.subr.mxu0 0.0
    %2262 = vmatpush1.msra.mxu0 0.0
    %2263 = vmatprep.subr.mxu0 0.0
    %2264 = vmatpush1.msra.mxu0 0.0
    %2265 = vmatprep.subr.mxu0 %v2233
    %2266 = vmatpush1.msra.mxu0 %v2230
    %2267 = vmatprep.subr.mxu0 0.0
    %2268 = vmatpush2.msra.mxu0 0.0
    %2269 = vmatprep.subr.mxu0 0.0
    %2270 = vmatpush2.msra.mxu0 0.0
    %2271 = vmatprep.subr.mxu0 0.0
    %2272 = vmatpush2.msra.mxu0 0.0
    %2273 = vmatprep.subr.mxu0 0.0
    %2274 = vmatpush2.msra.mxu0 0.0
    %2275 = vmatprep.subr.mxu0 0.0
    %2276 = vmatpush2.msra.mxu0 0.0
    %2277 = vmatprep.subr.mxu0 0.0
    %2278 = vmatpush2.msra.mxu0 0.0
    %2279 = vmatprep.subr.mxu0 0.0
    %2280 = vmatpush2.msra.mxu0 0.0
    %2281 = vmatprep.subr.mxu0 0.0
    %2282 = vmatpush2.msra.mxu0 0.0
    %2283 = vmatprep.subr.mxu0 0.0
    %2284 = vmatpush2.msra.mxu0 0.0
    %2285 = vmatprep.subr.mxu0 0.0
    %2286 = vmatpush2.msra.mxu0 0.0
    %2287 = vmatprep.subr.mxu0 0.0
    %2288 = vmatpush2.msra.mxu0 0.0
    %2289 = vmatprep.subr.mxu0 0.0
    %2290 = vmatpush2.msra.mxu0 0.0
    %2291 = vmatprep.subr.mxu0 0.0
    %2292 = vmatpush2.msra.mxu0 0.0
    %2293 = vmatprep.subr.mxu0 0.0
    %2294 = vmatpush2.msra.mxu0 0.0
    %2295 = vmatprep.subr.mxu0 0.0
    %2296 = vmatpush2.msra.mxu0 0.0
    %2297 = vmatprep.subr.mxu0 0.0
    %2298 = vmatpush2.msra.mxu0 0.0
    %2299 = vmatprep.mubr.f32.mxu0 0.0
    %2300 = vmatmul.mubr.f32.gmra.mxu0 %v2226
    %v2301 = vpop.f32.mrf.mxu0
    %v2302 = vadd.f32 0.0, %v2301
    %v2303 = vpop.f32.mrf.mxu0
    %v2304 = vadd.f32 0.0, %v2303
    %2305 = vdwg.mxu0
    %v2306 = vld [vmem:[%s11] sm:$0xff]
    %v2307 = vld [vmem:[%s11 + $0x8] sm:$0xff]
    %v2308 = vld [vmem:[%s11 + $0x10] sm:$0xff]
    %v2309 = vld [vmem:[%s11 + $0x18] sm:$0xff]
    %v2310 = vld [vmem:[%s11 + $0x20] sm:$0xff]
    %v2311 = vld [vmem:[%s11 + $0x28] sm:$0xff]
    %v2312 = vld [vmem:[%s11 + $0x30] sm:$0xff]
    %v2313 = vld [vmem:[%s11 + $0x38] sm:$0xff]
    %v2314 = vld [vmem:[%s11 + $0x40] sm:$0xff]
    %v2315 = vld [vmem:[%s11 + $0x48] sm:$0xff]
    %v2316 = vld [vmem:[%s11 + $0x50] sm:$0xff]
    %v2317 = vld [vmem:[%s11 + $0x58] sm:$0xff]
    %v2318 = vld [vmem:[%s11 + $0x60] sm:$0xff]
    %v2319 = vld [vmem:[%s11 + $0x68] sm:$0xff]
    %v2320 = vld [vmem:[%s11 + $0x70] sm:$0xff]
    %v2321 = vld [vmem:[%s11 + $0x78] sm:$0xff]
    %v2322 = vld [vmem:[%s11 + $0x80] sm:$0xff]
    %v2323 = vld [vmem:[%s11 + $0x88] sm:$0xff]
    %v2324 = vld [vmem:[%s11 + $0x90] sm:$0xff]
    %v2325 = vld [vmem:[%s11 + $0x98] sm:$0xff]
    %v2326 = vld [vmem:[%s11 + $0xa0] sm:$0xff]
    %v2327 = vld [vmem:[%s11 + $0xa8] sm:$0xff]
    %v2328 = vld [vmem:[%s11 + $0xb0] sm:$0xff]
    %v2329 = vld [vmem:[%s11 + $0xb8] sm:$0xff]
    %v2330 = vld [vmem:[%s11 + $0xc0] sm:$0xff]
    %v2331 = vld [vmem:[%s11 + $0xc8] sm:$0xff]
    %v2332 = vld [vmem:[%s11 + $0xd0] sm:$0xff]
    %v2333 = vld [vmem:[%s11 + $0xd8] sm:$0xff]
    %v2334 = vld [vmem:[%s11 + $0xe0] sm:$0xff]
    %v2335 = vld [vmem:[%s11 + $0xe8] sm:$0xff]
    %v2336 = vld [vmem:[%s11 + $0xf0] sm:$0xff]
    %v2337 = vld [vmem:[%s11 + $0xf8] sm:$0xff]
    %v2338 = vld [vmem:[%s11 + $0x100] sm:$0xff]
    %v2339 = vld [vmem:[%s11 + $0x108] sm:$0xff]
    %v2340 = vld [vmem:[%s11 + $0x110] sm:$0xff]
    %v2341 = vld [vmem:[%s11 + $0x118] sm:$0xff]
    %v2342 = vld [vmem:[%s11 + $0x120] sm:$0xff]
    %v2343 = vld [vmem:[%s11 + $0x128] sm:$0xff]
    %v2344 = vld [vmem:[%s11 + $0x130] sm:$0xff]
    %v2345 = vld [vmem:[%s11 + $0x138] sm:$0xff]
    %v2346 = vld [vmem:[%s11 + $0x140] sm:$0xff]
    %v2347 = vld [vmem:[%s11 + $0x148] sm:$0xff]
    %v2348 = vld [vmem:[%s11 + $0x150] sm:$0xff]
    %v2349 = vld [vmem:[%s11 + $0x158] sm:$0xff]
    %v2350 = vld [vmem:[%s11 + $0x160] sm:$0xff]
    %v2351 = vld [vmem:[%s11 + $0x168] sm:$0xff]
    %v2352 = vld [vmem:[%s11 + $0x170] sm:$0xff]
    %v2353 = vld [vmem:[%s11 + $0x178] sm:$0xff]
    %v2354 = vld [vmem:[%s11 + $0x180] sm:$0xff]
    %v2355 = vld [vmem:[%s11 + $0x188] sm:$0xff]
    %v2356 = vld [vmem:[%s11 + $0x190] sm:$0xff]
    %v2357 = vld [vmem:[%s11 + $0x198] sm:$0xff]
    %v2358 = vld [vmem:[%s11 + $0x1a0] sm:$0xff]
    %v2359 = vld [vmem:[%s11 + $0x1a8] sm:$0xff]
    %v2360 = vld [vmem:[%s11 + $0x1b0] sm:$0xff]
    %v2361 = vld [vmem:[%s11 + $0x1b8] sm:$0xff]
    %v2362 = vld [vmem:[%s11 + $0x1c0] sm:$0xff]
    %v2363 = vld [vmem:[%s11 + $0x1c8] sm:$0xff]
    %v2364 = vld [vmem:[%s11 + $0x1d0] sm:$0xff]
    %v2365 = vld [vmem:[%s11 + $0x1d8] sm:$0xff]
    %v2366 = vld [vmem:[%s11 + $0x1e0] sm:$0xff]
    %v2367 = vld [vmem:[%s11 + $0x1e8] sm:$0xff]
    %v2368 = vld [vmem:[%s11 + $0x1f0] sm:$0xff]
    %v2369 = vld [vmem:[%s11 + $0x1f8] sm:$0xff]
    %vm2370 = vcmask 15360
    %v2372 = vsel %vm2370, %v2306, 0
    %v2375 = vsel %vm2370, %v2307, 0
    %v2378 = vsel %vm2370, %v2308, 0
    %v2381 = vsel %vm2370, %v2309, 0
    %v2384 = vsel %vm2370, %v2310, 0
    %v2387 = vsel %vm2370, %v2311, 0
    %v2390 = vsel %vm2370, %v2312, 0
    %v2393 = vsel %vm2370, %v2313, 0
    %v2396 = vsel %vm2370, %v2314, 0
    %v2399 = vsel %vm2370, %v2315, 0
    %v2402 = vsel %vm2370, %v2316, 0
    %v2405 = vsel %vm2370, %v2317, 0
    %v2408 = vsel %vm2370, %v2318, 0
    %v2411 = vsel %vm2370, %v2319, 0
    %v2414 = vsel %vm2370, %v2320, 0
    %v2417 = vsel %vm2370, %v2321, 0
    %v2420 = vsel %vm2370, %v2322, 0
    %v2423 = vsel %vm2370, %v2323, 0
    %v2426 = vsel %vm2370, %v2324, 0
    %v2429 = vsel %vm2370, %v2325, 0
    %v2432 = vsel %vm2370, %v2326, 0
    %v2435 = vsel %vm2370, %v2327, 0
    %v2438 = vsel %vm2370, %v2328, 0
    %v2441 = vsel %vm2370, %v2329, 0
    %v2444 = vsel %vm2370, %v2330, 0
    %v2447 = vsel %vm2370, %v2331, 0
    %v2450 = vsel %vm2370, %v2332, 0
    %v2453 = vsel %vm2370, %v2333, 0
    %v2456 = vsel %vm2370, %v2334, 0
    %v2459 = vsel %vm2370, %v2335, 0
    %v2462 = vsel %vm2370, %v2336, 0
    %v2465 = vsel %vm2370, %v2337, 0
    %v2468 = vsel %vm2370, %v2338, 0
    %v2471 = vsel %vm2370, %v2339, 0
    %v2474 = vsel %vm2370, %v2340, 0
    %v2477 = vsel %vm2370, %v2341, 0
    %v2480 = vsel %vm2370, %v2342, 0
    %v2483 = vsel %vm2370, %v2343, 0
    %v2486 = vsel %vm2370, %v2344, 0
    %v2489 = vsel %vm2370, %v2345, 0
    %v2492 = vsel %vm2370, %v2346, 0
    %v2495 = vsel %vm2370, %v2347, 0
    %v2498 = vsel %vm2370, %v2348, 0
    %v2501 = vsel %vm2370, %v2349, 0
    %v2504 = vsel %vm2370, %v2350, 0
    %v2507 = vsel %vm2370, %v2351, 0
    %v2510 = vsel %vm2370, %v2352, 0
    %v2513 = vsel %vm2370, %v2353, 0
    %v2516 = vsel %vm2370, %v2354, 0
    %v2519 = vsel %vm2370, %v2355, 0
    %v2522 = vsel %vm2370, %v2356, 0
    %v2525 = vsel %vm2370, %v2357, 0
    %v2528 = vsel %vm2370, %v2358, 0
    %v2531 = vsel %vm2370, %v2359, 0
    %v2534 = vsel %vm2370, %v2360, 0
    %v2537 = vsel %vm2370, %v2361, 0
    %v2540 = vsel %vm2370, %v2362, 0
    %v2543 = vsel %vm2370, %v2363, 0
    %v2546 = vsel %vm2370, %v2364, 0
    %v2549 = vsel %vm2370, %v2365, 0
    %v2552 = vsel %vm2370, %v2366, 0
    %v2555 = vsel %vm2370, %v2367, 0
    %v2558 = vsel %vm2370, %v2368, 0
    %v2561 = vsel %vm2370, %v2369, 0
    %v2564 = vsel %vm2134, %v2302, 0
    %v2567 = vsel %vm2134, %v2304, 0
    %2569 = vmatprep.subr.mxu0 0.0
    %2570 = vmatpush1.msra.mxu0 0.0
    %2571 = vmatprep.subr.mxu0 0.0
    %2572 = vmatpush1.msra.mxu0 0.0
    %2573 = vmatprep.subr.mxu0 0.0
    %2574 = vmatpush1.msra.mxu0 0.0
    %2575 = vmatprep.subr.mxu0 0.0
    %2576 = vmatpush1.msra.mxu0 0.0
    %2577 = vmatprep.subr.mxu0 0.0
    %2578 = vmatpush1.msra.mxu0 0.0
    %2579 = vmatprep.subr.mxu0 0.0
    %2580 = vmatpush1.msra.mxu0 0.0
    %2581 = vmatprep.subr.mxu0 0.0
    %2582 = vmatpush1.msra.mxu0 0.0
    %2583 = vmatprep.subr.mxu0 0.0
    %2584 = vmatpush1.msra.mxu0 0.0
    %2585 = vmatprep.subr.mxu0 0.0
    %2586 = vmatpush1.msra.mxu0 0.0
    %2587 = vmatprep.subr.mxu0 0.0
    %2588 = vmatpush1.msra.mxu0 0.0
    %2589 = vmatprep.subr.mxu0 0.0
    %2590 = vmatpush1.msra.mxu0 0.0
    %2591 = vmatprep.subr.mxu0 0.0
    %2592 = vmatpush1.msra.mxu0 0.0
    %2593 = vmatprep.subr.mxu0 0.0
    %2594 = vmatpush1.msra.mxu0 0.0
    %2595 = vmatprep.subr.mxu0 0.0
    %2596 = vmatpush1.msra.mxu0 0.0
    %2597 = vmatprep.subr.mxu0 0.0
    %2598 = vmatpush1.msra.mxu0 0.0
    %2599 = vmatprep.subr.mxu0 %v2567
    %2600 = vmatpush1.msra.mxu0 %v2564
    %2601 = vmatprep.subr.mxu0 0.0
    %2602 = vmatpush2.msra.mxu0 0.0
    %2603 = vmatprep.subr.mxu0 0.0
    %2604 = vmatpush2.msra.mxu0 0.0
    %2605 = vmatprep.subr.mxu0 0.0
    %2606 = vmatpush2.msra.mxu0 0.0
    %2607 = vmatprep.subr.mxu0 0.0
    %2608 = vmatpush2.msra.mxu0 0.0
    %2609 = vmatprep.subr.mxu0 0.0
    %2610 = vmatpush2.msra.mxu0 0.0
    %2611 = vmatprep.subr.mxu0 0.0
    %2612 = vmatpush2.msra.mxu0 0.0
    %2613 = vmatprep.subr.mxu0 0.0
    %2614 = vmatpush2.msra.mxu0 0.0
    %2615 = vmatprep.subr.mxu0 0.0
    %2616 = vmatpush2.msra.mxu0 0.0
    %2617 = vmatprep.subr.mxu0 0.0
    %2618 = vmatpush2.msra.mxu0 0.0
    %2619 = vmatprep.subr.mxu0 0.0
    %2620 = vmatpush2.msra.mxu0 0.0
    %2621 = vmatprep.subr.mxu0 0.0
    %2622 = vmatpush2.msra.mxu0 0.0
    %2623 = vmatprep.subr.mxu0 0.0
    %2624 = vmatpush2.msra.mxu0 0.0
    %2625 = vmatprep.subr.mxu0 0.0
    %2626 = vmatpush2.msra.mxu0 0.0
    %2627 = vmatprep.subr.mxu0 0.0
    %2628 = vmatpush2.msra.mxu0 0.0
    %2629 = vmatprep.subr.mxu0 0.0
    %2630 = vmatpush2.msra.mxu0 0.0
    %2631 = vmatprep.subr.mxu0 0.0
    %2632 = vmatpush2.msra.mxu0 0.0
    %2633 = vmatprep.mubr.f32.mxu0 0.0
    %2634 = vmatmul.mubr.f32.gmra.mxu0 %v2372
    %v2635 = vpop.f32.mrf.mxu0
    %v2636 = vadd.f32 0.0, %v2635
    %v2637 = vpop.f32.mrf.mxu0
    %v2638 = vadd.f32 0.0, %v2637
    %2639 = vmatprep.mubr.f32.mxu0 0.0
    %2640 = vmatmul.mubr.f32.gmra.mxu0 %v2375
    %v2641 = vpop.f32.mrf.mxu0
    %v2642 = vadd.f32 0.0, %v2641
    %v2643 = vpop.f32.mrf.mxu0
    %v2644 = vadd.f32 0.0, %v2643
    %2645 = vmatprep.mubr.f32.mxu0 0.0
    %2646 = vmatmul.mubr.f32.gmra.mxu0 %v2378
    %v2647 = vpop.f32.mrf.mxu0
    %v2648 = vadd.f32 0.0, %v2647
    %v2649 = vpop.f32.mrf.mxu0
    %v2650 = vadd.f32 0.0, %v2649
    %2651 = vmatprep.mubr.f32.mxu0 0.0
    %2652 = vmatmul.mubr.f32.gmra.mxu0 %v2381
    %v2653 = vpop.f32.mrf.mxu0
    %v2654 = vadd.f32 0.0, %v2653
    %v2655 = vpop.f32.mrf.mxu0
    %v2656 = vadd.f32 0.0, %v2655
    %2657 = vmatprep.mubr.f32.mxu0 0.0
    %2658 = vmatmul.mubr.f32.gmra.mxu0 %v2384
    %v2659 = vpop.f32.mrf.mxu0
    %v2660 = vadd.f32 0.0, %v2659
    %v2661 = vpop.f32.mrf.mxu0
    %v2662 = vadd.f32 0.0, %v2661
    %2663 = vmatprep.mubr.f32.mxu0 0.0
    %2664 = vmatmul.mubr.f32.gmra.mxu0 %v2387
    %v2665 = vpop.f32.mrf.mxu0
    %v2666 = vadd.f32 0.0, %v2665
    %v2667 = vpop.f32.mrf.mxu0
    %v2668 = vadd.f32 0.0, %v2667
    %2669 = vmatprep.mubr.f32.mxu0 0.0
    %2670 = vmatmul.mubr.f32.gmra.mxu0 %v2390
    %v2671 = vpop.f32.mrf.mxu0
    %v2672 = vadd.f32 0.0, %v2671
    %v2673 = vpop.f32.mrf.mxu0
    %v2674 = vadd.f32 0.0, %v2673
    %2675 = vmatprep.mubr.f32.mxu0 0.0
    %2676 = vmatmul.mubr.f32.gmra.mxu0 %v2393
    %v2677 = vpop.f32.mrf.mxu0
    %v2678 = vadd.f32 0.0, %v2677
    %v2679 = vpop.f32.mrf.mxu0
    %v2680 = vadd.f32 0.0, %v2679
    %2681 = vmatprep.mubr.f32.mxu0 0.0
    %2682 = vmatmul.mubr.f32.gmra.mxu0 %v2396
    %v2683 = vpop.f32.mrf.mxu0
    %v2684 = vadd.f32 0.0, %v2683
    %v2685 = vpop.f32.mrf.mxu0
    %v2686 = vadd.f32 0.0, %v2685
    %2687 = vmatprep.mubr.f32.mxu0 0.0
    %2688 = vmatmul.mubr.f32.gmra.mxu0 %v2399
    %v2689 = vpop.f32.mrf.mxu0
    %v2690 = vadd.f32 0.0, %v2689
    %v2691 = vpop.f32.mrf.mxu0
    %v2692 = vadd.f32 0.0, %v2691
    %2693 = vmatprep.mubr.f32.mxu0 0.0
    %2694 = vmatmul.mubr.f32.gmra.mxu0 %v2402
    %v2695 = vpop.f32.mrf.mxu0
    %v2696 = vadd.f32 0.0, %v2695
    %v2697 = vpop.f32.mrf.mxu0
    %v2698 = vadd.f32 0.0, %v2697
    %2699 = vmatprep.mubr.f32.mxu0 0.0
    %2700 = vmatmul.mubr.f32.gmra.mxu0 %v2405
    %v2701 = vpop.f32.mrf.mxu0
    %v2702 = vadd.f32 0.0, %v2701
    %v2703 = vpop.f32.mrf.mxu0
    %v2704 = vadd.f32 0.0, %v2703
    %2705 = vmatprep.mubr.f32.mxu0 0.0
    %2706 = vmatmul.mubr.f32.gmra.mxu0 %v2408
    %v2707 = vpop.f32.mrf.mxu0
    %v2708 = vadd.f32 0.0, %v2707
    %v2709 = vpop.f32.mrf.mxu0
    %v2710 = vadd.f32 0.0, %v2709
    %2711 = vmatprep.mubr.f32.mxu0 0.0
    %2712 = vmatmul.mubr.f32.gmra.mxu0 %v2411
    %v2713 = vpop.f32.mrf.mxu0
    %v2714 = vadd.f32 0.0, %v2713
    %v2715 = vpop.f32.mrf.mxu0
    %v2716 = vadd.f32 0.0, %v2715
    %2717 = vmatprep.mubr.f32.mxu0 0.0
    %2718 = vmatmul.mubr.f32.gmra.mxu0 %v2414
    %v2719 = vpop.f32.mrf.mxu0
    %v2720 = vadd.f32 0.0, %v2719
    %v2721 = vpop.f32.mrf.mxu0
    %v2722 = vadd.f32 0.0, %v2721
    %2723 = vmatprep.mubr.f32.mxu0 0.0
    %2724 = vmatmul.mubr.f32.gmra.mxu0 %v2417
    %v2725 = vpop.f32.mrf.mxu0
    %v2726 = vadd.f32 0.0, %v2725
    %v2727 = vpop.f32.mrf.mxu0
    %v2728 = vadd.f32 0.0, %v2727
    %2729 = vmatprep.mubr.f32.mxu0 0.0
    %2730 = vmatmul.mubr.f32.gmra.mxu0 %v2420
    %v2731 = vpop.f32.mrf.mxu0
    %v2732 = vadd.f32 0.0, %v2731
    %v2733 = vpop.f32.mrf.mxu0
    %v2734 = vadd.f32 0.0, %v2733
    %2735 = vmatprep.mubr.f32.mxu0 0.0
    %2736 = vmatmul.mubr.f32.gmra.mxu0 %v2423
    %v2737 = vpop.f32.mrf.mxu0
    %v2738 = vadd.f32 0.0, %v2737
    %v2739 = vpop.f32.mrf.mxu0
    %v2740 = vadd.f32 0.0, %v2739
    %2741 = vmatprep.mubr.f32.mxu0 0.0
    %2742 = vmatmul.mubr.f32.gmra.mxu0 %v2426
    %v2743 = vpop.f32.mrf.mxu0
    %v2744 = vadd.f32 0.0, %v2743
    %v2745 = vpop.f32.mrf.mxu0
    %v2746 = vadd.f32 0.0, %v2745
    %2747 = vmatprep.mubr.f32.mxu0 0.0
    %2748 = vmatmul.mubr.f32.gmra.mxu0 %v2429
    %v2749 = vpop.f32.mrf.mxu0
    %v2750 = vadd.f32 0.0, %v2749
    %v2751 = vpop.f32.mrf.mxu0
    %v2752 = vadd.f32 0.0, %v2751
    %2753 = vmatprep.mubr.f32.mxu0 0.0
    %2754 = vmatmul.mubr.f32.gmra.mxu0 %v2432
    %v2755 = vpop.f32.mrf.mxu0
    %v2756 = vadd.f32 0.0, %v2755
    %v2757 = vpop.f32.mrf.mxu0
    %v2758 = vadd.f32 0.0, %v2757
    %2759 = vmatprep.mubr.f32.mxu0 0.0
    %2760 = vmatmul.mubr.f32.gmra.mxu0 %v2435
    %v2761 = vpop.f32.mrf.mxu0
    %v2762 = vadd.f32 0.0, %v2761
    %v2763 = vpop.f32.mrf.mxu0
    %v2764 = vadd.f32 0.0, %v2763
    %2765 = vmatprep.mubr.f32.mxu0 0.0
    %2766 = vmatmul.mubr.f32.gmra.mxu0 %v2438
    %v2767 = vpop.f32.mrf.mxu0
    %v2768 = vadd.f32 0.0, %v2767
    %v2769 = vpop.f32.mrf.mxu0
    %v2770 = vadd.f32 0.0, %v2769
    %2771 = vmatprep.mubr.f32.mxu0 0.0
    %2772 = vmatmul.mubr.f32.gmra.mxu0 %v2441
    %v2773 = vpop.f32.mrf.mxu0
    %v2774 = vadd.f32 0.0, %v2773
    %v2775 = vpop.f32.mrf.mxu0
    %v2776 = vadd.f32 0.0, %v2775
    %2777 = vmatprep.mubr.f32.mxu0 0.0
    %2778 = vmatmul.mubr.f32.gmra.mxu0 %v2444
    %v2779 = vpop.f32.mrf.mxu0
    %v2780 = vadd.f32 0.0, %v2779
    %v2781 = vpop.f32.mrf.mxu0
    %v2782 = vadd.f32 0.0, %v2781
    %2783 = vmatprep.mubr.f32.mxu0 0.0
    %2784 = vmatmul.mubr.f32.gmra.mxu0 %v2447
    %v2785 = vpop.f32.mrf.mxu0
    %v2786 = vadd.f32 0.0, %v2785
    %v2787 = vpop.f32.mrf.mxu0
    %v2788 = vadd.f32 0.0, %v2787
    %2789 = vmatprep.mubr.f32.mxu0 0.0
    %2790 = vmatmul.mubr.f32.gmra.mxu0 %v2450
    %v2791 = vpop.f32.mrf.mxu0
    %v2792 = vadd.f32 0.0, %v2791
    %v2793 = vpop.f32.mrf.mxu0
    %v2794 = vadd.f32 0.0, %v2793
    %2795 = vmatprep.mubr.f32.mxu0 0.0
    %2796 = vmatmul.mubr.f32.gmra.mxu0 %v2453
    %v2797 = vpop.f32.mrf.mxu0
    %v2798 = vadd.f32 0.0, %v2797
    %v2799 = vpop.f32.mrf.mxu0
    %v2800 = vadd.f32 0.0, %v2799
    %2801 = vmatprep.mubr.f32.mxu0 0.0
    %2802 = vmatmul.mubr.f32.gmra.mxu0 %v2456
    %v2803 = vpop.f32.mrf.mxu0
    %v2804 = vadd.f32 0.0, %v2803
    %v2805 = vpop.f32.mrf.mxu0
    %v2806 = vadd.f32 0.0, %v2805
    %2807 = vmatprep.mubr.f32.mxu0 0.0
    %2808 = vmatmul.mubr.f32.gmra.mxu0 %v2459
    %v2809 = vpop.f32.mrf.mxu0
    %v2810 = vadd.f32 0.0, %v2809
    %v2811 = vpop.f32.mrf.mxu0
    %v2812 = vadd.f32 0.0, %v2811
    %2813 = vmatprep.mubr.f32.mxu0 0.0
    %2814 = vmatmul.mubr.f32.gmra.mxu0 %v2462
    %v2815 = vpop.f32.mrf.mxu0
    %v2816 = vadd.f32 0.0, %v2815
    %v2817 = vpop.f32.mrf.mxu0
    %v2818 = vadd.f32 0.0, %v2817
    %2819 = vmatprep.mubr.f32.mxu0 0.0
    %2820 = vmatmul.mubr.f32.gmra.mxu0 %v2465
    %v2821 = vpop.f32.mrf.mxu0
    %v2822 = vadd.f32 0.0, %v2821
    %v2823 = vpop.f32.mrf.mxu0
    %v2824 = vadd.f32 0.0, %v2823
    %2825 = vmatprep.mubr.f32.mxu0 0.0
    %2826 = vmatmul.mubr.f32.gmra.mxu0 %v2468
    %v2827 = vpop.f32.mrf.mxu0
    %v2828 = vadd.f32 0.0, %v2827
    %v2829 = vpop.f32.mrf.mxu0
    %v2830 = vadd.f32 0.0, %v2829
    %2831 = vmatprep.mubr.f32.mxu0 0.0
    %2832 = vmatmul.mubr.f32.gmra.mxu0 %v2471
    %v2833 = vpop.f32.mrf.mxu0
    %v2834 = vadd.f32 0.0, %v2833
    %v2835 = vpop.f32.mrf.mxu0
    %v2836 = vadd.f32 0.0, %v2835
    %2837 = vmatprep.mubr.f32.mxu0 0.0
    %2838 = vmatmul.mubr.f32.gmra.mxu0 %v2474
    %v2839 = vpop.f32.mrf.mxu0
    %v2840 = vadd.f32 0.0, %v2839
    %v2841 = vpop.f32.mrf.mxu0
    %v2842 = vadd.f32 0.0, %v2841
    %2843 = vmatprep.mubr.f32.mxu0 0.0
    %2844 = vmatmul.mubr.f32.gmra.mxu0 %v2477
    %v2845 = vpop.f32.mrf.mxu0
    %v2846 = vadd.f32 0.0, %v2845
    %v2847 = vpop.f32.mrf.mxu0
    %v2848 = vadd.f32 0.0, %v2847
    %2849 = vmatprep.mubr.f32.mxu0 0.0
    %2850 = vmatmul.mubr.f32.gmra.mxu0 %v2480
    %v2851 = vpop.f32.mrf.mxu0
    %v2852 = vadd.f32 0.0, %v2851
    %v2853 = vpop.f32.mrf.mxu0
    %v2854 = vadd.f32 0.0, %v2853
    %2855 = vmatprep.mubr.f32.mxu0 0.0
    %2856 = vmatmul.mubr.f32.gmra.mxu0 %v2483
    %v2857 = vpop.f32.mrf.mxu0
    %v2858 = vadd.f32 0.0, %v2857
    %v2859 = vpop.f32.mrf.mxu0
    %v2860 = vadd.f32 0.0, %v2859
    %2861 = vmatprep.mubr.f32.mxu0 0.0
    %2862 = vmatmul.mubr.f32.gmra.mxu0 %v2486
    %v2863 = vpop.f32.mrf.mxu0
    %v2864 = vadd.f32 0.0, %v2863
    %v2865 = vpop.f32.mrf.mxu0
    %v2866 = vadd.f32 0.0, %v2865
    %2867 = vmatprep.mubr.f32.mxu0 0.0
    %2868 = vmatmul.mubr.f32.gmra.mxu0 %v2489
    %v2869 = vpop.f32.mrf.mxu0
    %v2870 = vadd.f32 0.0, %v2869
    %v2871 = vpop.f32.mrf.mxu0
    %v2872 = vadd.f32 0.0, %v2871
    %2873 = vmatprep.mubr.f32.mxu0 0.0
    %2874 = vmatmul.mubr.f32.gmra.mxu0 %v2492
    %v2875 = vpop.f32.mrf.mxu0
    %v2876 = vadd.f32 0.0, %v2875
    %v2877 = vpop.f32.mrf.mxu0
    %v2878 = vadd.f32 0.0, %v2877
    %2879 = vmatprep.mubr.f32.mxu0 0.0
    %2880 = vmatmul.mubr.f32.gmra.mxu0 %v2495
    %v2881 = vpop.f32.mrf.mxu0
    %v2882 = vadd.f32 0.0, %v2881
    %v2883 = vpop.f32.mrf.mxu0
    %v2884 = vadd.f32 0.0, %v2883
    %2885 = vmatprep.mubr.f32.mxu0 0.0
    %2886 = vmatmul.mubr.f32.gmra.mxu0 %v2498
    %v2887 = vpop.f32.mrf.mxu0
    %v2888 = vadd.f32 0.0, %v2887
    %v2889 = vpop.f32.mrf.mxu0
    %v2890 = vadd.f32 0.0, %v2889
    %2891 = vmatprep.mubr.f32.mxu0 0.0
    %2892 = vmatmul.mubr.f32.gmra.mxu0 %v2501
    %v2893 = vpop.f32.mrf.mxu0
    %v2894 = vadd.f32 0.0, %v2893
    %v2895 = vpop.f32.mrf.mxu0
    %v2896 = vadd.f32 0.0, %v2895
    %2897 = vmatprep.mubr.f32.mxu0 0.0
    %2898 = vmatmul.mubr.f32.gmra.mxu0 %v2504
    %v2899 = vpop.f32.mrf.mxu0
    %v2900 = vadd.f32 0.0, %v2899
    %v2901 = vpop.f32.mrf.mxu0
    %v2902 = vadd.f32 0.0, %v2901
    %2903 = vmatprep.mubr.f32.mxu0 0.0
    %2904 = vmatmul.mubr.f32.gmra.mxu0 %v2507
    %v2905 = vpop.f32.mrf.mxu0
    %v2906 = vadd.f32 0.0, %v2905
    %v2907 = vpop.f32.mrf.mxu0
    %v2908 = vadd.f32 0.0, %v2907
    %2909 = vmatprep.mubr.f32.mxu0 0.0
    %2910 = vmatmul.mubr.f32.gmra.mxu0 %v2510
    %v2911 = vpop.f32.mrf.mxu0
    %v2912 = vadd.f32 0.0, %v2911
    %v2913 = vpop.f32.mrf.mxu0
    %v2914 = vadd.f32 0.0, %v2913
    %2915 = vmatprep.mubr.f32.mxu0 0.0
    %2916 = vmatmul.mubr.f32.gmra.mxu0 %v2513
    %v2917 = vpop.f32.mrf.mxu0
    %v2918 = vadd.f32 0.0, %v2917
    %v2919 = vpop.f32.mrf.mxu0
    %v2920 = vadd.f32 0.0, %v2919
    %2921 = vmatprep.mubr.f32.mxu0 0.0
    %2922 = vmatmul.mubr.f32.gmra.mxu0 %v2516
    %v2923 = vpop.f32.mrf.mxu0
    %v2924 = vadd.f32 0.0, %v2923
    %v2925 = vpop.f32.mrf.mxu0
    %v2926 = vadd.f32 0.0, %v2925
    %2927 = vmatprep.mubr.f32.mxu0 0.0
    %2928 = vmatmul.mubr.f32.gmra.mxu0 %v2519
    %v2929 = vpop.f32.mrf.mxu0
    %v2930 = vadd.f32 0.0, %v2929
    %v2931 = vpop.f32.mrf.mxu0
    %v2932 = vadd.f32 0.0, %v2931
    %2933 = vmatprep.mubr.f32.mxu0 0.0
    %2934 = vmatmul.mubr.f32.gmra.mxu0 %v2522
    %v2935 = vpop.f32.mrf.mxu0
    %v2936 = vadd.f32 0.0, %v2935
    %v2937 = vpop.f32.mrf.mxu0
    %v2938 = vadd.f32 0.0, %v2937
    %2939 = vmatprep.mubr.f32.mxu0 0.0
    %2940 = vmatmul.mubr.f32.gmra.mxu0 %v2525
    %v2941 = vpop.f32.mrf.mxu0
    %v2942 = vadd.f32 0.0, %v2941
    %v2943 = vpop.f32.mrf.mxu0
    %v2944 = vadd.f32 0.0, %v2943
    %2945 = vmatprep.mubr.f32.mxu0 0.0
    %2946 = vmatmul.mubr.f32.gmra.mxu0 %v2528
    %v2947 = vpop.f32.mrf.mxu0
    %v2948 = vadd.f32 0.0, %v2947
    %v2949 = vpop.f32.mrf.mxu0
    %v2950 = vadd.f32 0.0, %v2949
    %2951 = vmatprep.mubr.f32.mxu0 0.0
    %2952 = vmatmul.mubr.f32.gmra.mxu0 %v2531
    %v2953 = vpop.f32.mrf.mxu0
    %v2954 = vadd.f32 0.0, %v2953
    %v2955 = vpop.f32.mrf.mxu0
    %v2956 = vadd.f32 0.0, %v2955
    %2957 = vmatprep.mubr.f32.mxu0 0.0
    %2958 = vmatmul.mubr.f32.gmra.mxu0 %v2534
    %v2959 = vpop.f32.mrf.mxu0
    %v2960 = vadd.f32 0.0, %v2959
    %v2961 = vpop.f32.mrf.mxu0
    %v2962 = vadd.f32 0.0, %v2961
    %2963 = vmatprep.mubr.f32.mxu0 0.0
    %2964 = vmatmul.mubr.f32.gmra.mxu0 %v2537
    %v2965 = vpop.f32.mrf.mxu0
    %v2966 = vadd.f32 0.0, %v2965
    %v2967 = vpop.f32.mrf.mxu0
    %v2968 = vadd.f32 0.0, %v2967
    %2969 = vmatprep.mubr.f32.mxu0 0.0
    %2970 = vmatmul.mubr.f32.gmra.mxu0 %v2540
    %v2971 = vpop.f32.mrf.mxu0
    %v2972 = vadd.f32 0.0, %v2971
    %v2973 = vpop.f32.mrf.mxu0
    %v2974 = vadd.f32 0.0, %v2973
    %2975 = vmatprep.mubr.f32.mxu0 0.0
    %2976 = vmatmul.mubr.f32.gmra.mxu0 %v2543
    %v2977 = vpop.f32.mrf.mxu0
    %v2978 = vadd.f32 0.0, %v2977
    %v2979 = vpop.f32.mrf.mxu0
    %v2980 = vadd.f32 0.0, %v2979
    %2981 = vmatprep.mubr.f32.mxu0 0.0
    %2982 = vmatmul.mubr.f32.gmra.mxu0 %v2546
    %v2983 = vpop.f32.mrf.mxu0
    %v2984 = vadd.f32 0.0, %v2983
    %v2985 = vpop.f32.mrf.mxu0
    %v2986 = vadd.f32 0.0, %v2985
    %2987 = vmatprep.mubr.f32.mxu0 0.0
    %2988 = vmatmul.mubr.f32.gmra.mxu0 %v2549
    %v2989 = vpop.f32.mrf.mxu0
    %v2990 = vadd.f32 0.0, %v2989
    %v2991 = vpop.f32.mrf.mxu0
    %v2992 = vadd.f32 0.0, %v2991
    %2993 = vmatprep.mubr.f32.mxu0 0.0
    %2994 = vmatmul.mubr.f32.gmra.mxu0 %v2552
    %v2995 = vpop.f32.mrf.mxu0
    %v2996 = vadd.f32 0.0, %v2995
    %v2997 = vpop.f32.mrf.mxu0
    %v2998 = vadd.f32 0.0, %v2997
    %2999 = vmatprep.mubr.f32.mxu0 0.0
    %3000 = vmatmul.mubr.f32.gmra.mxu0 %v2555
    %v3001 = vpop.f32.mrf.mxu0
    %v3002 = vadd.f32 0.0, %v3001
    %v3003 = vpop.f32.mrf.mxu0
    %v3004 = vadd.f32 0.0, %v3003
    %3005 = vmatprep.mubr.f32.mxu0 0.0
    %3006 = vmatmul.mubr.f32.gmra.mxu0 %v2558
    %v3007 = vpop.f32.mrf.mxu0
    %v3008 = vadd.f32 0.0, %v3007
    %v3009 = vpop.f32.mrf.mxu0
    %v3010 = vadd.f32 0.0, %v3009
    %3011 = vmatprep.mubr.f32.mxu0 0.0
    %3012 = vmatmul.mubr.f32.gmra.mxu0 %v2561
    %v3013 = vpop.f32.mrf.mxu0
    %v3014 = vadd.f32 0.0, %v3013
    %v3015 = vpop.f32.mrf.mxu0
    %v3016 = vadd.f32 0.0, %v3015
    %3017 = vdwg.mxu0
    %v3018 = vmul.f32 %v768, %v2636
    %v3019 = vmul.f32 %v769, %v2638
    %v3020 = vmul.f32 %v770, %v2642
    %v3021 = vmul.f32 %v771, %v2644
    %v3022 = vmul.f32 %v772, %v2648
    %v3023 = vmul.f32 %v773, %v2650
    %v3024 = vmul.f32 %v774, %v2654
    %v3025 = vmul.f32 %v775, %v2656
    %v3026 = vmul.f32 %v776, %v2660
    %v3027 = vmul.f32 %v777, %v2662
    %v3028 = vmul.f32 %v778, %v2666
    %v3029 = vmul.f32 %v779, %v2668
    %v3030 = vmul.f32 %v780, %v2672
    %v3031 = vmul.f32 %v781, %v2674
    %v3032 = vmul.f32 %v782, %v2678
    %v3033 = vmul.f32 %v783, %v2680
    %v3034 = vmul.f32 %v784, %v2684
    %v3035 = vmul.f32 %v785, %v2686
    %v3036 = vmul.f32 %v786, %v2690
    %v3037 = vmul.f32 %v787, %v2692
    %v3038 = vmul.f32 %v788, %v2696
    %v3039 = vmul.f32 %v789, %v2698
    %v3040 = vmul.f32 %v790, %v2702
    %v3041 = vmul.f32 %v791, %v2704
    %v3042 = vmul.f32 %v792, %v2708
    %v3043 = vmul.f32 %v793, %v2710
    %v3044 = vmul.f32 %v794, %v2714
    %v3045 = vmul.f32 %v795, %v2716
    %v3046 = vmul.f32 %v796, %v2720
    %v3047 = vmul.f32 %v797, %v2722
    %v3048 = vmul.f32 %v798, %v2726
    %v3049 = vmul.f32 %v799, %v2728
    %v3050 = vmul.f32 %v800, %v2732
    %v3051 = vmul.f32 %v801, %v2734
    %v3052 = vmul.f32 %v802, %v2738
    %v3053 = vmul.f32 %v803, %v2740
    %v3054 = vmul.f32 %v804, %v2744
    %v3055 = vmul.f32 %v805, %v2746
    %v3056 = vmul.f32 %v806, %v2750
    %v3057 = vmul.f32 %v807, %v2752
    %v3058 = vmul.f32 %v808, %v2756
    %v3059 = vmul.f32 %v809, %v2758
    %v3060 = vmul.f32 %v810, %v2762
    %v3061 = vmul.f32 %v811, %v2764
    %v3062 = vmul.f32 %v812, %v2768
    %v3063 = vmul.f32 %v813, %v2770
    %v3064 = vmul.f32 %v814, %v2774
    %v3065 = vmul.f32 %v815, %v2776
    %v3066 = vmul.f32 %v816, %v2780
    %v3067 = vmul.f32 %v817, %v2782
    %v3068 = vmul.f32 %v818, %v2786
    %v3069 = vmul.f32 %v819, %v2788
    %v3070 = vmul.f32 %v820, %v2792
    %v3071 = vmul.f32 %v821, %v2794
    %v3072 = vmul.f32 %v822, %v2798
    %v3073 = vmul.f32 %v823, %v2800
    %v3074 = vmul.f32 %v824, %v2804
    %v3075 = vmul.f32 %v825, %v2806
    %v3076 = vmul.f32 %v826, %v2810
    %v3077 = vmul.f32 %v827, %v2812
    %v3078 = vmul.f32 %v828, %v2816
    %v3079 = vmul.f32 %v829, %v2818
    %v3080 = vmul.f32 %v830, %v2822
    %v3081 = vmul.f32 %v831, %v2824
    %v3082 = vmul.f32 %v832, %v2828
    %v3083 = vmul.f32 %v833, %v2830
    %v3084 = vmul.f32 %v834, %v2834
    %v3085 = vmul.f32 %v835, %v2836
    %v3086 = vmul.f32 %v836, %v2840
    %v3087 = vmul.f32 %v837, %v2842
    %v3088 = vmul.f32 %v838, %v2846
    %v3089 = vmul.f32 %v839, %v2848
    %v3090 = vmul.f32 %v840, %v2852
    %v3091 = vmul.f32 %v841, %v2854
    %v3092 = vmul.f32 %v842, %v2858
    %v3093 = vmul.f32 %v843, %v2860
    %v3094 = vmul.f32 %v844, %v2864
    %v3095 = vmul.f32 %v845, %v2866
    %v3096 = vmul.f32 %v846, %v2870
    %v3097 = vmul.f32 %v847, %v2872
    %v3098 = vmul.f32 %v848, %v2876
    %v3099 = vmul.f32 %v849, %v2878
    %v3100 = vmul.f32 %v850, %v2882
    %v3101 = vmul.f32 %v851, %v2884
    %v3102 = vmul.f32 %v852, %v2888
    %v3103 = vmul.f32 %v853, %v2890
    %v3104 = vmul.f32 %v854, %v2894
    %v3105 = vmul.f32 %v855, %v2896
    %v3106 = vmul.f32 %v856, %v2900
    %v3107 = vmul.f32 %v857, %v2902
    %v3108 = vmul.f32 %v858, %v2906
    %v3109 = vmul.f32 %v859, %v2908
    %v3110 = vmul.f32 %v860, %v2912
    %v3111 = vmul.f32 %v861, %v2914
    %v3112 = vmul.f32 %v862, %v2918
    %v3113 = vmul.f32 %v863, %v2920
    %v3114 = vmul.f32 %v864, %v2924
    %v3115 = vmul.f32 %v865, %v2926
    %v3116 = vmul.f32 %v866, %v2930
    %v3117 = vmul.f32 %v867, %v2932
    %v3118 = vmul.f32 %v868, %v2936
    %v3119 = vmul.f32 %v869, %v2938
    %v3120 = vmul.f32 %v870, %v2942
    %v3121 = vmul.f32 %v871, %v2944
    %v3122 = vmul.f32 %v872, %v2948
    %v3123 = vmul.f32 %v873, %v2950
    %v3124 = vmul.f32 %v874, %v2954
    %v3125 = vmul.f32 %v875, %v2956
    %v3126 = vmul.f32 %v876, %v2960
    %v3127 = vmul.f32 %v877, %v2962
    %v3128 = vmul.f32 %v878, %v2966
    %v3129 = vmul.f32 %v879, %v2968
    %v3130 = vmul.f32 %v880, %v2972
    %v3131 = vmul.f32 %v881, %v2974
    %v3132 = vmul.f32 %v882, %v2978
    %v3133 = vmul.f32 %v883, %v2980
    %v3134 = vmul.f32 %v884, %v2984
    %v3135 = vmul.f32 %v885, %v2986
    %v3136 = vmul.f32 %v886, %v2990
    %v3137 = vmul.f32 %v887, %v2992
    %v3138 = vmul.f32 %v888, %v2996
    %v3139 = vmul.f32 %v889, %v2998
    %v3140 = vmul.f32 %v890, %v3002
    %v3141 = vmul.f32 %v891, %v3004
    %v3142 = vmul.f32 %v892, %v3008
    %v3143 = vmul.f32 %v893, %v3010
    %v3144 = vmul.f32 %v894, %v3014
    %v3145 = vmul.f32 %v895, %v3016
    %v3146 = vld [vmem:[%s12] sm:$0xff]
    %v3147 = vld [vmem:[%s12 + $0x8] sm:$0xff]
    %v3148 = vld [vmem:[%s12 + $0x10] sm:$0xff]
    %v3149 = vld [vmem:[%s12 + $0x18] sm:$0xff]
    %v3150 = vld [vmem:[%s12 + $0x20] sm:$0xff]
    %v3151 = vld [vmem:[%s12 + $0x28] sm:$0xff]
    %v3152 = vld [vmem:[%s12 + $0x30] sm:$0xff]
    %v3153 = vld [vmem:[%s12 + $0x38] sm:$0xff]
    %v3154 = vld [vmem:[%s12 + $0x40] sm:$0xff]
    %v3155 = vld [vmem:[%s12 + $0x48] sm:$0xff]
    %v3156 = vld [vmem:[%s12 + $0x50] sm:$0xff]
    %v3157 = vld [vmem:[%s12 + $0x58] sm:$0xff]
    %v3158 = vld [vmem:[%s12 + $0x60] sm:$0xff]
    %v3159 = vld [vmem:[%s12 + $0x68] sm:$0xff]
    %v3160 = vld [vmem:[%s12 + $0x70] sm:$0xff]
    %v3161 = vld [vmem:[%s12 + $0x78] sm:$0xff]
    %v3162 = vld [vmem:[%s12 + $0x80] sm:$0xff]
    %v3163 = vld [vmem:[%s12 + $0x88] sm:$0xff]
    %v3164 = vld [vmem:[%s12 + $0x90] sm:$0xff]
    %v3165 = vld [vmem:[%s12 + $0x98] sm:$0xff]
    %vm3166 = vcmask 261120
    %v3168 = vsel %vm3166, %v3019, 0
    %v3171 = vsel %vm3166, %v3021, 0
    %v3174 = vsel %vm3166, %v3023, 0
    %v3177 = vsel %vm3166, %v3025, 0
    %v3180 = vsel %vm3166, %v3027, 0
    %v3183 = vsel %vm3166, %v3029, 0
    %v3186 = vsel %vm3166, %v3031, 0
    %v3189 = vsel %vm3166, %v3033, 0
    %v3192 = vsel %vm3166, %v3035, 0
    %v3195 = vsel %vm3166, %v3037, 0
    %v3198 = vsel %vm3166, %v3039, 0
    %v3201 = vsel %vm3166, %v3041, 0
    %v3204 = vsel %vm3166, %v3043, 0
    %v3207 = vsel %vm3166, %v3045, 0
    %v3210 = vsel %vm3166, %v3047, 0
    %v3213 = vsel %vm3166, %v3049, 0
    %v3216 = vsel %vm3166, %v3051, 0
    %v3219 = vsel %vm3166, %v3053, 0
    %v3222 = vsel %vm3166, %v3055, 0
    %v3225 = vsel %vm3166, %v3057, 0
    %v3228 = vsel %vm3166, %v3059, 0
    %v3231 = vsel %vm3166, %v3061, 0
    %v3234 = vsel %vm3166, %v3063, 0
    %v3237 = vsel %vm3166, %v3065, 0
    %v3240 = vsel %vm3166, %v3067, 0
    %v3243 = vsel %vm3166, %v3069, 0
    %v3246 = vsel %vm3166, %v3071, 0
    %v3249 = vsel %vm3166, %v3073, 0
    %v3252 = vsel %vm3166, %v3075, 0
    %v3255 = vsel %vm3166, %v3077, 0
    %v3258 = vsel %vm3166, %v3079, 0
    %v3261 = vsel %vm3166, %v3081, 0
    %v3264 = vsel %vm3166, %v3083, 0
    %v3267 = vsel %vm3166, %v3085, 0
    %v3270 = vsel %vm3166, %v3087, 0
    %v3273 = vsel %vm3166, %v3089, 0
    %v3276 = vsel %vm3166, %v3091, 0
    %v3279 = vsel %vm3166, %v3093, 0
    %v3282 = vsel %vm3166, %v3095, 0
    %v3285 = vsel %vm3166, %v3097, 0
    %v3288 = vsel %vm3166, %v3099, 0
    %v3291 = vsel %vm3166, %v3101, 0
    %v3294 = vsel %vm3166, %v3103, 0
    %v3297 = vsel %vm3166, %v3105, 0
    %v3300 = vsel %vm3166, %v3107, 0
    %v3303 = vsel %vm3166, %v3109, 0
    %v3306 = vsel %vm3166, %v3111, 0
    %v3309 = vsel %vm3166, %v3113, 0
    %v3312 = vsel %vm3166, %v3115, 0
    %v3315 = vsel %vm3166, %v3117, 0
    %v3318 = vsel %vm3166, %v3119, 0
    %v3321 = vsel %vm3166, %v3121, 0
    %v3324 = vsel %vm3166, %v3123, 0
    %v3327 = vsel %vm3166, %v3125, 0
    %v3330 = vsel %vm3166, %v3127, 0
    %v3333 = vsel %vm3166, %v3129, 0
    %v3336 = vsel %vm3166, %v3131, 0
    %v3339 = vsel %vm3166, %v3133, 0
    %v3342 = vsel %vm3166, %v3135, 0
    %v3345 = vsel %vm3166, %v3137, 0
    %v3348 = vsel %vm3166, %v3139, 0
    %v3351 = vsel %vm3166, %v3141, 0
    %v3354 = vsel %vm3166, %v3143, 0
    %v3357 = vsel %vm3166, %v3145, 0
    %3359 = vmatprep.subr.mxu0 0.0
    %3360 = vmatpush1.msra.mxu0 %v3161
    %3361 = vmatprep.subr.mxu0 0.0
    %3362 = vmatpush1.msra.mxu0 %v3160
    %3363 = vmatprep.subr.mxu0 0.0
    %3364 = vmatpush1.msra.mxu0 %v3159
    %3365 = vmatprep.subr.mxu0 0.0
    %3366 = vmatpush1.msra.mxu0 %v3158
    %3367 = vmatprep.subr.mxu0 0.0
    %3368 = vmatpush1.msra.mxu0 %v3157
    %3369 = vmatprep.subr.mxu0 0.0
    %3370 = vmatpush1.msra.mxu0 %v3156
    %3371 = vmatprep.subr.mxu0 0.0
    %3372 = vmatpush1.msra.mxu0 %v3155
    %3373 = vmatprep.subr.mxu0 0.0
    %3374 = vmatpush1.msra.mxu0 %v3154
    %3375 = vmatprep.subr.mxu0 0.0
    %3376 = vmatpush1.msra.mxu0 %v3153
    %3377 = vmatprep.subr.mxu0 0.0
    %3378 = vmatpush1.msra.mxu0 %v3152
    %3379 = vmatprep.subr.mxu0 0.0
    %3380 = vmatpush1.msra.mxu0 %v3151
    %3381 = vmatprep.subr.mxu0 0.0
    %3382 = vmatpush1.msra.mxu0 %v3150
    %3383 = vmatprep.subr.mxu0 0.0
    %3384 = vmatpush1.msra.mxu0 %v3149
    %3385 = vmatprep.subr.mxu0 0.0
    %3386 = vmatpush1.msra.mxu0 %v3148
    %3387 = vmatprep.subr.mxu0 0.0
    %3388 = vmatpush1.msra.mxu0 %v3147
    %3389 = vmatprep.subr.mxu0 0.0
    %3390 = vmatpush1.msra.mxu0 %v3146
    %3391 = vmatprep.subr.mxu0 0.0
    %3392 = vmatpush2.msra.mxu0 0.0
    %3393 = vmatprep.subr.mxu0 0.0
    %3394 = vmatpush2.msra.mxu0 0.0
    %3395 = vmatprep.subr.mxu0 0.0
    %3396 = vmatpush2.msra.mxu0 0.0
    %3397 = vmatprep.subr.mxu0 0.0
    %3398 = vmatpush2.msra.mxu0 0.0
    %3399 = vmatprep.subr.mxu0 0.0
    %3400 = vmatpush2.msra.mxu0 0.0
    %3401 = vmatprep.subr.mxu0 0.0
    %3402 = vmatpush2.msra.mxu0 0.0
    %3403 = vmatprep.subr.mxu0 0.0
    %3404 = vmatpush2.msra.mxu0 0.0
    %3405 = vmatprep.subr.mxu0 0.0
    %3406 = vmatpush2.msra.mxu0 0.0
    %3407 = vmatprep.subr.mxu0 0.0
    %3408 = vmatpush2.msra.mxu0 0.0
    %3409 = vmatprep.subr.mxu0 0.0
    %3410 = vmatpush2.msra.mxu0 0.0
    %3411 = vmatprep.subr.mxu0 0.0
    %3412 = vmatpush2.msra.mxu0 0.0
    %3413 = vmatprep.subr.mxu0 0.0
    %3414 = vmatpush2.msra.mxu0 0.0
    %3415 = vmatprep.subr.mxu0 0.0
    %3416 = vmatpush2.msra.mxu0 %v3165
    %3417 = vmatprep.subr.mxu0 0.0
    %3418 = vmatpush2.msra.mxu0 %v3164
    %3419 = vmatprep.subr.mxu0 0.0
    %3420 = vmatpush2.msra.mxu0 %v3163
    %3421 = vmatprep.subr.mxu0 0.0
    %3422 = vmatpush2.msra.mxu0 %v3162
    %3423 = vmatprep.mubr.f32.mxu0 %v3168
    %3424 = vmatmul.mubr.f32.gmra.mxu0 %v3018
    %v3425 = vpop.f32.mrf.mxu0
    %v3426 = vadd.f32 0.0, %v3425
    %v3427 = vpop.f32.mrf.mxu0
    %3428 = vmatprep.mubr.f32.mxu0 %v3171
    %3429 = vmatmul.mubr.f32.gmra.mxu0 %v3020
    %v3430 = vpop.f32.mrf.mxu0
    %v3431 = vadd.f32 0.0, %v3430
    %v3432 = vpop.f32.mrf.mxu0
    %3433 = vmatprep.mubr.f32.mxu0 %v3174
    %3434 = vmatmul.mubr.f32.gmra.mxu0 %v3022
    %v3435 = vpop.f32.mrf.mxu0
    %v3436 = vadd.f32 0.0, %v3435
    %v3437 = vpop.f32.mrf.mxu0
    %3438 = vmatprep.mubr.f32.mxu0 %v3177
    %3439 = vmatmul.mubr.f32.gmra.mxu0 %v3024
    %v3440 = vpop.f32.mrf.mxu0
    %v3441 = vadd.f32 0.0, %v3440
    %v3442 = vpop.f32.mrf.mxu0
    %3443 = vmatprep.mubr.f32.mxu0 %v3180
    %3444 = vmatmul.mubr.f32.gmra.mxu0 %v3026
    %v3445 = vpop.f32.mrf.mxu0
    %v3446 = vadd.f32 0.0, %v3445
    %v3447 = vpop.f32.mrf.mxu0
    %3448 = vmatprep.mubr.f32.mxu0 %v3183
    %3449 = vmatmul.mubr.f32.gmra.mxu0 %v3028
    %v3450 = vpop.f32.mrf.mxu0
    %v3451 = vadd.f32 0.0, %v3450
    %v3452 = vpop.f32.mrf.mxu0
    %3453 = vmatprep.mubr.f32.mxu0 %v3186
    %3454 = vmatmul.mubr.f32.gmra.mxu0 %v3030
    %v3455 = vpop.f32.mrf.mxu0
    %v3456 = vadd.f32 0.0, %v3455
    %v3457 = vpop.f32.mrf.mxu0
    %3458 = vmatprep.mubr.f32.mxu0 %v3189
    %3459 = vmatmul.mubr.f32.gmra.mxu0 %v3032
    %v3460 = vpop.f32.mrf.mxu0
    %v3461 = vadd.f32 0.0, %v3460
    %v3462 = vpop.f32.mrf.mxu0
    %3463 = vmatprep.mubr.f32.mxu0 %v3192
    %3464 = vmatmul.mubr.f32.gmra.mxu0 %v3034
    %v3465 = vpop.f32.mrf.mxu0
    %v3466 = vadd.f32 0.0, %v3465
    %v3467 = vpop.f32.mrf.mxu0
    %3468 = vmatprep.mubr.f32.mxu0 %v3195
    %3469 = vmatmul.mubr.f32.gmra.mxu0 %v3036
    %v3470 = vpop.f32.mrf.mxu0
    %v3471 = vadd.f32 0.0, %v3470
    %v3472 = vpop.f32.mrf.mxu0
    %3473 = vmatprep.mubr.f32.mxu0 %v3198
    %3474 = vmatmul.mubr.f32.gmra.mxu0 %v3038
    %v3475 = vpop.f32.mrf.mxu0
    %v3476 = vadd.f32 0.0, %v3475
    %v3477 = vpop.f32.mrf.mxu0
    %3478 = vmatprep.mubr.f32.mxu0 %v3201
    %3479 = vmatmul.mubr.f32.gmra.mxu0 %v3040
    %v3480 = vpop.f32.mrf.mxu0
    %v3481 = vadd.f32 0.0, %v3480
    %v3482 = vpop.f32.mrf.mxu0
    %3483 = vmatprep.mubr.f32.mxu0 %v3204
    %3484 = vmatmul.mubr.f32.gmra.mxu0 %v3042
    %v3485 = vpop.f32.mrf.mxu0
    %v3486 = vadd.f32 0.0, %v3485
    %v3487 = vpop.f32.mrf.mxu0
    %3488 = vmatprep.mubr.f32.mxu0 %v3207
    %3489 = vmatmul.mubr.f32.gmra.mxu0 %v3044
    %v3490 = vpop.f32.mrf.mxu0
    %v3491 = vadd.f32 0.0, %v3490
    %v3492 = vpop.f32.mrf.mxu0
    %3493 = vmatprep.mubr.f32.mxu0 %v3210
    %3494 = vmatmul.mubr.f32.gmra.mxu0 %v3046
    %v3495 = vpop.f32.mrf.mxu0
    %v3496 = vadd.f32 0.0, %v3495
    %v3497 = vpop.f32.mrf.mxu0
    %3498 = vmatprep.mubr.f32.mxu0 %v3213
    %3499 = vmatmul.mubr.f32.gmra.mxu0 %v3048
    %v3500 = vpop.f32.mrf.mxu0
    %v3501 = vadd.f32 0.0, %v3500
    %v3502 = vpop.f32.mrf.mxu0
    %3503 = vmatprep.mubr.f32.mxu0 %v3216
    %3504 = vmatmul.mubr.f32.gmra.mxu0 %v3050
    %v3505 = vpop.f32.mrf.mxu0
    %v3506 = vadd.f32 0.0, %v3505
    %v3507 = vpop.f32.mrf.mxu0
    %3508 = vmatprep.mubr.f32.mxu0 %v3219
    %3509 = vmatmul.mubr.f32.gmra.mxu0 %v3052
    %v3510 = vpop.f32.mrf.mxu0
    %v3511 = vadd.f32 0.0, %v3510
    %v3512 = vpop.f32.mrf.mxu0
    %3513 = vmatprep.mubr.f32.mxu0 %v3222
    %3514 = vmatmul.mubr.f32.gmra.mxu0 %v3054
    %v3515 = vpop.f32.mrf.mxu0
    %v3516 = vadd.f32 0.0, %v3515
    %v3517 = vpop.f32.mrf.mxu0
    %3518 = vmatprep.mubr.f32.mxu0 %v3225
    %3519 = vmatmul.mubr.f32.gmra.mxu0 %v3056
    %v3520 = vpop.f32.mrf.mxu0
    %v3521 = vadd.f32 0.0, %v3520
    %v3522 = vpop.f32.mrf.mxu0
    %3523 = vmatprep.mubr.f32.mxu0 %v3228
    %3524 = vmatmul.mubr.f32.gmra.mxu0 %v3058
    %v3525 = vpop.f32.mrf.mxu0
    %v3526 = vadd.f32 0.0, %v3525
    %v3527 = vpop.f32.mrf.mxu0
    %3528 = vmatprep.mubr.f32.mxu0 %v3231
    %3529 = vmatmul.mubr.f32.gmra.mxu0 %v3060
    %v3530 = vpop.f32.mrf.mxu0
    %v3531 = vadd.f32 0.0, %v3530
    %v3532 = vpop.f32.mrf.mxu0
    %3533 = vmatprep.mubr.f32.mxu0 %v3234
    %3534 = vmatmul.mubr.f32.gmra.mxu0 %v3062
    %v3535 = vpop.f32.mrf.mxu0
    %v3536 = vadd.f32 0.0, %v3535
    %v3537 = vpop.f32.mrf.mxu0
    %3538 = vmatprep.mubr.f32.mxu0 %v3237
    %3539 = vmatmul.mubr.f32.gmra.mxu0 %v3064
    %v3540 = vpop.f32.mrf.mxu0
    %v3541 = vadd.f32 0.0, %v3540
    %v3542 = vpop.f32.mrf.mxu0
    %3543 = vmatprep.mubr.f32.mxu0 %v3240
    %3544 = vmatmul.mubr.f32.gmra.mxu0 %v3066
    %v3545 = vpop.f32.mrf.mxu0
    %v3546 = vadd.f32 0.0, %v3545
    %v3547 = vpop.f32.mrf.mxu0
    %3548 = vmatprep.mubr.f32.mxu0 %v3243
    %3549 = vmatmul.mubr.f32.gmra.mxu0 %v3068
    %v3550 = vpop.f32.mrf.mxu0
    %v3551 = vadd.f32 0.0, %v3550
    %v3552 = vpop.f32.mrf.mxu0
    %3553 = vmatprep.mubr.f32.mxu0 %v3246
    %3554 = vmatmul.mubr.f32.gmra.mxu0 %v3070
    %v3555 = vpop.f32.mrf.mxu0
    %v3556 = vadd.f32 0.0, %v3555
    %v3557 = vpop.f32.mrf.mxu0
    %3558 = vmatprep.mubr.f32.mxu0 %v3249
    %3559 = vmatmul.mubr.f32.gmra.mxu0 %v3072
    %v3560 = vpop.f32.mrf.mxu0
    %v3561 = vadd.f32 0.0, %v3560
    %v3562 = vpop.f32.mrf.mxu0
    %3563 = vmatprep.mubr.f32.mxu0 %v3252
    %3564 = vmatmul.mubr.f32.gmra.mxu0 %v3074
    %v3565 = vpop.f32.mrf.mxu0
    %v3566 = vadd.f32 0.0, %v3565
    %v3567 = vpop.f32.mrf.mxu0
    %3568 = vmatprep.mubr.f32.mxu0 %v3255
    %3569 = vmatmul.mubr.f32.gmra.mxu0 %v3076
    %v3570 = vpop.f32.mrf.mxu0
    %v3571 = vadd.f32 0.0, %v3570
    %v3572 = vpop.f32.mrf.mxu0
    %3573 = vmatprep.mubr.f32.mxu0 %v3258
    %3574 = vmatmul.mubr.f32.gmra.mxu0 %v3078
    %v3575 = vpop.f32.mrf.mxu0
    %v3576 = vadd.f32 0.0, %v3575
    %v3577 = vpop.f32.mrf.mxu0
    %3578 = vmatprep.mubr.f32.mxu0 %v3261
    %3579 = vmatmul.mubr.f32.gmra.mxu0 %v3080
    %v3580 = vpop.f32.mrf.mxu0
    %v3581 = vadd.f32 0.0, %v3580
    %v3582 = vpop.f32.mrf.mxu0
    %3583 = vmatprep.mubr.f32.mxu0 %v3264
    %3584 = vmatmul.mubr.f32.gmra.mxu0 %v3082
    %v3585 = vpop.f32.mrf.mxu0
    %v3586 = vadd.f32 0.0, %v3585
    %v3587 = vpop.f32.mrf.mxu0
    %3588 = vmatprep.mubr.f32.mxu0 %v3267
    %3589 = vmatmul.mubr.f32.gmra.mxu0 %v3084
    %v3590 = vpop.f32.mrf.mxu0
    %v3591 = vadd.f32 0.0, %v3590
    %v3592 = vpop.f32.mrf.mxu0
    %3593 = vmatprep.mubr.f32.mxu0 %v3270
    %3594 = vmatmul.mubr.f32.gmra.mxu0 %v3086
    %v3595 = vpop.f32.mrf.mxu0
    %v3596 = vadd.f32 0.0, %v3595
    %v3597 = vpop.f32.mrf.mxu0
    %3598 = vmatprep.mubr.f32.mxu0 %v3273
    %3599 = vmatmul.mubr.f32.gmra.mxu0 %v3088
    %v3600 = vpop.f32.mrf.mxu0
    %v3601 = vadd.f32 0.0, %v3600
    %v3602 = vpop.f32.mrf.mxu0
    %3603 = vmatprep.mubr.f32.mxu0 %v3276
    %3604 = vmatmul.mubr.f32.gmra.mxu0 %v3090
    %v3605 = vpop.f32.mrf.mxu0
    %v3606 = vadd.f32 0.0, %v3605
    %v3607 = vpop.f32.mrf.mxu0
    %3608 = vmatprep.mubr.f32.mxu0 %v3279
    %3609 = vmatmul.mubr.f32.gmra.mxu0 %v3092
    %v3610 = vpop.f32.mrf.mxu0
    %v3611 = vadd.f32 0.0, %v3610
    %v3612 = vpop.f32.mrf.mxu0
    %3613 = vmatprep.mubr.f32.mxu0 %v3282
    %3614 = vmatmul.mubr.f32.gmra.mxu0 %v3094
    %v3615 = vpop.f32.mrf.mxu0
    %v3616 = vadd.f32 0.0, %v3615
    %v3617 = vpop.f32.mrf.mxu0
    %3618 = vmatprep.mubr.f32.mxu0 %v3285
    %3619 = vmatmul.mubr.f32.gmra.mxu0 %v3096
    %v3620 = vpop.f32.mrf.mxu0
    %v3621 = vadd.f32 0.0, %v3620
    %v3622 = vpop.f32.mrf.mxu0
    %3623 = vmatprep.mubr.f32.mxu0 %v3288
    %3624 = vmatmul.mubr.f32.gmra.mxu0 %v3098
    %v3625 = vpop.f32.mrf.mxu0
    %v3626 = vadd.f32 0.0, %v3625
    %v3627 = vpop.f32.mrf.mxu0
    %3628 = vmatprep.mubr.f32.mxu0 %v3291
    %3629 = vmatmul.mubr.f32.gmra.mxu0 %v3100
    %v3630 = vpop.f32.mrf.mxu0
    %v3631 = vadd.f32 0.0, %v3630
    %v3632 = vpop.f32.mrf.mxu0
    %3633 = vmatprep.mubr.f32.mxu0 %v3294
    %3634 = vmatmul.mubr.f32.gmra.mxu0 %v3102
    %v3635 = vpop.f32.mrf.mxu0
    %v3636 = vadd.f32 0.0, %v3635
    %v3637 = vpop.f32.mrf.mxu0
    %3638 = vmatprep.mubr.f32.mxu0 %v3297
    %3639 = vmatmul.mubr.f32.gmra.mxu0 %v3104
    %v3640 = vpop.f32.mrf.mxu0
    %v3641 = vadd.f32 0.0, %v3640
    %v3642 = vpop.f32.mrf.mxu0
    %3643 = vmatprep.mubr.f32.mxu0 %v3300
    %3644 = vmatmul.mubr.f32.gmra.mxu0 %v3106
    %v3645 = vpop.f32.mrf.mxu0
    %v3646 = vadd.f32 0.0, %v3645
    %v3647 = vpop.f32.mrf.mxu0
    %3648 = vmatprep.mubr.f32.mxu0 %v3303
    %3649 = vmatmul.mubr.f32.gmra.mxu0 %v3108
    %v3650 = vpop.f32.mrf.mxu0
    %v3651 = vadd.f32 0.0, %v3650
    %v3652 = vpop.f32.mrf.mxu0
    %3653 = vmatprep.mubr.f32.mxu0 %v3306
    %3654 = vmatmul.mubr.f32.gmra.mxu0 %v3110
    %v3655 = vpop.f32.mrf.mxu0
    %v3656 = vadd.f32 0.0, %v3655
    %v3657 = vpop.f32.mrf.mxu0
    %3658 = vmatprep.mubr.f32.mxu0 %v3309
    %3659 = vmatmul.mubr.f32.gmra.mxu0 %v3112
    %v3660 = vpop.f32.mrf.mxu0
    %v3661 = vadd.f32 0.0, %v3660
    %v3662 = vpop.f32.mrf.mxu0
    %3663 = vmatprep.mubr.f32.mxu0 %v3312
    %3664 = vmatmul.mubr.f32.gmra.mxu0 %v3114
    %v3665 = vpop.f32.mrf.mxu0
    %v3666 = vadd.f32 0.0, %v3665
    %v3667 = vpop.f32.mrf.mxu0
    %3668 = vmatprep.mubr.f32.mxu0 %v3315
    %3669 = vmatmul.mubr.f32.gmra.mxu0 %v3116
    %v3670 = vpop.f32.mrf.mxu0
    %v3671 = vadd.f32 0.0, %v3670
    %v3672 = vpop.f32.mrf.mxu0
    %3673 = vmatprep.mubr.f32.mxu0 %v3318
    %3674 = vmatmul.mubr.f32.gmra.mxu0 %v3118
    %v3675 = vpop.f32.mrf.mxu0
    %v3676 = vadd.f32 0.0, %v3675
    %v3677 = vpop.f32.mrf.mxu0
    %3678 = vmatprep.mubr.f32.mxu0 %v3321
    %3679 = vmatmul.mubr.f32.gmra.mxu0 %v3120
    %v3680 = vpop.f32.mrf.mxu0
    %v3681 = vadd.f32 0.0, %v3680
    %v3682 = vpop.f32.mrf.mxu0
    %3683 = vmatprep.mubr.f32.mxu0 %v3324
    %3684 = vmatmul.mubr.f32.gmra.mxu0 %v3122
    %v3685 = vpop.f32.mrf.mxu0
    %v3686 = vadd.f32 0.0, %v3685
    %v3687 = vpop.f32.mrf.mxu0
    %3688 = vmatprep.mubr.f32.mxu0 %v3327
    %3689 = vmatmul.mubr.f32.gmra.mxu0 %v3124
    %v3690 = vpop.f32.mrf.mxu0
    %v3691 = vadd.f32 0.0, %v3690
    %v3692 = vpop.f32.mrf.mxu0
    %3693 = vmatprep.mubr.f32.mxu0 %v3330
    %3694 = vmatmul.mubr.f32.gmra.mxu0 %v3126
    %v3695 = vpop.f32.mrf.mxu0
    %v3696 = vadd.f32 0.0, %v3695
    %v3697 = vpop.f32.mrf.mxu0
    %3698 = vmatprep.mubr.f32.mxu0 %v3333
    %3699 = vmatmul.mubr.f32.gmra.mxu0 %v3128
    %v3700 = vpop.f32.mrf.mxu0
    %v3701 = vadd.f32 0.0, %v3700
    %v3702 = vpop.f32.mrf.mxu0
    %3703 = vmatprep.mubr.f32.mxu0 %v3336
    %3704 = vmatmul.mubr.f32.gmra.mxu0 %v3130
    %v3705 = vpop.f32.mrf.mxu0
    %v3706 = vadd.f32 0.0, %v3705
    %v3707 = vpop.f32.mrf.mxu0
    %3708 = vmatprep.mubr.f32.mxu0 %v3339
    %3709 = vmatmul.mubr.f32.gmra.mxu0 %v3132
    %v3710 = vpop.f32.mrf.mxu0
    %v3711 = vadd.f32 0.0, %v3710
    %v3712 = vpop.f32.mrf.mxu0
    %3713 = vmatprep.mubr.f32.mxu0 %v3342
    %3714 = vmatmul.mubr.f32.gmra.mxu0 %v3134
    %v3715 = vpop.f32.mrf.mxu0
    %v3716 = vadd.f32 0.0, %v3715
    %v3717 = vpop.f32.mrf.mxu0
    %3718 = vmatprep.mubr.f32.mxu0 %v3345
    %3719 = vmatmul.mubr.f32.gmra.mxu0 %v3136
    %v3720 = vpop.f32.mrf.mxu0
    %v3721 = vadd.f32 0.0, %v3720
    %v3722 = vpop.f32.mrf.mxu0
    %3723 = vmatprep.mubr.f32.mxu0 %v3348
    %3724 = vmatmul.mubr.f32.gmra.mxu0 %v3138
    %v3725 = vpop.f32.mrf.mxu0
    %v3726 = vadd.f32 0.0, %v3725
    %v3727 = vpop.f32.mrf.mxu0
    %3728 = vmatprep.mubr.f32.mxu0 %v3351
    %3729 = vmatmul.mubr.f32.gmra.mxu0 %v3140
    %v3730 = vpop.f32.mrf.mxu0
    %v3731 = vadd.f32 0.0, %v3730
    %v3732 = vpop.f32.mrf.mxu0
    %3733 = vmatprep.mubr.f32.mxu0 %v3354
    %3734 = vmatmul.mubr.f32.gmra.mxu0 %v3142
    %v3735 = vpop.f32.mrf.mxu0
    %v3736 = vadd.f32 0.0, %v3735
    %v3737 = vpop.f32.mrf.mxu0
    %3738 = vmatprep.mubr.f32.mxu0 %v3357
    %3739 = vmatmul.mubr.f32.gmra.mxu0 %v3144
    %v3740 = vpop.f32.mrf.mxu0
    %v3741 = vadd.f32 0.0, %v3740
    %v3742 = vpop.f32.mrf.mxu0
    %3743 = vdwg.mxu0
    %v3744 = vpack.c.bf16 %v3431, %v3426
    %v3745 = vpack.c.bf16 %v3441, %v3436
    %v3746 = vpack.c.bf16 %v3451, %v3446
    %v3747 = vpack.c.bf16 %v3461, %v3456
    %v3748 = vpack.c.bf16 %v3471, %v3466
    %v3749 = vpack.c.bf16 %v3481, %v3476
    %v3750 = vpack.c.bf16 %v3491, %v3486
    %v3751 = vpack.c.bf16 %v3501, %v3496
    %v3752 = vpack.c.bf16 %v3511, %v3506
    %v3753 = vpack.c.bf16 %v3521, %v3516
    %v3754 = vpack.c.bf16 %v3531, %v3526
    %v3755 = vpack.c.bf16 %v3541, %v3536
    %v3756 = vpack.c.bf16 %v3551, %v3546
    %v3757 = vpack.c.bf16 %v3561, %v3556
    %v3758 = vpack.c.bf16 %v3571, %v3566
    %v3759 = vpack.c.bf16 %v3581, %v3576
    %v3760 = vpack.c.bf16 %v3591, %v3586
    %v3761 = vpack.c.bf16 %v3601, %v3596
    %v3762 = vpack.c.bf16 %v3611, %v3606
    %v3763 = vpack.c.bf16 %v3621, %v3616
    %v3764 = vpack.c.bf16 %v3631, %v3626
    %v3765 = vpack.c.bf16 %v3641, %v3636
    %v3766 = vpack.c.bf16 %v3651, %v3646
    %v3767 = vpack.c.bf16 %v3661, %v3656
    %v3768 = vpack.c.bf16 %v3671, %v3666
    %v3769 = vpack.c.bf16 %v3681, %v3676
    %v3770 = vpack.c.bf16 %v3691, %v3686
    %v3771 = vpack.c.bf16 %v3701, %v3696
    %v3772 = vpack.c.bf16 %v3711, %v3706
    %v3773 = vpack.c.bf16 %v3721, %v3716
    %v3774 = vpack.c.bf16 %v3731, %v3726
    %v3775 = vpack.c.bf16 %v3741, %v3736
    %v3776 = vld [vmem:[%s7] sm:$0xf]
    %v3777 = vld [vmem:[%s7 + $0x4] sm:$0xf]
    %v3778 = vld [vmem:[%s7 + $0x8] sm:$0xf]
    %v3779 = vld [vmem:[%s7 + $0xc] sm:$0xf]
    %v3780 = vld [vmem:[%s6 + $0x13] ss:$0 sm:$0xff]
    %v3785 = vunpack.c.l.b16 %v3776
    %v3786 = vunpack.c.l.b16 %v3777
    %v3787 = vunpack.c.l.b16 %v3778
    %v3788 = vunpack.c.l.b16 %v3779
    %v3789 = vpack.c.b16 %v3786, %v3785
    %v3790 = vpack.c.b16 %v3788, %v3787
    %v3794 = vsel %vm3166, %v3744, 0
    %v3797 = vsel %vm3166, %v3745, 0
    %v3800 = vsel %vm3166, %v3746, 0
    %v3803 = vsel %vm3166, %v3747, 0
    %v3806 = vsel %vm3166, %v3748, 0
    %v3809 = vsel %vm3166, %v3749, 0
    %v3812 = vsel %vm3166, %v3750, 0
    %v3815 = vsel %vm3166, %v3751, 0
    %v3818 = vsel %vm3166, %v3752, 0
    %v3821 = vsel %vm3166, %v3753, 0
    %v3824 = vsel %vm3166, %v3754, 0
    %v3827 = vsel %vm3166, %v3755, 0
    %v3830 = vsel %vm3166, %v3756, 0
    %v3833 = vsel %vm3166, %v3757, 0
    %v3836 = vsel %vm3166, %v3758, 0
    %v3839 = vsel %vm3166, %v3759, 0
    %v3842 = vsel %vm3166, %v3760, 0
    %v3845 = vsel %vm3166, %v3761, 0
    %v3848 = vsel %vm3166, %v3762, 0
    %v3851 = vsel %vm3166, %v3763, 0
    %v3854 = vsel %vm3166, %v3764, 0
    %v3857 = vsel %vm3166, %v3765, 0
    %v3860 = vsel %vm3166, %v3766, 0
    %v3863 = vsel %vm3166, %v3767, 0
    %v3866 = vsel %vm3166, %v3768, 0
    %v3869 = vsel %vm3166, %v3769, 0
    %v3872 = vsel %vm3166, %v3770, 0
    %v3875 = vsel %vm3166, %v3771, 0
    %v3878 = vsel %vm3166, %v3772, 0
    %v3881 = vsel %vm3166, %v3773, 0
    %v3884 = vsel %vm3166, %v3774, 0
    %v3887 = vsel %vm3166, %v3775, 0
    %3889 = vmatprep.subr.bf16.mxu0 0
    %3890 = vmatpush1.bf16.msra.mxu0 0
    %3891 = vmatprep.subr.bf16.mxu0 0
    %3892 = vmatpush1.bf16.msra.mxu0 0
    %3893 = vmatprep.subr.bf16.mxu0 0
    %3894 = vmatpush1.bf16.msra.mxu0 0
    %3895 = vmatprep.subr.bf16.mxu0 0
    %3896 = vmatpush1.bf16.msra.mxu0 0
    %3897 = vmatprep.subr.bf16.mxu0 0
    %3898 = vmatpush1.bf16.msra.mxu0 0
    %3899 = vmatprep.subr.bf16.mxu0 0
    %3900 = vmatpush1.bf16.msra.mxu0 0
    %3901 = vmatprep.subr.bf16.mxu0 0
    %3902 = vmatpush1.bf16.msra.mxu0 %v3790
    %3903 = vmatprep.subr.bf16.mxu0 0
    %3904 = vmatpush1.bf16.msra.mxu0 %v3789
    %3905 = vmatprep.subr.bf16.mxu0 0
    %3906 = vmatpush2.bf16.msra.mxu0 0
    %3907 = vmatprep.subr.bf16.mxu0 0
    %3908 = vmatpush2.bf16.msra.mxu0 0
    %3909 = vmatprep.subr.bf16.mxu0 0
    %3910 = vmatpush2.bf16.msra.mxu0 0
    %3911 = vmatprep.subr.bf16.mxu0 0
    %3912 = vmatpush2.bf16.msra.mxu0 0
    %3913 = vmatprep.subr.bf16.mxu0 0
    %3914 = vmatpush2.bf16.msra.mxu0 0
    %3915 = vmatprep.subr.bf16.mxu0 0
    %3916 = vmatpush2.bf16.msra.mxu0 0
    %3917 = vmatprep.subr.bf16.mxu0 0
    %3918 = vmatpush2.bf16.msra.mxu0 0
    %3919 = vmatprep.subr.bf16.mxu0 0
    %3920 = vmatpush2.bf16.msra.mxu0 0
    %3921 = vmatprep.mubr.bf16.mxu0 0
    %3922 = vmatmul.mubr.bf16.gmra.mxu0 %v3794
    %v3923 = vpop.f32.mrf.mxu0
    %v3924 = vadd.f32 %v3780, %v3923
    %v3925 = vpop.f32.mrf.mxu0
    %v3926 = vpop.f32.mrf.mxu0
    %v3927 = vadd.f32 %v3780, %v3926
    %v3928 = vpop.f32.mrf.mxu0
    %3929 = vmatprep.mubr.bf16.mxu0 0
    %3930 = vmatmul.mubr.bf16.gmra.mxu0 %v3797
    %v3931 = vpop.f32.mrf.mxu0
    %v3932 = vadd.f32 %v3780, %v3931
    %v3933 = vpop.f32.mrf.mxu0
    %v3934 = vpop.f32.mrf.mxu0
    %v3935 = vadd.f32 %v3780, %v3934
    %v3936 = vpop.f32.mrf.mxu0
    %3937 = vmatprep.mubr.bf16.mxu0 0
    %3938 = vmatmul.mubr.bf16.gmra.mxu0 %v3800
    %v3939 = vpop.f32.mrf.mxu0
    %v3940 = vadd.f32 %v3780, %v3939
    %v3941 = vpop.f32.mrf.mxu0
    %v3942 = vpop.f32.mrf.mxu0
    %v3943 = vadd.f32 %v3780, %v3942
    %v3944 = vpop.f32.mrf.mxu0
    %3945 = vmatprep.mubr.bf16.mxu0 0
    %3946 = vmatmul.mubr.bf16.gmra.mxu0 %v3803
    %v3947 = vpop.f32.mrf.mxu0
    %v3948 = vadd.f32 %v3780, %v3947
    %v3949 = vpop.f32.mrf.mxu0
    %v3950 = vpop.f32.mrf.mxu0
    %v3951 = vadd.f32 %v3780, %v3950
    %v3952 = vpop.f32.mrf.mxu0
    %3953 = vmatprep.mubr.bf16.mxu0 0
    %3954 = vmatmul.mubr.bf16.gmra.mxu0 %v3806
    %v3955 = vpop.f32.mrf.mxu0
    %v3956 = vadd.f32 %v3780, %v3955
    %v3957 = vpop.f32.mrf.mxu0
    %v3958 = vpop.f32.mrf.mxu0
    %v3959 = vadd.f32 %v3780, %v3958
    %v3960 = vpop.f32.mrf.mxu0
    %3961 = vmatprep.mubr.bf16.mxu0 0
    %3962 = vmatmul.mubr.bf16.gmra.mxu0 %v3809
    %v3963 = vpop.f32.mrf.mxu0
    %v3964 = vadd.f32 %v3780, %v3963
    %v3965 = vpop.f32.mrf.mxu0
    %v3966 = vpop.f32.mrf.mxu0
    %v3967 = vadd.f32 %v3780, %v3966
    %v3968 = vpop.f32.mrf.mxu0
    %3969 = vmatprep.mubr.bf16.mxu0 0
    %3970 = vmatmul.mubr.bf16.gmra.mxu0 %v3812
    %v3971 = vpop.f32.mrf.mxu0
    %v3972 = vadd.f32 %v3780, %v3971
    %v3973 = vpop.f32.mrf.mxu0
    %v3974 = vpop.f32.mrf.mxu0
    %v3975 = vadd.f32 %v3780, %v3974
    %v3976 = vpop.f32.mrf.mxu0
    %3977 = vmatprep.mubr.bf16.mxu0 0
    %3978 = vmatmul.mubr.bf16.gmra.mxu0 %v3815
    %v3979 = vpop.f32.mrf.mxu0
    %v3980 = vadd.f32 %v3780, %v3979
    %v3981 = vpop.f32.mrf.mxu0
    %v3982 = vpop.f32.mrf.mxu0
    %v3983 = vadd.f32 %v3780, %v3982
    %v3984 = vpop.f32.mrf.mxu0
    %3985 = vmatprep.mubr.bf16.mxu0 0
    %3986 = vmatmul.mubr.bf16.gmra.mxu0 %v3818
    %v3987 = vpop.f32.mrf.mxu0
    %v3988 = vadd.f32 %v3780, %v3987
    %v3989 = vpop.f32.mrf.mxu0
    %v3990 = vpop.f32.mrf.mxu0
    %v3991 = vadd.f32 %v3780, %v3990
    %v3992 = vpop.f32.mrf.mxu0
    %3993 = vmatprep.mubr.bf16.mxu0 0
    %3994 = vmatmul.mubr.bf16.gmra.mxu0 %v3821
    %v3995 = vpop.f32.mrf.mxu0
    %v3996 = vadd.f32 %v3780, %v3995
    %v3997 = vpop.f32.mrf.mxu0
    %v3998 = vpop.f32.mrf.mxu0
    %v3999 = vadd.f32 %v3780, %v3998
    %v4000 = vpop.f32.mrf.mxu0
    %4001 = vmatprep.mubr.bf16.mxu0 0
    %4002 = vmatmul.mubr.bf16.gmra.mxu0 %v3824
    %v4003 = vpop.f32.mrf.mxu0
    %v4004 = vadd.f32 %v3780, %v4003
    %v4005 = vpop.f32.mrf.mxu0
    %v4006 = vpop.f32.mrf.mxu0
    %v4007 = vadd.f32 %v3780, %v4006
    %v4008 = vpop.f32.mrf.mxu0
    %4009 = vmatprep.mubr.bf16.mxu0 0
    %4010 = vmatmul.mubr.bf16.gmra.mxu0 %v3827
    %v4011 = vpop.f32.mrf.mxu0
    %v4012 = vadd.f32 %v3780, %v4011
    %v4013 = vpop.f32.mrf.mxu0
    %v4014 = vpop.f32.mrf.mxu0
    %v4015 = vadd.f32 %v3780, %v4014
    %v4016 = vpop.f32.mrf.mxu0
    %4017 = vmatprep.mubr.bf16.mxu0 0
    %4018 = vmatmul.mubr.bf16.gmra.mxu0 %v3830
    %v4019 = vpop.f32.mrf.mxu0
    %v4020 = vadd.f32 %v3780, %v4019
    %v4021 = vpop.f32.mrf.mxu0
    %v4022 = vpop.f32.mrf.mxu0
    %v4023 = vadd.f32 %v3780, %v4022
    %v4024 = vpop.f32.mrf.mxu0
    %4025 = vmatprep.mubr.bf16.mxu0 0
    %4026 = vmatmul.mubr.bf16.gmra.mxu0 %v3833
    %v4027 = vpop.f32.mrf.mxu0
    %v4028 = vadd.f32 %v3780, %v4027
    %v4029 = vpop.f32.mrf.mxu0
    %v4030 = vpop.f32.mrf.mxu0
    %v4031 = vadd.f32 %v3780, %v4030
    %v4032 = vpop.f32.mrf.mxu0
    %4033 = vmatprep.mubr.bf16.mxu0 0
    %4034 = vmatmul.mubr.bf16.gmra.mxu0 %v3836
    %v4035 = vpop.f32.mrf.mxu0
    %v4036 = vadd.f32 %v3780, %v4035
    %v4037 = vpop.f32.mrf.mxu0
    %v4038 = vpop.f32.mrf.mxu0
    %v4039 = vadd.f32 %v3780, %v4038
    %v4040 = vpop.f32.mrf.mxu0
    %4041 = vmatprep.mubr.bf16.mxu0 0
    %4042 = vmatmul.mubr.bf16.gmra.mxu0 %v3839
    %v4043 = vpop.f32.mrf.mxu0
    %v4044 = vadd.f32 %v3780, %v4043
    %v4045 = vpop.f32.mrf.mxu0
    %v4046 = vpop.f32.mrf.mxu0
    %v4047 = vadd.f32 %v3780, %v4046
    %v4048 = vpop.f32.mrf.mxu0
    %4049 = vmatprep.mubr.bf16.mxu0 0
    %4050 = vmatmul.mubr.bf16.gmra.mxu0 %v3842
    %v4051 = vpop.f32.mrf.mxu0
    %v4052 = vadd.f32 %v3780, %v4051
    %v4053 = vpop.f32.mrf.mxu0
    %v4054 = vpop.f32.mrf.mxu0
    %v4055 = vadd.f32 %v3780, %v4054
    %v4056 = vpop.f32.mrf.mxu0
    %4057 = vmatprep.mubr.bf16.mxu0 0
    %4058 = vmatmul.mubr.bf16.gmra.mxu0 %v3845
    %v4059 = vpop.f32.mrf.mxu0
    %v4060 = vadd.f32 %v3780, %v4059
    %v4061 = vpop.f32.mrf.mxu0
    %v4062 = vpop.f32.mrf.mxu0
    %v4063 = vadd.f32 %v3780, %v4062
    %v4064 = vpop.f32.mrf.mxu0
    %4065 = vmatprep.mubr.bf16.mxu0 0
    %4066 = vmatmul.mubr.bf16.gmra.mxu0 %v3848
    %v4067 = vpop.f32.mrf.mxu0
    %v4068 = vadd.f32 %v3780, %v4067
    %v4069 = vpop.f32.mrf.mxu0
    %v4070 = vpop.f32.mrf.mxu0
    %v4071 = vadd.f32 %v3780, %v4070
    %v4072 = vpop.f32.mrf.mxu0
    %4073 = vmatprep.mubr.bf16.mxu0 0
    %4074 = vmatmul.mubr.bf16.gmra.mxu0 %v3851
    %v4075 = vpop.f32.mrf.mxu0
    %v4076 = vadd.f32 %v3780, %v4075
    %v4077 = vpop.f32.mrf.mxu0
    %v4078 = vpop.f32.mrf.mxu0
    %v4079 = vadd.f32 %v3780, %v4078
    %v4080 = vpop.f32.mrf.mxu0
    %4081 = vmatprep.mubr.bf16.mxu0 0
    %4082 = vmatmul.mubr.bf16.gmra.mxu0 %v3854
    %v4083 = vpop.f32.mrf.mxu0
    %v4084 = vadd.f32 %v3780, %v4083
    %v4085 = vpop.f32.mrf.mxu0
    %v4086 = vpop.f32.mrf.mxu0
    %v4087 = vadd.f32 %v3780, %v4086
    %v4088 = vpop.f32.mrf.mxu0
    %4089 = vmatprep.mubr.bf16.mxu0 0
    %4090 = vmatmul.mubr.bf16.gmra.mxu0 %v3857
    %v4091 = vpop.f32.mrf.mxu0
    %v4092 = vadd.f32 %v3780, %v4091
    %v4093 = vpop.f32.mrf.mxu0
    %v4094 = vpop.f32.mrf.mxu0
    %v4095 = vadd.f32 %v3780, %v4094
    %v4096 = vpop.f32.mrf.mxu0
    %4097 = vmatprep.mubr.bf16.mxu0 0
    %4098 = vmatmul.mubr.bf16.gmra.mxu0 %v3860
    %v4099 = vpop.f32.mrf.mxu0
    %v4100 = vadd.f32 %v3780, %v4099
    %v4101 = vpop.f32.mrf.mxu0
    %v4102 = vpop.f32.mrf.mxu0
    %v4103 = vadd.f32 %v3780, %v4102
    %v4104 = vpop.f32.mrf.mxu0
    %4105 = vmatprep.mubr.bf16.mxu0 0
    %4106 = vmatmul.mubr.bf16.gmra.mxu0 %v3863
    %v4107 = vpop.f32.mrf.mxu0
    %v4108 = vadd.f32 %v3780, %v4107
    %v4109 = vpop.f32.mrf.mxu0
    %v4110 = vpop.f32.mrf.mxu0
    %v4111 = vadd.f32 %v3780, %v4110
    %v4112 = vpop.f32.mrf.mxu0
    %4113 = vmatprep.mubr.bf16.mxu0 0
    %4114 = vmatmul.mubr.bf16.gmra.mxu0 %v3866
    %v4115 = vpop.f32.mrf.mxu0
    %v4116 = vadd.f32 %v3780, %v4115
    %v4117 = vpop.f32.mrf.mxu0
    %v4118 = vpop.f32.mrf.mxu0
    %v4119 = vadd.f32 %v3780, %v4118
    %v4120 = vpop.f32.mrf.mxu0
    %4121 = vmatprep.mubr.bf16.mxu0 0
    %4122 = vmatmul.mubr.bf16.gmra.mxu0 %v3869
    %v4123 = vpop.f32.mrf.mxu0
    %v4124 = vadd.f32 %v3780, %v4123
    %v4125 = vpop.f32.mrf.mxu0
    %v4126 = vpop.f32.mrf.mxu0
    %v4127 = vadd.f32 %v3780, %v4126
    %v4128 = vpop.f32.mrf.mxu0
    %4129 = vmatprep.mubr.bf16.mxu0 0
    %4130 = vmatmul.mubr.bf16.gmra.mxu0 %v3872
    %v4131 = vpop.f32.mrf.mxu0
    %v4132 = vadd.f32 %v3780, %v4131
    %v4133 = vpop.f32.mrf.mxu0
    %v4134 = vpop.f32.mrf.mxu0
    %v4135 = vadd.f32 %v3780, %v4134
    %v4136 = vpop.f32.mrf.mxu0
    %4137 = vmatprep.mubr.bf16.mxu0 0
    %4138 = vmatmul.mubr.bf16.gmra.mxu0 %v3875
    %v4139 = vpop.f32.mrf.mxu0
    %v4140 = vadd.f32 %v3780, %v4139
    %v4141 = vpop.f32.mrf.mxu0
    %v4142 = vpop.f32.mrf.mxu0
    %v4143 = vadd.f32 %v3780, %v4142
    %v4144 = vpop.f32.mrf.mxu0
    %4145 = vmatprep.mubr.bf16.mxu0 0
    %4146 = vmatmul.mubr.bf16.gmra.mxu0 %v3878
    %v4147 = vpop.f32.mrf.mxu0
    %v4148 = vadd.f32 %v3780, %v4147
    %v4149 = vpop.f32.mrf.mxu0
    %v4150 = vpop.f32.mrf.mxu0
    %v4151 = vadd.f32 %v3780, %v4150
    %v4152 = vpop.f32.mrf.mxu0
    %4153 = vmatprep.mubr.bf16.mxu0 0
    %4154 = vmatmul.mubr.bf16.gmra.mxu0 %v3881
    %v4155 = vpop.f32.mrf.mxu0
    %v4156 = vadd.f32 %v3780, %v4155
    %v4157 = vpop.f32.mrf.mxu0
    %v4158 = vpop.f32.mrf.mxu0
    %v4159 = vadd.f32 %v3780, %v4158
    %v4160 = vpop.f32.mrf.mxu0
    %4161 = vmatprep.mubr.bf16.mxu0 0
    %4162 = vmatmul.mubr.bf16.gmra.mxu0 %v3884
    %v4163 = vpop.f32.mrf.mxu0
    %v4164 = vadd.f32 %v3780, %v4163
    %v4165 = vpop.f32.mrf.mxu0
    %v4166 = vpop.f32.mrf.mxu0
    %v4167 = vadd.f32 %v3780, %v4166
    %v4168 = vpop.f32.mrf.mxu0
    %4169 = vmatprep.mubr.bf16.mxu0 0
    %4170 = vmatmul.mubr.bf16.gmra.mxu0 %v3887
    %v4171 = vpop.f32.mrf.mxu0
    %v4172 = vadd.f32 %v3780, %v4171
    %v4173 = vpop.f32.mrf.mxu0
    %v4174 = vpop.f32.mrf.mxu0
    %v4175 = vadd.f32 %v3780, %v4174
    %v4176 = vpop.f32.mrf.mxu0
    %4177 = vdwg.mxu0
    %4178 = vst [vmem:[#allocation5] sm:$0xff] %v3924
    %4179 = vst [vmem:[#allocation5 + $0x8] sm:$0xff] %v3927
    %4180 = vst [vmem:[#allocation5 + $0x10] sm:$0xff] %v3932
    %4181 = vst [vmem:[#allocation5 + $0x18] sm:$0xff] %v3935
    %4182 = vst [vmem:[#allocation5 + $0x20] sm:$0xff] %v3940
    %4183 = vst [vmem:[#allocation5 + $0x28] sm:$0xff] %v3943
    %4184 = vst [vmem:[#allocation5 + $0x30] sm:$0xff] %v3948
    %4185 = vst [vmem:[#allocation5 + $0x38] sm:$0xff] %v3951
    %4186 = vst [vmem:[#allocation5 + $0x40] sm:$0xff] %v3956
    %4187 = vst [vmem:[#allocation5 + $0x48] sm:$0xff] %v3959
    %4188 = vst [vmem:[#allocation5 + $0x50] sm:$0xff] %v3964
    %4189 = vst [vmem:[#allocation5 + $0x58] sm:$0xff] %v3967
    %4190 = vst [vmem:[#allocation5 + $0x60] sm:$0xff] %v3972
    %4191 = vst [vmem:[#allocation5 + $0x68] sm:$0xff] %v3975
    %4192 = vst [vmem:[#allocation5 + $0x70] sm:$0xff] %v3980
    %4193 = vst [vmem:[#allocation5 + $0x78] sm:$0xff] %v3983
    %4194 = vst [vmem:[#allocation5 + $0x80] sm:$0xff] %v3988
    %4195 = vst [vmem:[#allocation5 + $0x88] sm:$0xff] %v3991
    %4196 = vst [vmem:[#allocation5 + $0x90] sm:$0xff] %v3996
    %4197 = vst [vmem:[#allocation5 + $0x98] sm:$0xff] %v3999
    %4198 = vst [vmem:[#allocation5 + $0xa0] sm:$0xff] %v4004
    %4199 = vst [vmem:[#allocation5 + $0xa8] sm:$0xff] %v4007
    %4200 = vst [vmem:[#allocation5 + $0xb0] sm:$0xff] %v4012
    %4201 = vst [vmem:[#allocation5 + $0xb8] sm:$0xff] %v4015
    %4202 = vst [vmem:[#allocation5 + $0xc0] sm:$0xff] %v4020
    %4203 = vst [vmem:[#allocation5 + $0xc8] sm:$0xff] %v4023
    %4204 = vst [vmem:[#allocation5 + $0xd0] sm:$0xff] %v4028
    %4205 = vst [vmem:[#allocation5 + $0xd8] sm:$0xff] %v4031
    %4206 = vst [vmem:[#allocation5 + $0xe0] sm:$0xff] %v4036
    %4207 = vst [vmem:[#allocation5 + $0xe8] sm:$0xff] %v4039
    %4208 = vst [vmem:[#allocation5 + $0xf0] sm:$0xff] %v4044
    %4209 = vst [vmem:[#allocation5 + $0xf8] sm:$0xff] %v4047
    %4210 = vst [vmem:[#allocation5 + $0x100] sm:$0xff] %v4052
    %4211 = vst [vmem:[#allocation5 + $0x108] sm:$0xff] %v4055
    %4212 = vst [vmem:[#allocation5 + $0x110] sm:$0xff] %v4060
    %4213 = vst [vmem:[#allocation5 + $0x118] sm:$0xff] %v4063
    %4214 = vst [vmem:[#allocation5 + $0x120] sm:$0xff] %v4068
    %4215 = vst [vmem:[#allocation5 + $0x128] sm:$0xff] %v4071
    %4216 = vst [vmem:[#allocation5 + $0x130] sm:$0xff] %v4076
    %4217 = vst [vmem:[#allocation5 + $0x138] sm:$0xff] %v4079
    %4218 = vst [vmem:[#allocation5 + $0x140] sm:$0xff] %v4084
    %4219 = vst [vmem:[#allocation5 + $0x148] sm:$0xff] %v4087
    %4220 = vst [vmem:[#allocation5 + $0x150] sm:$0xff] %v4092
    %4221 = vst [vmem:[#allocation5 + $0x158] sm:$0xff] %v4095
    %4222 = vst [vmem:[#allocation5 + $0x160] sm:$0xff] %v4100
    %4223 = vst [vmem:[#allocation5 + $0x168] sm:$0xff] %v4103
    %4224 = vst [vmem:[#allocation5 + $0x170] sm:$0xff] %v4108
    %4225 = vst [vmem:[#allocation5 + $0x178] sm:$0xff] %v4111
    %4226 = vst [vmem:[#allocation5 + $0x180] sm:$0xff] %v4116
    %4227 = vst [vmem:[#allocation5 + $0x188] sm:$0xff] %v4119
    %4228 = vst [vmem:[#allocation5 + $0x190] sm:$0xff] %v4124
    %4229 = vst [vmem:[#allocation5 + $0x198] sm:$0xff] %v4127
    %4230 = vst [vmem:[#allocation5 + $0x1a0] sm:$0xff] %v4132
    %4231 = vst [vmem:[#allocation5 + $0x1a8] sm:$0xff] %v4135
    %4232 = vst [vmem:[#allocation5 + $0x1b0] sm:$0xff] %v4140
    %4233 = vst [vmem:[#allocation5 + $0x1b8] sm:$0xff] %v4143
    %4234 = vst [vmem:[#allocation5 + $0x1c0] sm:$0xff] %v4148
    %4235 = vst [vmem:[#allocation5 + $0x1c8] sm:$0xff] %v4151
    %4236 = vst [vmem:[#allocation5 + $0x1d0] sm:$0xff] %v4156
    %4237 = vst [vmem:[#allocation5 + $0x1d8] sm:$0xff] %v4159
    %4238 = vst [vmem:[#allocation5 + $0x1e0] sm:$0xff] %v4164
    %4239 = vst [vmem:[#allocation5 + $0x1e8] sm:$0xff] %v4167
    %4240 = vst [vmem:[#allocation5 + $0x1f0] sm:$0xff] %v4172
    %4241 = vst [vmem:[#allocation5 + $0x1f8] sm:$0xff] %v4175
    // Predicated region
    $region58: #{learn_when2com_forward.1} parent=1 // pred_check
      _
    $region59: #{learn_when2com_forward.1} parent=1 // pred_check_branch
      %4243 = sbr.rel (0) target = $region61
    $region60: #{learn_when2com_forward.1} parent=1 // pred_region
      %s4245 = ssub.s32 8192, 8192
      %4246 = vsyncadd [#allocation4], %s4245
      %s4247 = sshll.u32 [#allocation5], 4
      %s4248 = int_to_ptr.vmem [resolvable:$true] %s4247
      %4253 = dma.vmem_to_hbm [thread:$0]  %s4248, 8192, %s13, [#allocation4], 128, 128, 8
    $region61: #{learn_when2com_forward.1} parent=1 // pred_fallthru
      _
    // Predicated region
    $region62: #{learn_when2com_forward.1} parent=1 // pred_check
      _
    $region63: #{learn_when2com_forward.1} parent=1 // pred_check_branch
      %4255 = sbr.rel (0) target = $region65
    $region64: #{learn_when2com_forward.1} parent=1 // pred_region
      _
    $region65: #{learn_when2com_forward.1} parent=1 // pred_fallthru
      _
    // Predicated region
    $region66: #{learn_when2com_forward.1} parent=1 // pred_check
      _
    $region67: #{learn_when2com_forward.1} parent=1 // pred_check_branch
      %4257 = sbr.rel (0) target = $region69
    $region68: #{learn_when2com_forward.1} parent=1 // pred_region
      %4258 = dma.done [#allocation4], 8192
    $region69: #{learn_when2com_forward.1} parent=1 // pred_fallthru
      _
    // Predicated region
    $region70: #{learn_when2com_forward.1} parent=1 // pred_check
      _
    $region71: #{learn_when2com_forward.1} parent=1 // pred_check_branch
      %4260 = sbr.rel (0) target = $region73
    $region72: #{learn_when2com_forward.1} parent=1 // pred_region
      _
    $region73: #{learn_when2com_forward.1} parent=1 // pred_fallthru
      _
    %4261 = vsyncpa [#allocation3], 1
    %4262 = vsyncpa [#allocation4], 1

</llo_original>
